<compile_context>
chip_gen: v6e
topology: v6e:2x2x1
jax: 0.10.0
libtpu: 0.0.40
codegen_flags: <defaults>
</compile_context>

<pallas_src>
import functools

import jax
import jax.numpy as jnp
from jax.experimental import pallas as pl
from jax.experimental.pallas import tpu as pltpu

LANE = 128


def _round_up(x, m):
    return ((x + m - 1) // m) * m


# ----------------------------- Pallas kernels ------------------------------

def _conv_tanh_pool_kernel(x_ref, w_ref, b_ref, o_ref):
    """conv(+bias) + tanh + fused 2x2 max-pool for one (particle, row-tile).

    The 4 taps of every 2x2 pool window are packed along K of `x` and along
    4 lane groups of the block-diagonal weight, so after the matmul the pool
    is a max over 4 contiguous 128-lane column groups (unit-stride slices).

    x_ref: (1, tw, 4K) bf16   w_ref: (1, 4K, 4N) bf16
    b_ref: (1, 1, 4N) f32     o_ref: (1, tw, N) bf16   (N multiple of 128)
    """
    y = jnp.dot(x_ref[0], w_ref[0], preferred_element_type=jnp.float32)
    y = jnp.tanh(y + b_ref[0])
    n = o_ref.shape[-1]
    p01 = jnp.maximum(y[:, 0 * n:1 * n], y[:, 1 * n:2 * n])
    p23 = jnp.maximum(y[:, 2 * n:3 * n], y[:, 3 * n:4 * n])
    o_ref[0] = jnp.maximum(p01, p23).astype(o_ref.dtype)


def conv_tanh_pool(x, w, b, tw_target=512):
    """x: (P, W, 4K) bf16 pool-window patches, w: (P, 4K, 4N) bf16 (block-
    diagonal over the 4 taps), b: (P, 1, 4N) f32.
    Returns maxpool2x2(tanh(conv + b)) as (P, W, N) bf16 (lane-dense)."""
    P, W, K4 = x.shape
    N4 = w.shape[-1]
    N = N4 // 4
    tw = _round_up(min(tw_target, _round_up(W, 8)), 8)
    Wp = _round_up(W, tw)
    if Wp != W:
        x = jnp.pad(x, ((0, 0), (0, Wp - W), (0, 0)))
    out = pl.pallas_call(
        _conv_tanh_pool_kernel,
        out_shape=jax.ShapeDtypeStruct((P, Wp, N), jnp.bfloat16),
        grid=(P, Wp // tw),          # p outer, row-tile inner: weights resident per p
        in_specs=[
            pl.BlockSpec((1, tw, K4), lambda p, m: (p, m, 0)),
            pl.BlockSpec((1, K4, N4), lambda p, m: (p, 0, 0)),
            pl.BlockSpec((1, 1, N4), lambda p, m: (p, 0, 0)),
        ],
        out_specs=pl.BlockSpec((1, tw, N), lambda p, m: (p, m, 0)),
        compiler_params=pltpu.CompilerParams(
            dimension_semantics=("parallel", "parallel")),
    )(x, w, b)
    return out[:, :W, :] if Wp != W else out


def _fc_stack_kernel(x_ref, w1_ref, b1_ref, w2_ref, b2_ref, w3_ref, b3_ref,
                     o_ref):
    """Fused fc1->tanh->fc2->tanh->fc3 for one (particle, batch-tile);
    h1/h2 never leave VMEM."""
    x = x_ref[0]                                                    # (tm, 400) bf16
    h = jnp.tanh(jnp.dot(x, w1_ref[0],
                         preferred_element_type=jnp.float32) + b1_ref[0])
    h = jnp.tanh(jnp.dot(h.astype(jnp.bfloat16), w2_ref[0],
                         preferred_element_type=jnp.float32) + b2_ref[0])
    o_ref[0] = jnp.dot(h.astype(jnp.bfloat16), w3_ref[0],
                       preferred_element_type=jnp.float32) + b3_ref[0]


def fc_stack(feat, w1, b1, w2, b2, w3, b3, tm_target=256):
    """feat: (P, B, 400) bf16 -> (P, B, N_padded) f32 over a (P, batch-tile)
    grid; the six weight blocks are index-mapped constant over the inner m
    axis so they stay resident per particle."""
    P, B, K = feat.shape
    tm = _round_up(min(tm_target, _round_up(B, 8)), 8)
    Bp = _round_up(B, tm)
    if Bp != B:
        feat = jnp.pad(feat, ((0, 0), (0, Bp - B), (0, 0)))
    N = w3.shape[-1]
    out = pl.pallas_call(
        _fc_stack_kernel,
        out_shape=jax.ShapeDtypeStruct((P, Bp, N), jnp.float32),
        grid=(P, Bp // tm),
        in_specs=[
            pl.BlockSpec((1, tm, K), lambda p, m: (p, m, 0)),
            pl.BlockSpec((1,) + w1.shape[1:], lambda p, m: (p, 0, 0)),
            pl.BlockSpec((1, 1, b1.shape[-1]), lambda p, m: (p, 0, 0)),
            pl.BlockSpec((1,) + w2.shape[1:], lambda p, m: (p, 0, 0)),
            pl.BlockSpec((1, 1, b2.shape[-1]), lambda p, m: (p, 0, 0)),
            pl.BlockSpec((1,) + w3.shape[1:], lambda p, m: (p, 0, 0)),
            pl.BlockSpec((1, 1, b3.shape[-1]), lambda p, m: (p, 0, 0)),
        ],
        out_specs=pl.BlockSpec((1, tm, N), lambda p, m: (p, m, 0)),
        compiler_params=pltpu.CompilerParams(
            dimension_semantics=("parallel", "parallel")),
    )(feat, w1, b1, w2, b2, w3, b3)
    return out[:, :B, :] if Bp != B else out


# ------------------------------- JAX glue -----------------------------------

def _im2col(x, k):
    """(..., H, W, C) -> (..., H-k+1, W-k+1, k*k*C); feature = (kh*k+kw)*C+ci."""
    H, W = x.shape[-3], x.shape[-2]
    oh, ow = H - k + 1, W - k + 1
    cols = [x[..., kh:kh + oh, kw:kw + ow, :]
            for kh in range(k) for kw in range(k)]
    return jnp.concatenate(cols, axis=-1)


def _pool_group_patches(p):
    """(..., H, W, F) -> (..., (H//2)*(W//2), 4*F): each output row holds the
    4 im2col patches of one 2x2 pool window, concatenated along features."""
    *lead, H, W, F = p.shape
    p = p.reshape(*lead, H // 2, 2, W // 2, 2, F)
    nd = p.ndim
    perm = tuple(range(nd - 5)) + (nd - 5, nd - 3, nd - 4, nd - 2, nd - 1)
    p = jnp.transpose(p, perm)                    # (..., H//2, W//2, 2, 2, F)
    return p.reshape(*lead, (H // 2) * (W // 2), 4 * F)


def init_params(key, output_size, num_particles):
    """Raw parameters in PyTorch layouts with PyTorch default-init bounds."""
    specs = {
        "conv1_w": ((6, 1, 5, 5), 25),
        "conv1_b": ((6,), 25),
        "conv2_w": ((16, 6, 5, 5), 150),
        "conv2_b": ((16,), 150),
        "fc1_w": ((120, 400), 400),
        "fc1_b": ((120,), 400),
        "fc2_w": ((84, 120), 120),
        "fc2_b": ((84,), 120),
        "fc3_w": ((output_size, 84), 84),
        "fc3_b": ((output_size,), 84),
    }
    params = {}
    keys = jax.random.split(key, len(specs))
    for (name, (shape, fan_in)), k in zip(specs.items(), keys):
        bound = 1.0 / float(fan_in) ** 0.5
        params[name] = jax.random.uniform(
            k, (num_particles,) + shape, jnp.float32, -bound, bound)
    return params


def _pad_lanes(a, n=None):
    tgt = int(n) if n is not None else _round_up(a.shape[-1], LANE)
    return jnp.pad(a, [(0, 0)] * (a.ndim - 1) + [(0, tgt - a.shape[-1])])


def _tap_block_diag(w):
    """(K, N) -> (4K, 4N): block-diagonal replication over the 4 pool taps."""
    K, N = w.shape
    eye = jnp.eye(4, dtype=w.dtype)
    return (eye[:, None, :, None] * w[None, :, None, :]).reshape(4 * K, 4 * N)


def prepare_params(raw):
    """One-time layout prep (outside the forward): transpose to (K, N),
    zero-pad N to a multiple of 128, block-diagonalize over the 4 pool taps,
    cast weights to bf16 (biases stay f32, tiled over the 4 taps)."""
    P = raw["conv1_w"].shape[0]
    prepped = {}

    # conv1: particles fused along lanes -> one (1, 100, 512) weight.
    w = jnp.transpose(raw["conv1_w"], (0, 3, 4, 2, 1)).reshape(P, 25, 6)
    w = jnp.transpose(w, (1, 0, 2)).reshape(25, P * 6)            # lane = p*6+c
    w = _pad_lanes(w)                                             # (25, 128)
    prepped["conv1_w"] = _tap_block_diag(w)[None].astype(jnp.bfloat16)
    b = _pad_lanes(raw["conv1_b"].reshape(1, 1, P * 6))           # (1, 1, 128)
    prepped["conv1_b"] = jnp.tile(b, (1, 1, 4))                   # (1, 1, 512)

    # conv2: per particle (P, 600, 512).
    w = jnp.transpose(raw["conv2_w"], (0, 3, 4, 2, 1)).reshape(P, 150, 16)
    w = _pad_lanes(w)                                             # (P, 150, 128)
    prepped["conv2_w"] = jax.vmap(_tap_block_diag)(w).astype(jnp.bfloat16)
    b = _pad_lanes(raw["conv2_b"].reshape(P, 1, 16))
    prepped["conv2_b"] = jnp.tile(b, (1, 1, 4))                   # (P, 1, 512)

    # fc stack: pad N with zero columns and the next layer's K with zero rows,
    # so the padded lanes propagate as exact zeros through tanh.
    def prep_fc(wname, bname, k_pad=None):
        w = _pad_lanes(jnp.transpose(raw[wname], (0, 2, 1)))      # (P, K, Npad)
        if k_pad is not None and w.shape[1] != k_pad:
            w = jnp.pad(w, ((0, 0), (0, k_pad - w.shape[1]), (0, 0)))
        b = _pad_lanes(raw[bname][:, None, :])                    # (P, 1, Npad)
        return w.astype(jnp.bfloat16), b

    prepped["fc1_w"], prepped["fc1_b"] = prep_fc("fc1_w", "fc1_b")
    prepped["fc2_w"], prepped["fc2_b"] = prep_fc(
        "fc2_w", "fc2_b", k_pad=prepped["fc1_w"].shape[-1])
    prepped["fc3_w"], prepped["fc3_b"] = prep_fc(
        "fc3_w", "fc3_b", k_pad=prepped["fc2_w"].shape[-1])
    return prepped


def lenet_ensemble_forward(x, params, *, output_size):
    """x: (B, 1, 28, 28) NCHW -> (num_particles, B, output_size)."""
    P = params["conv2_w"].shape[0]
    B = x.shape[0]
    x = jnp.transpose(x, (0, 2, 3, 1)).astype(jnp.float32)          # (B,28,28,1)

    # conv1 (k=5, pad=2) + tanh + 2x2 maxpool, particles fused along lanes.
    xp = jnp.pad(x, ((0, 0), (2, 2), (2, 2), (0, 0)))
    pt1 = _pool_group_patches(_im2col(xp, 5))                       # (B,196,100)
    pt1 = pt1.reshape(1, B * 196, 100).astype(jnp.bfloat16)
    y1 = conv_tanh_pool(pt1, params["conv1_w"], params["conv1_b"])  # (1,B*196,128) bf16
    y1 = y1.reshape(B, 14, 14, LANE)[..., :P * 6]
    y1 = y1.reshape(B, 14, 14, P, 6).transpose(3, 0, 1, 2, 4)       # (P,B,14,14,6)

    # conv2 (k=5, valid) + tanh + 2x2 maxpool per particle.
    pt2 = _pool_group_patches(_im2col(y1, 5))                       # (P,B,25,600)
    pt2 = pt2.reshape(P, B * 25, 600)                               # bf16
    y2 = conv_tanh_pool(pt2, params["conv2_w"], params["conv2_b"])  # (P,B*25,128)
    y2 = y2.reshape(P, B, 5, 5, LANE)[..., :16]                     # (P,B,5,5,16)

    # flatten in PyTorch NCHW order: feature index = c*25 + h*5 + w
    feat = jnp.transpose(y2, (0, 1, 4, 2, 3)).reshape(P, B, 400)    # bf16

    # fused fc1 -> tanh -> fc2 -> tanh -> fc3 (batch-tiled grid)
    out = fc_stack(feat, params["fc1_w"], params["fc1_b"],
                   params["fc2_w"], params["fc2_b"],
                   params["fc3_w"], params["fc3_b"])                # (P,B,Npad) f32
    return out[..., :output_size]


if __name__ == "__main__":
    output_size = 10
    num_particles = 3
    batch = 2

    key = jax.random.PRNGKey(0)
    k_x, k_p = jax.random.split(key)
    # Spatial size is fixed at 28x28 by the architecture (flatten dim 16*5*5).
    x = jax.random.normal(k_x, (batch, 1, 28, 28), dtype=jnp.float32)
    raw_params = init_params(k_p, output_size, num_particles)
    params = prepare_params(raw_params)          # one-time kernel-ready layout

    fwd = jax.jit(functools.partial(lenet_ensemble_forward,
                                    output_size=output_size))
    out = jax.block_until_ready(fwd(x, params))
    assert out.shape == (num_particles, batch, output_size), out.shape
    assert bool(jnp.all(jnp.isfinite(out)))
    print("KERNEL_OK")
</pallas_src>

<mosaic_0001>
module attributes {stable_mosaic.version = 11 : i64} {
  func.func @_conv_tanh_pool_kernel(%arg0: i32, %arg1: i32, %arg2: memref<1x392x100xbf16, #tpu.memory_space<vmem>>, %arg3: memref<1x100x512xbf16, #tpu.memory_space<vmem>>, %arg4: memref<1x1x512xf32, #tpu.memory_space<vmem>>, %arg5: memref<1x392x128xbf16, #tpu.memory_space<vmem>>) attributes {dimension_semantics = [#tpu.dimension_semantics<parallel>, #tpu.dimension_semantics<parallel>], iteration_bounds = array<i64: 1, 1>, scalar_prefetch = 0 : i64, scratch_operands = 0 : i64, tpu.core_type = #tpu.core_type<tc>, window_params = [{transform_indices = @transform_0, window_bounds = array<i64: 1, 392, 100>}, {transform_indices = @transform_1, window_bounds = array<i64: 1, 100, 512>}, {transform_indices = @transform_2, window_bounds = array<i64: 1, 1, 512>}, {transform_indices = @transform_3, window_bounds = array<i64: 1, 392, 128>}]} {
    %c0 = arith.constant 0 : index
    %c0_0 = arith.constant 0 : index
    %c0_1 = arith.constant 0 : index
    %0 = vector.load %arg2[%c0, %c0_0, %c0_1] : memref<1x392x100xbf16, #tpu.memory_space<vmem>>, vector<1x392x100xbf16>
    %1 = vector.shape_cast %0 : vector<1x392x100xbf16> to vector<392x100xbf16>
    %c0_2 = arith.constant 0 : index
    %c0_3 = arith.constant 0 : index
    %c0_4 = arith.constant 0 : index
    %2 = vector.load %arg3[%c0_2, %c0_3, %c0_4] : memref<1x100x512xbf16, #tpu.memory_space<vmem>>, vector<1x100x512xbf16>
    %3 = vector.shape_cast %2 : vector<1x100x512xbf16> to vector<100x512xbf16>
    %cst = arith.constant dense<0.000000e+00> : vector<392x512xf32>
    %4 = tpu.matmul %1, %3, %cst {dimension_numbers = #tpu.dot_dimension_numbers<[1], [0], [0], [1], [0, 0, 1, 1], [], []>} : vector<392x100xbf16>, vector<100x512xbf16>, vector<392x512xf32> -> vector<392x512xf32>
    %c0_5 = arith.constant 0 : index
    %c0_6 = arith.constant 0 : index
    %c0_7 = arith.constant 0 : index
    %5 = vector.load %arg4[%c0_5, %c0_6, %c0_7] : memref<1x1x512xf32, #tpu.memory_space<vmem>>, vector<1x1x512xf32>
    %6 = vector.shape_cast %5 : vector<1x1x512xf32> to vector<1x512xf32>
    %7 = vector.broadcast %6 : vector<1x512xf32> to vector<392x512xf32>
    %8 = arith.addf %4, %7 : vector<392x512xf32>
    %9 = math.tanh %8 : vector<392x512xf32>
    %10 = vector.extract_strided_slice %9 {offsets = [0, 0], sizes = [392, 128], strides = [1, 1]} : vector<392x512xf32> to vector<392x128xf32>
    %11 = vector.extract_strided_slice %9 {offsets = [0, 128], sizes = [392, 128], strides = [1, 1]} : vector<392x512xf32> to vector<392x128xf32>
    %12 = arith.maximumf %10, %11 : vector<392x128xf32>
    %13 = vector.extract_strided_slice %9 {offsets = [0, 256], sizes = [392, 128], strides = [1, 1]} : vector<392x512xf32> to vector<392x128xf32>
    %14 = vector.extract_strided_slice %9 {offsets = [0, 384], sizes = [392, 128], strides = [1, 1]} : vector<392x512xf32> to vector<392x128xf32>
    %15 = arith.maximumf %13, %14 : vector<392x128xf32>
    %16 = arith.maximumf %12, %15 : vector<392x128xf32>
    %17 = arith.truncf %16 : vector<392x128xf32> to vector<392x128xbf16>
    %c0_8 = arith.constant 0 : index
    %c0_9 = arith.constant 0 : index
    %c0_10 = arith.constant 0 : index
    %18 = vector.load %arg5[%c0_8, %c0_9, %c0_10] : memref<1x392x128xbf16, #tpu.memory_space<vmem>>, vector<1x392x128xbf16>
    %19 = vector.shape_cast %18 : vector<1x392x128xbf16> to vector<392x128xbf16>
    %20 = vector.shape_cast %17 : vector<392x128xbf16> to vector<1x392x128xbf16>
    tpu.vector_store %arg5[%c0_8, %c0_9, %c0_10], %20 {strides = array<i32>} : memref<1x392x128xbf16, #tpu.memory_space<vmem>>, vector<1x392x128xbf16>,
    return
  }
  func.func @transform_0(%arg0: i32, %arg1: i32) -> (i32, i32, i32) {
    %c0_i32 = arith.constant 0 : i32
    %c0_i32_0 = arith.constant 0 : i32
    return %arg0, %arg1, %c0_i32 : i32, i32, i32
  }
  func.func @transform_1(%arg0: i32, %arg1: i32) -> (i32, i32, i32) {
    %c0_i32 = arith.constant 0 : i32
    %c0_i32_0 = arith.constant 0 : i32
    %c0_i32_1 = arith.constant 0 : i32
    return %arg0, %c0_i32, %c0_i32_0 : i32, i32, i32
  }
  func.func @transform_2(%arg0: i32, %arg1: i32) -> (i32, i32, i32) {
    %c0_i32 = arith.constant 0 : i32
    %c0_i32_0 = arith.constant 0 : i32
    %c0_i32_1 = arith.constant 0 : i32
    return %arg0, %c0_i32, %c0_i32_0 : i32, i32, i32
  }
  func.func @transform_3(%arg0: i32, %arg1: i32) -> (i32, i32, i32) {
    %c0_i32 = arith.constant 0 : i32
    %c0_i32_0 = arith.constant 0 : i32
    return %arg0, %arg1, %c0_i32 : i32, i32, i32
  }
}

module attributes {stable_mosaic.version = 11 : i64} {
  func.func @_conv_tanh_pool_kernel(%arg0: i32, %arg1: i32, %arg2: memref<1x56x600xbf16, #tpu.memory_space<vmem>>, %arg3: memref<1x600x512xbf16, #tpu.memory_space<vmem>>, %arg4: memref<1x1x512xf32, #tpu.memory_space<vmem>>, %arg5: memref<1x56x128xbf16, #tpu.memory_space<vmem>>) attributes {dimension_semantics = [#tpu.dimension_semantics<parallel>, #tpu.dimension_semantics<parallel>], iteration_bounds = array<i64: 3, 1>, scalar_prefetch = 0 : i64, scratch_operands = 0 : i64, tpu.core_type = #tpu.core_type<tc>, window_params = [{transform_indices = @transform_0, window_bounds = array<i64: 1, 56, 600>}, {transform_indices = @transform_1, window_bounds = array<i64: 1, 600, 512>}, {transform_indices = @transform_2, window_bounds = array<i64: 1, 1, 512>}, {transform_indices = @transform_3, window_bounds = array<i64: 1, 56, 128>}]} {
    %c0 = arith.constant 0 : index
    %c0_0 = arith.constant 0 : index
    %c0_1 = arith.constant 0 : index
    %0 = vector.load %arg2[%c0, %c0_0, %c0_1] : memref<1x56x600xbf16, #tpu.memory_space<vmem>>, vector<1x56x600xbf16>
    %1 = vector.shape_cast %0 : vector<1x56x600xbf16> to vector<56x600xbf16>
    %c0_2 = arith.constant 0 : index
    %c0_3 = arith.constant 0 : index
    %c0_4 = arith.constant 0 : index
    %2 = vector.load %arg3[%c0_2, %c0_3, %c0_4] : memref<1x600x512xbf16, #tpu.memory_space<vmem>>, vector<1x600x512xbf16>
    %3 = vector.shape_cast %2 : vector<1x600x512xbf16> to vector<600x512xbf16>
    %cst = arith.constant dense<0.000000e+00> : vector<56x512xf32>
    %4 = tpu.matmul %1, %3, %cst {dimension_numbers = #tpu.dot_dimension_numbers<[1], [0], [0], [1], [0, 0, 1, 1], [], []>} : vector<56x600xbf16>, vector<600x512xbf16>, vector<56x512xf32> -> vector<56x512xf32>
    %c0_5 = arith.constant 0 : index
    %c0_6 = arith.constant 0 : index
    %c0_7 = arith.constant 0 : index
    %5 = vector.load %arg4[%c0_5, %c0_6, %c0_7] : memref<1x1x512xf32, #tpu.memory_space<vmem>>, vector<1x1x512xf32>
    %6 = vector.shape_cast %5 : vector<1x1x512xf32> to vector<1x512xf32>
    %7 = vector.broadcast %6 : vector<1x512xf32> to vector<56x512xf32>
    %8 = arith.addf %4, %7 : vector<56x512xf32>
    %9 = math.tanh %8 : vector<56x512xf32>
    %10 = vector.extract_strided_slice %9 {offsets = [0, 0], sizes = [56, 128], strides = [1, 1]} : vector<56x512xf32> to vector<56x128xf32>
    %11 = vector.extract_strided_slice %9 {offsets = [0, 128], sizes = [56, 128], strides = [1, 1]} : vector<56x512xf32> to vector<56x128xf32>
    %12 = arith.maximumf %10, %11 : vector<56x128xf32>
    %13 = vector.extract_strided_slice %9 {offsets = [0, 256], sizes = [56, 128], strides = [1, 1]} : vector<56x512xf32> to vector<56x128xf32>
    %14 = vector.extract_strided_slice %9 {offsets = [0, 384], sizes = [56, 128], strides = [1, 1]} : vector<56x512xf32> to vector<56x128xf32>
    %15 = arith.maximumf %13, %14 : vector<56x128xf32>
    %16 = arith.maximumf %12, %15 : vector<56x128xf32>
    %17 = arith.truncf %16 : vector<56x128xf32> to vector<56x128xbf16>
    %c0_8 = arith.constant 0 : index
    %c0_9 = arith.constant 0 : index
    %c0_10 = arith.constant 0 : index
    %18 = vector.load %arg5[%c0_8, %c0_9, %c0_10] : memref<1x56x128xbf16, #tpu.memory_space<vmem>>, vector<1x56x128xbf16>
    %19 = vector.shape_cast %18 : vector<1x56x128xbf16> to vector<56x128xbf16>
    %20 = vector.shape_cast %17 : vector<56x128xbf16> to vector<1x56x128xbf16>
    tpu.vector_store %arg5[%c0_8, %c0_9, %c0_10], %20 {strides = array<i32>} : memref<1x56x128xbf16, #tpu.memory_space<vmem>>, vector<1x56x128xbf16>,
    return
  }
  func.func @transform_0(%arg0: i32, %arg1: i32) -> (i32, i32, i32) {
    %c0_i32 = arith.constant 0 : i32
    %c0_i32_0 = arith.constant 0 : i32
    return %arg0, %arg1, %c0_i32 : i32, i32, i32
  }
  func.func @transform_1(%arg0: i32, %arg1: i32) -> (i32, i32, i32) {
    %c0_i32 = arith.constant 0 : i32
    %c0_i32_0 = arith.constant 0 : i32
    %c0_i32_1 = arith.constant 0 : i32
    return %arg0, %c0_i32, %c0_i32_0 : i32, i32, i32
  }
  func.func @transform_2(%arg0: i32, %arg1: i32) -> (i32, i32, i32) {
    %c0_i32 = arith.constant 0 : i32
    %c0_i32_0 = arith.constant 0 : i32
    %c0_i32_1 = arith.constant 0 : i32
    return %arg0, %c0_i32, %c0_i32_0 : i32, i32, i32
  }
  func.func @transform_3(%arg0: i32, %arg1: i32) -> (i32, i32, i32) {
    %c0_i32 = arith.constant 0 : i32
    %c0_i32_0 = arith.constant 0 : i32
    return %arg0, %arg1, %c0_i32 : i32, i32, i32
  }
}

module attributes {stable_mosaic.version = 11 : i64} {
  func.func @_fc_stack_kernel(%arg0: i32, %arg1: i32, %arg2: memref<1x8x400xbf16, #tpu.memory_space<vmem>>, %arg3: memref<1x400x128xbf16, #tpu.memory_space<vmem>>, %arg4: memref<1x1x128xf32, #tpu.memory_space<vmem>>, %arg5: memref<1x128x128xbf16, #tpu.memory_space<vmem>>, %arg6: memref<1x1x128xf32, #tpu.memory_space<vmem>>, %arg7: memref<1x128x128xbf16, #tpu.memory_space<vmem>>, %arg8: memref<1x1x128xf32, #tpu.memory_space<vmem>>, %arg9: memref<1x8x128xf32, #tpu.memory_space<vmem>>) attributes {dimension_semantics = [#tpu.dimension_semantics<parallel>, #tpu.dimension_semantics<parallel>], iteration_bounds = array<i64: 3, 1>, scalar_prefetch = 0 : i64, scratch_operands = 0 : i64, tpu.core_type = #tpu.core_type<tc>, window_params = [{transform_indices = @transform_0, window_bounds = array<i64: 1, 8, 400>}, {transform_indices = @transform_1, window_bounds = array<i64: 1, 400, 128>}, {transform_indices = @transform_2, window_bounds = array<i64: 1, 1, 128>}, {transform_indices = @transform_3, window_bounds = array<i64: 1, 128, 128>}, {transform_indices = @transform_4, window_bounds = array<i64: 1, 1, 128>}, {transform_indices = @transform_5, window_bounds = array<i64: 1, 128, 128>}, {transform_indices = @transform_6, window_bounds = array<i64: 1, 1, 128>}, {transform_indices = @transform_7, window_bounds = array<i64: 1, 8, 128>}]} {
    %c0 = arith.constant 0 : index
    %c0_0 = arith.constant 0 : index
    %c0_1 = arith.constant 0 : index
    %0 = vector.load %arg2[%c0, %c0_0, %c0_1] : memref<1x8x400xbf16, #tpu.memory_space<vmem>>, vector<1x8x400xbf16>
    %1 = vector.shape_cast %0 : vector<1x8x400xbf16> to vector<8x400xbf16>
    %c0_2 = arith.constant 0 : index
    %c0_3 = arith.constant 0 : index
    %c0_4 = arith.constant 0 : index
    %2 = vector.load %arg3[%c0_2, %c0_3, %c0_4] : memref<1x400x128xbf16, #tpu.memory_space<vmem>>, vector<1x400x128xbf16>
    %3 = vector.shape_cast %2 : vector<1x400x128xbf16> to vector<400x128xbf16>
    %cst = arith.constant dense<0.000000e+00> : vector<8x128xf32>
    %4 = tpu.matmul %1, %3, %cst {dimension_numbers = #tpu.dot_dimension_numbers<[1], [0], [0], [1], [0, 0, 1, 1], [], []>} : vector<8x400xbf16>, vector<400x128xbf16>, vector<8x128xf32> -> vector<8x128xf32>
    %c0_5 = arith.constant 0 : index
    %c0_6 = arith.constant 0 : index
    %c0_7 = arith.constant 0 : index
    %5 = vector.load %arg4[%c0_5, %c0_6, %c0_7] : memref<1x1x128xf32, #tpu.memory_space<vmem>>, vector<1x1x128xf32>
    %6 = vector.shape_cast %5 : vector<1x1x128xf32> to vector<1x128xf32>
    %7 = vector.broadcast %6 : vector<1x128xf32> to vector<8x128xf32>
    %8 = arith.addf %4, %7 : vector<8x128xf32>
    %9 = math.tanh %8 : vector<8x128xf32>
    %10 = arith.truncf %9 : vector<8x128xf32> to vector<8x128xbf16>
    %c0_8 = arith.constant 0 : index
    %c0_9 = arith.constant 0 : index
    %c0_10 = arith.constant 0 : index
    %11 = vector.load %arg5[%c0_8, %c0_9, %c0_10] : memref<1x128x128xbf16, #tpu.memory_space<vmem>>, vector<1x128x128xbf16>
    %12 = vector.shape_cast %11 : vector<1x128x128xbf16> to vector<128x128xbf16>
    %cst_11 = arith.constant dense<0.000000e+00> : vector<8x128xf32>
    %13 = tpu.matmul %10, %12, %cst_11 {dimension_numbers = #tpu.dot_dimension_numbers<[1], [0], [0], [1], [0, 0, 1, 1], [], []>} : vector<8x128xbf16>, vector<128x128xbf16>, vector<8x128xf32> -> vector<8x128xf32>
    %c0_12 = arith.constant 0 : index
    %c0_13 = arith.constant 0 : index
    %c0_14 = arith.constant 0 : index
    %14 = vector.load %arg6[%c0_12, %c0_13, %c0_14] : memref<1x1x128xf32, #tpu.memory_space<vmem>>, vector<1x1x128xf32>
    %15 = vector.shape_cast %14 : vector<1x1x128xf32> to vector<1x128xf32>
    %16 = vector.broadcast %15 : vector<1x128xf32> to vector<8x128xf32>
    %17 = arith.addf %13, %16 : vector<8x128xf32>
    %18 = math.tanh %17 : vector<8x128xf32>
    %19 = arith.truncf %18 : vector<8x128xf32> to vector<8x128xbf16>
    %c0_15 = arith.constant 0 : index
    %c0_16 = arith.constant 0 : index
    %c0_17 = arith.constant 0 : index
    %20 = vector.load %arg7[%c0_15, %c0_16, %c0_17] : memref<1x128x128xbf16, #tpu.memory_space<vmem>>, vector<1x128x128xbf16>
    %21 = vector.shape_cast %20 : vector<1x128x128xbf16> to vector<128x128xbf16>
    %cst_18 = arith.constant dense<0.000000e+00> : vector<8x128xf32>
    %22 = tpu.matmul %19, %21, %cst_18 {dimension_numbers = #tpu.dot_dimension_numbers<[1], [0], [0], [1], [0, 0, 1, 1], [], []>} : vector<8x128xbf16>, vector<128x128xbf16>, vector<8x128xf32> -> vector<8x128xf32>
    %c0_19 = arith.constant 0 : index
    %c0_20 = arith.constant 0 : index
    %c0_21 = arith.constant 0 : index
    %23 = vector.load %arg8[%c0_19, %c0_20, %c0_21] : memref<1x1x128xf32, #tpu.memory_space<vmem>>, vector<1x1x128xf32>
    %24 = vector.shape_cast %23 : vector<1x1x128xf32> to vector<1x128xf32>
    %25 = vector.broadcast %24 : vector<1x128xf32> to vector<8x128xf32>
    %26 = arith.addf %22, %25 : vector<8x128xf32>
    %c0_22 = arith.constant 0 : index
    %c0_23 = arith.constant 0 : index
    %c0_24 = arith.constant 0 : index
    %27 = vector.load %arg9[%c0_22, %c0_23, %c0_24] : memref<1x8x128xf32, #tpu.memory_space<vmem>>, vector<1x8x128xf32>
    %28 = vector.shape_cast %27 : vector<1x8x128xf32> to vector<8x128xf32>
    %29 = vector.shape_cast %26 : vector<8x128xf32> to vector<1x8x128xf32>
    tpu.vector_store %arg9[%c0_22, %c0_23, %c0_24], %29 {strides = array<i32>} : memref<1x8x128xf32, #tpu.memory_space<vmem>>, vector<1x8x128xf32>,
    return
  }
  func.func @transform_0(%arg0: i32, %arg1: i32) -> (i32, i32, i32) {
    %c0_i32 = arith.constant 0 : i32
    %c0_i32_0 = arith.constant 0 : i32
    return %arg0, %arg1, %c0_i32 : i32, i32, i32
  }
  func.func @transform_1(%arg0: i32, %arg1: i32) -> (i32, i32, i32) {
    %c0_i32 = arith.constant 0 : i32
    %c0_i32_0 = arith.constant 0 : i32
    %c0_i32_1 = arith.constant 0 : i32
    return %arg0, %c0_i32, %c0_i32_0 : i32, i32, i32
  }
  func.func @transform_2(%arg0: i32, %arg1: i32) -> (i32, i32, i32) {
    %c0_i32 = arith.constant 0 : i32
    %c0_i32_0 = arith.constant 0 : i32
    %c0_i32_1 = arith.constant 0 : i32
    return %arg0, %c0_i32, %c0_i32_0 : i32, i32, i32
  }
  func.func @transform_3(%arg0: i32, %arg1: i32) -> (i32, i32, i32) {
    %c0_i32 = arith.constant 0 : i32
    %c0_i32_0 = arith.constant 0 : i32
    %c0_i32_1 = arith.constant 0 : i32
    return %arg0, %c0_i32, %c0_i32_0 : i32, i32, i32
  }
  func.func @transform_4(%arg0: i32, %arg1: i32) -> (i32, i32, i32) {
    %c0_i32 = arith.constant 0 : i32
    %c0_i32_0 = arith.constant 0 : i32
    %c0_i32_1 = arith.constant 0 : i32
    return %arg0, %c0_i32, %c0_i32_0 : i32, i32, i32
  }
  func.func @transform_5(%arg0: i32, %arg1: i32) -> (i32, i32, i32) {
    %c0_i32 = arith.constant 0 : i32
    %c0_i32_0 = arith.constant 0 : i32
    %c0_i32_1 = arith.constant 0 : i32
    return %arg0, %c0_i32, %c0_i32_0 : i32, i32, i32
  }
  func.func @transform_6(%arg0: i32, %arg1: i32) -> (i32, i32, i32) {
    %c0_i32 = arith.constant 0 : i32
    %c0_i32_0 = arith.constant 0 : i32
    %c0_i32_1 = arith.constant 0 : i32
    return %arg0, %c0_i32, %c0_i32_0 : i32, i32, i32
  }
  func.func @transform_7(%arg0: i32, %arg1: i32) -> (i32, i32, i32) {
    %c0_i32 = arith.constant 0 : i32
    %c0_i32_0 = arith.constant 0 : i32
    return %arg0, %arg1, %c0_i32 : i32, i32, i32
  }
}

</mosaic_0001>

<llo_original>
// kernel: lenet_ensemble_forward.3
$region0: #{lenet_ensemble_forward.3}
  #allocation0 [shape = 'u32[]', space=smem, size = 0x4, offset = 0x4, fixed_abs, tag = 'smem constant byte address 0x4 - core index']
  #allocation1 [shape = 'u32[144,128]{1,0:T(1,128)}', space=vmem, size = 0x12000, scoped, tag = 'internal scratch']
  %s0 = inlined_call_operand.vmem [shape: bf16[1,392,100], index: 0, kind: input, shape index: {}]
  %s1 = inlined_call_operand.vmem [shape: bf16[1,100,512], index: 1, kind: input, shape index: {}]
  %s2 = inlined_call_operand.vmem [shape: f32[1,1,512], index: 2, kind: input, shape index: {}]
  %s3 = inlined_call_operand.vmem [shape: bf16[1,392,128], index: 3, kind: output, shape index: {}]
  %s4 = sld [smem:[#allocation0]]
  $region22: #{lenet_ensemble_forward.3} parent=0
    _
  %s6 = ssub.s32 1, %s4
  %s7 = scalar_select 0, %s6, %s4
  // Predicated region
  $region2: #{lenet_ensemble_forward.3} parent=0 // pred_check
    _
  $region3: #{lenet_ensemble_forward.3} parent=0 // pred_check_branch
    %9 = sbr.rel (0) target = $region5
  $region4: #{lenet_ensemble_forward.3} parent=0 // pred_region
    _
  $region5: #{lenet_ensemble_forward.3} parent=0 // pred_fallthru
    _
  // Predicated region
  $region6: #{lenet_ensemble_forward.3} parent=0 // pred_check
    _
  $region7: #{lenet_ensemble_forward.3} parent=0 // pred_check_branch
    %11 = sbr.rel (0) target = $region9
  $region8: #{lenet_ensemble_forward.3} parent=0 // pred_region
    _
  $region9: #{lenet_ensemble_forward.3} parent=0 // pred_fallthru
    _
  // Predicated region
  $region10: #{lenet_ensemble_forward.3} parent=0 // pred_check
    _
  $region11: #{lenet_ensemble_forward.3} parent=0 // pred_check_branch
    %13 = sbr.rel (0) target = $region13
  $region12: #{lenet_ensemble_forward.3} parent=0 // pred_region
    _
  $region13: #{lenet_ensemble_forward.3} parent=0 // pred_fallthru
    _
  %v15 = vld [vmem:[%s0] sm:$0xf]
  %v16 = vld [vmem:[%s0 + $0x4] sm:$0xf]
  %v17 = vld [vmem:[%s0 + $0x8] sm:$0xf]
  %v18 = vld [vmem:[%s0 + $0xc] sm:$0xf]
  %v19 = vld [vmem:[%s0 + $0x10] sm:$0xf]
  %v20 = vld [vmem:[%s0 + $0x14] sm:$0xf]
  %v21 = vld [vmem:[%s0 + $0x18] sm:$0xf]
  %v22 = vld [vmem:[%s0 + $0x1c] sm:$0xf]
  %v23 = vld [vmem:[%s0 + $0x20] sm:$0xf]
  %v24 = vld [vmem:[%s0 + $0x24] sm:$0xf]
  %v25 = vld [vmem:[%s0 + $0x28] sm:$0xf]
  %v26 = vld [vmem:[%s0 + $0x2c] sm:$0xf]
  %v27 = vld [vmem:[%s0 + $0x30] sm:$0xf]
  %v28 = vld [vmem:[%s0 + $0x34] sm:$0xf]
  %v29 = vld [vmem:[%s0 + $0x38] sm:$0xf]
  %v30 = vld [vmem:[%s0 + $0x3c] sm:$0xf]
  %v31 = vld [vmem:[%s0 + $0x40] sm:$0xf]
  %v32 = vld [vmem:[%s0 + $0x44] sm:$0xf]
  %v33 = vld [vmem:[%s0 + $0x48] sm:$0xf]
  %v34 = vld [vmem:[%s0 + $0x4c] sm:$0xf]
  %v35 = vld [vmem:[%s0 + $0x50] sm:$0xf]
  %v36 = vld [vmem:[%s0 + $0x54] sm:$0xf]
  %v37 = vld [vmem:[%s0 + $0x58] sm:$0xf]
  %v38 = vld [vmem:[%s0 + $0x5c] sm:$0xf]
  %v39 = vld [vmem:[%s0 + $0x60] sm:$0xf]
  %v40 = vld [vmem:[%s0 + $0x64] sm:$0xf]
  %v41 = vld [vmem:[%s0 + $0x68] sm:$0xf]
  %v42 = vld [vmem:[%s0 + $0x6c] sm:$0xf]
  %v43 = vld [vmem:[%s0 + $0x70] sm:$0xf]
  %v44 = vld [vmem:[%s0 + $0x74] sm:$0xf]
  %v45 = vld [vmem:[%s0 + $0x78] sm:$0xf]
  %v46 = vld [vmem:[%s0 + $0x7c] sm:$0xf]
  %v47 = vld [vmem:[%s0 + $0x80] sm:$0xf]
  %v48 = vld [vmem:[%s0 + $0x84] sm:$0xf]
  %v49 = vld [vmem:[%s0 + $0x88] sm:$0xf]
  %v50 = vld [vmem:[%s0 + $0x8c] sm:$0xf]
  %v51 = vld [vmem:[%s0 + $0x90] sm:$0xf]
  %v52 = vld [vmem:[%s0 + $0x94] sm:$0xf]
  %v53 = vld [vmem:[%s0 + $0x98] sm:$0xf]
  %v54 = vld [vmem:[%s0 + $0x9c] sm:$0xf]
  %v55 = vld [vmem:[%s0 + $0xa0] sm:$0xf]
  %v56 = vld [vmem:[%s0 + $0xa4] sm:$0xf]
  %v57 = vld [vmem:[%s0 + $0xa8] sm:$0xf]
  %v58 = vld [vmem:[%s0 + $0xac] sm:$0xf]
  %v59 = vld [vmem:[%s0 + $0xb0] sm:$0xf]
  %v60 = vld [vmem:[%s0 + $0xb4] sm:$0xf]
  %v61 = vld [vmem:[%s0 + $0xb8] sm:$0xf]
  %v62 = vld [vmem:[%s0 + $0xbc] sm:$0xf]
  %v63 = vld [vmem:[%s0 + $0xc0] sm:$0xf]
  %v64 = vld [vmem:[%s1] sm:$0xff]
  %v65 = vld [vmem:[%s1 + $0x8] sm:$0xff]
  %v66 = vld [vmem:[%s1 + $0x10] sm:$0xff]
  %v67 = vld [vmem:[%s1 + $0x18] sm:$0xff]
  %v68 = vld [vmem:[%s1 + $0x20] sm:$0xff]
  %v69 = vld [vmem:[%s1 + $0x28] sm:$0xff]
  %v70 = vld [vmem:[%s1 + $0x30] sm:$0xff]
  %v71 = vld [vmem:[%s1 + $0x38] sm:$0xff]
  %v72 = vld [vmem:[%s1 + $0x40] sm:$0xff]
  %v73 = vld [vmem:[%s1 + $0x48] sm:$0xff]
  %v74 = vld [vmem:[%s1 + $0x50] sm:$0xff]
  %v75 = vld [vmem:[%s1 + $0x58] sm:$0xff]
  %v76 = vld [vmem:[%s1 + $0x60] sm:$0xff]
  %v77 = vld [vmem:[%s1 + $0x68] sm:$0xff]
  %v78 = vld [vmem:[%s1 + $0x70] sm:$0xff]
  %v79 = vld [vmem:[%s1 + $0x78] sm:$0xff]
  %v80 = vld [vmem:[%s1 + $0x80] sm:$0xff]
  %v81 = vld [vmem:[%s1 + $0x88] sm:$0xff]
  %v82 = vld [vmem:[%s1 + $0x90] sm:$0xff]
  %v83 = vld [vmem:[%s1 + $0x98] sm:$0xff]
  %v84 = vld [vmem:[%s1 + $0xa0] sm:$0xff]
  %v85 = vld [vmem:[%s1 + $0xa8] sm:$0xff]
  %v86 = vld [vmem:[%s1 + $0xb0] sm:$0xff]
  %v87 = vld [vmem:[%s1 + $0xb8] sm:$0xff]
  %v88 = vld [vmem:[%s1 + $0xc0] sm:$0x33]
  %v89 = vld [vmem:[%s1 + $0xc8] sm:$0x33]
  %v90 = vld [vmem:[%s2] sm:$0xf]
  %v92 = vlaneseq
  %v93 = vshrl.u32 %v92, 7
  %v94 = vsub.s32 0, %v93
  %v95 = vrot.slane %v90, %v94
  %v96 = vlaneseq
  %v97 = vshrl.u32 %v96, 7
  %v98 = vsub.s32 1, %v97
  %v99 = vrot.slane %v90, %v98
  %v100 = vlaneseq
  %v101 = vshrl.u32 %v100, 7
  %v102 = vsub.s32 2, %v101
  %v103 = vrot.slane %v90, %v102
  %v104 = vlaneseq
  %v105 = vshrl.u32 %v104, 7
  %v106 = vsub.s32 3, %v105
  %v107 = vrot.slane %v90, %v106
  %v161 = vunpack.c.l.b16 %v15
  %v162 = vunpack.c.l.b16 %v16
  %v163 = vunpack.c.l.b16 %v17
  %v164 = vunpack.c.l.b16 %v18
  %v165 = vunpack.c.l.b16 %v19
  %v166 = vunpack.c.l.b16 %v20
  %v167 = vunpack.c.l.b16 %v21
  %v168 = vunpack.c.l.b16 %v22
  %v169 = vunpack.c.l.b16 %v23
  %v170 = vunpack.c.l.b16 %v24
  %v171 = vunpack.c.l.b16 %v25
  %v172 = vunpack.c.l.b16 %v26
  %v173 = vunpack.c.l.b16 %v27
  %v174 = vunpack.c.l.b16 %v28
  %v175 = vunpack.c.l.b16 %v29
  %v176 = vunpack.c.l.b16 %v30
  %v177 = vunpack.c.l.b16 %v31
  %v178 = vunpack.c.l.b16 %v32
  %v179 = vunpack.c.l.b16 %v33
  %v180 = vunpack.c.l.b16 %v34
  %v181 = vunpack.c.l.b16 %v35
  %v182 = vunpack.c.l.b16 %v36
  %v183 = vunpack.c.l.b16 %v37
  %v184 = vunpack.c.l.b16 %v38
  %v185 = vunpack.c.l.b16 %v39
  %v186 = vunpack.c.l.b16 %v40
  %v187 = vunpack.c.l.b16 %v41
  %v188 = vunpack.c.l.b16 %v42
  %v189 = vunpack.c.l.b16 %v43
  %v190 = vunpack.c.l.b16 %v44
  %v191 = vunpack.c.l.b16 %v45
  %v192 = vunpack.c.l.b16 %v46
  %v193 = vunpack.c.l.b16 %v47
  %v194 = vunpack.c.l.b16 %v48
  %v195 = vunpack.c.l.b16 %v49
  %v196 = vunpack.c.l.b16 %v50
  %v197 = vunpack.c.l.b16 %v51
  %v198 = vunpack.c.l.b16 %v52
  %v199 = vunpack.c.l.b16 %v53
  %v200 = vunpack.c.l.b16 %v54
  %v201 = vunpack.c.l.b16 %v55
  %v202 = vunpack.c.l.b16 %v56
  %v203 = vunpack.c.l.b16 %v57
  %v204 = vunpack.c.l.b16 %v58
  %v205 = vunpack.c.l.b16 %v59
  %v206 = vunpack.c.l.b16 %v60
  %v207 = vunpack.c.l.b16 %v61
  %v208 = vunpack.c.l.b16 %v62
  %v209 = vunpack.c.l.b16 %v63
  %v210 = vpack.c.b16 %v162, %v161
  %v211 = vpack.c.b16 %v164, %v163
  %v212 = vpack.c.b16 %v166, %v165
  %v213 = vpack.c.b16 %v168, %v167
  %v214 = vpack.c.b16 %v170, %v169
  %v215 = vpack.c.b16 %v172, %v171
  %v216 = vpack.c.b16 %v174, %v173
  %v217 = vpack.c.b16 %v176, %v175
  %v218 = vpack.c.b16 %v178, %v177
  %v219 = vpack.c.b16 %v180, %v179
  %v220 = vpack.c.b16 %v182, %v181
  %v221 = vpack.c.b16 %v184, %v183
  %v222 = vpack.c.b16 %v186, %v185
  %v223 = vpack.c.b16 %v188, %v187
  %v224 = vpack.c.b16 %v190, %v189
  %v225 = vpack.c.b16 %v192, %v191
  %v226 = vpack.c.b16 %v194, %v193
  %v227 = vpack.c.b16 %v196, %v195
  %v228 = vpack.c.b16 %v198, %v197
  %v229 = vpack.c.b16 %v200, %v199
  %v230 = vpack.c.b16 %v202, %v201
  %v231 = vpack.c.b16 %v204, %v203
  %v232 = vpack.c.b16 %v206, %v205
  %v233 = vpack.c.b16 %v208, %v207
  %v234 = vpack.c.b16 %v209, %v209
  %v261 = vunpack.c.l.b16 %v64
  %v262 = vunpack.c.h.b16 %v64
  %v263 = vunpack.c.l.b16 %v65
  %v264 = vunpack.c.h.b16 %v65
  %v265 = vunpack.c.l.b16 %v66
  %v266 = vunpack.c.h.b16 %v66
  %v267 = vunpack.c.l.b16 %v67
  %v268 = vunpack.c.h.b16 %v67
  %v269 = vunpack.c.l.b16 %v68
  %v270 = vunpack.c.h.b16 %v68
  %v271 = vunpack.c.l.b16 %v69
  %v272 = vunpack.c.h.b16 %v69
  %v273 = vunpack.c.l.b16 %v70
  %v274 = vunpack.c.h.b16 %v70
  %v275 = vunpack.c.l.b16 %v71
  %v276 = vunpack.c.h.b16 %v71
  %v277 = vunpack.c.l.b16 %v72
  %v278 = vunpack.c.h.b16 %v72
  %v279 = vunpack.c.l.b16 %v73
  %v280 = vunpack.c.h.b16 %v73
  %v281 = vunpack.c.l.b16 %v74
  %v282 = vunpack.c.h.b16 %v74
  %v283 = vunpack.c.l.b16 %v75
  %v284 = vunpack.c.h.b16 %v75
  %v285 = vunpack.c.l.b16 %v76
  %v286 = vunpack.c.h.b16 %v76
  %v287 = vunpack.c.l.b16 %v77
  %v288 = vunpack.c.h.b16 %v77
  %v289 = vunpack.c.l.b16 %v78
  %v290 = vunpack.c.h.b16 %v78
  %v291 = vunpack.c.l.b16 %v79
  %v292 = vunpack.c.h.b16 %v79
  %v293 = vunpack.c.l.b16 %v80
  %v294 = vunpack.c.h.b16 %v80
  %v295 = vunpack.c.l.b16 %v81
  %v296 = vunpack.c.h.b16 %v81
  %v297 = vunpack.c.l.b16 %v82
  %v298 = vunpack.c.h.b16 %v82
  %v299 = vunpack.c.l.b16 %v83
  %v300 = vunpack.c.h.b16 %v83
  %v301 = vunpack.c.l.b16 %v84
  %v302 = vunpack.c.h.b16 %v84
  %v303 = vunpack.c.l.b16 %v85
  %v304 = vunpack.c.h.b16 %v85
  %v305 = vunpack.c.l.b16 %v86
  %v306 = vunpack.c.h.b16 %v86
  %v307 = vunpack.c.l.b16 %v87
  %v308 = vunpack.c.h.b16 %v87
  %v309 = vunpack.c.l.b16 %v88
  %v310 = vunpack.c.h.b16 %v88
  %v311 = vunpack.c.l.b16 %v89
  %v312 = vunpack.c.h.b16 %v89
  %v313 = vpack.c.b16 %v265, %v261
  %v314 = vpack.c.b16 %v266, %v262
  %v315 = vpack.c.b16 %v267, %v263
  %v316 = vpack.c.b16 %v268, %v264
  %v317 = vpack.c.b16 %v273, %v269
  %v318 = vpack.c.b16 %v274, %v270
  %v319 = vpack.c.b16 %v275, %v271
  %v320 = vpack.c.b16 %v276, %v272
  %v321 = vpack.c.b16 %v281, %v277
  %v322 = vpack.c.b16 %v282, %v278
  %v323 = vpack.c.b16 %v283, %v279
  %v324 = vpack.c.b16 %v284, %v280
  %v325 = vpack.c.b16 %v289, %v285
  %v326 = vpack.c.b16 %v290, %v286
  %v327 = vpack.c.b16 %v291, %v287
  %v328 = vpack.c.b16 %v292, %v288
  %v329 = vpack.c.b16 %v297, %v293
  %v330 = vpack.c.b16 %v298, %v294
  %v331 = vpack.c.b16 %v299, %v295
  %v332 = vpack.c.b16 %v300, %v296
  %v333 = vpack.c.b16 %v305, %v301
  %v334 = vpack.c.b16 %v306, %v302
  %v335 = vpack.c.b16 %v307, %v303
  %v336 = vpack.c.b16 %v308, %v304
  %v337 = vpack.c.b16 %v309, %v309
  %v338 = vpack.c.b16 %v310, %v310
  %v339 = vpack.c.b16 %v311, %v311
  %v340 = vpack.c.b16 %v312, %v312
  %vm365 = vcmask 818176
  %v367 = vsel %vm365, %v210, 0
  %v370 = vsel %vm365, %v211, 0
  %v373 = vsel %vm365, %v212, 0
  %v376 = vsel %vm365, %v213, 0
  %v379 = vsel %vm365, %v214, 0
  %v382 = vsel %vm365, %v215, 0
  %v385 = vsel %vm365, %v216, 0
  %v388 = vsel %vm365, %v217, 0
  %v391 = vsel %vm365, %v218, 0
  %v394 = vsel %vm365, %v219, 0
  %v397 = vsel %vm365, %v220, 0
  %v400 = vsel %vm365, %v221, 0
  %v403 = vsel %vm365, %v222, 0
  %v406 = vsel %vm365, %v223, 0
  %v409 = vsel %vm365, %v224, 0
  %v412 = vsel %vm365, %v225, 0
  %v415 = vsel %vm365, %v226, 0
  %v418 = vsel %vm365, %v227, 0
  %v421 = vsel %vm365, %v228, 0
  %v424 = vsel %vm365, %v229, 0
  %v427 = vsel %vm365, %v230, 0
  %v430 = vsel %vm365, %v231, 0
  %v433 = vsel %vm365, %v232, 0
  %v436 = vsel %vm365, %v233, 0
  %v439 = vsel %vm365, %v234, 0
  %vm441 = vcmask 1041408
  %v443 = vsel %vm441, %v337, 0
  %v446 = vsel %vm441, %v338, 0
  %v449 = vsel %vm441, %v339, 0
  %v452 = vsel %vm441, %v340, 0
  %454 = vmatprep.subr.bf16.mxu0 0
  %455 = vmatpush1.bf16.msra.mxu0 0
  %456 = vmatprep.subr.bf16.mxu0 %v446
  %457 = vmatpush1.bf16.msra.mxu0 %v443
  %458 = vmatprep.subr.bf16.mxu0 %v334
  %459 = vmatpush1.bf16.msra.mxu0 %v333
  %460 = vmatprep.subr.bf16.mxu0 %v330
  %461 = vmatpush1.bf16.msra.mxu0 %v329
  %462 = vmatprep.subr.bf16.mxu0 %v326
  %463 = vmatpush1.bf16.msra.mxu0 %v325
  %464 = vmatprep.subr.bf16.mxu0 %v322
  %465 = vmatpush1.bf16.msra.mxu0 %v321
  %466 = vmatprep.subr.bf16.mxu0 %v318
  %467 = vmatpush1.bf16.msra.mxu0 %v317
  %468 = vmatprep.subr.bf16.mxu0 %v314
  %469 = vmatpush1.bf16.msra.mxu0 %v313
  %470 = vmatprep.subr.bf16.mxu0 0
  %471 = vmatpush2.bf16.msra.mxu0 0
  %472 = vmatprep.subr.bf16.mxu0 0
  %473 = vmatpush2.bf16.msra.mxu0 0
  %474 = vmatprep.subr.bf16.mxu0 0
  %475 = vmatpush2.bf16.msra.mxu0 0
  %476 = vmatprep.subr.bf16.mxu0 0
  %477 = vmatpush2.bf16.msra.mxu0 0
  %478 = vmatprep.subr.bf16.mxu0 0
  %479 = vmatpush2.bf16.msra.mxu0 0
  %480 = vmatprep.subr.bf16.mxu0 0
  %481 = vmatpush2.bf16.msra.mxu0 0
  %482 = vmatprep.subr.bf16.mxu0 0
  %483 = vmatpush2.bf16.msra.mxu0 0
  %484 = vmatprep.subr.bf16.mxu0 0
  %485 = vmatpush2.bf16.msra.mxu0 0
  %486 = vmatprep.mubr.bf16.mxu0 0
  %487 = vmatmul.mubr.bf16.gmra.mxu0 %v367
  %v488 = vpop.f32.mrf.mxu0
  %v489 = vadd.f32 %v95, %v488
  %v490 = vpop.f32.mrf.mxu0
  %v491 = vadd.f32 %v99, %v490
  %v492 = vpop.f32.mrf.mxu0
  %v493 = vadd.f32 %v95, %v492
  %v494 = vpop.f32.mrf.mxu0
  %v495 = vadd.f32 %v99, %v494
  %496 = vmatprep.mubr.bf16.mxu0 0
  %497 = vmatmul.mubr.bf16.gmra.mxu0 %v370
  %v498 = vpop.f32.mrf.mxu0
  %v499 = vadd.f32 %v95, %v498
  %v500 = vpop.f32.mrf.mxu0
  %v501 = vadd.f32 %v99, %v500
  %v502 = vpop.f32.mrf.mxu0
  %v503 = vadd.f32 %v95, %v502
  %v504 = vpop.f32.mrf.mxu0
  %v505 = vadd.f32 %v99, %v504
  %506 = vmatprep.mubr.bf16.mxu0 0
  %507 = vmatmul.mubr.bf16.gmra.mxu0 %v373
  %v508 = vpop.f32.mrf.mxu0
  %v509 = vadd.f32 %v95, %v508
  %v510 = vpop.f32.mrf.mxu0
  %v511 = vadd.f32 %v99, %v510
  %v512 = vpop.f32.mrf.mxu0
  %v513 = vadd.f32 %v95, %v512
  %v514 = vpop.f32.mrf.mxu0
  %v515 = vadd.f32 %v99, %v514
  %516 = vmatprep.mubr.bf16.mxu0 0
  %517 = vmatmul.mubr.bf16.gmra.mxu0 %v376
  %v518 = vpop.f32.mrf.mxu0
  %v519 = vadd.f32 %v95, %v518
  %v520 = vpop.f32.mrf.mxu0
  %v521 = vadd.f32 %v99, %v520
  %v522 = vpop.f32.mrf.mxu0
  %v523 = vadd.f32 %v95, %v522
  %v524 = vpop.f32.mrf.mxu0
  %v525 = vadd.f32 %v99, %v524
  %526 = vmatprep.mubr.bf16.mxu0 0
  %527 = vmatmul.mubr.bf16.gmra.mxu0 %v379
  %v528 = vpop.f32.mrf.mxu0
  %v529 = vadd.f32 %v95, %v528
  %v530 = vpop.f32.mrf.mxu0
  %v531 = vadd.f32 %v99, %v530
  %v532 = vpop.f32.mrf.mxu0
  %v533 = vadd.f32 %v95, %v532
  %v534 = vpop.f32.mrf.mxu0
  %v535 = vadd.f32 %v99, %v534
  %536 = vmatprep.mubr.bf16.mxu0 0
  %537 = vmatmul.mubr.bf16.gmra.mxu0 %v382
  %v538 = vpop.f32.mrf.mxu0
  %v539 = vadd.f32 %v95, %v538
  %v540 = vpop.f32.mrf.mxu0
  %v541 = vadd.f32 %v99, %v540
  %v542 = vpop.f32.mrf.mxu0
  %v543 = vadd.f32 %v95, %v542
  %v544 = vpop.f32.mrf.mxu0
  %v545 = vadd.f32 %v99, %v544
  %546 = vmatprep.mubr.bf16.mxu0 0
  %547 = vmatmul.mubr.bf16.gmra.mxu0 %v385
  %v548 = vpop.f32.mrf.mxu0
  %v549 = vadd.f32 %v95, %v548
  %v550 = vpop.f32.mrf.mxu0
  %v551 = vadd.f32 %v99, %v550
  %v552 = vpop.f32.mrf.mxu0
  %v553 = vadd.f32 %v95, %v552
  %v554 = vpop.f32.mrf.mxu0
  %v555 = vadd.f32 %v99, %v554
  %556 = vmatprep.mubr.bf16.mxu0 0
  %557 = vmatmul.mubr.bf16.gmra.mxu0 %v388
  %v558 = vpop.f32.mrf.mxu0
  %v559 = vadd.f32 %v95, %v558
  %v560 = vpop.f32.mrf.mxu0
  %v561 = vadd.f32 %v99, %v560
  %v562 = vpop.f32.mrf.mxu0
  %v563 = vadd.f32 %v95, %v562
  %v564 = vpop.f32.mrf.mxu0
  %v565 = vadd.f32 %v99, %v564
  %566 = vmatprep.mubr.bf16.mxu0 0
  %567 = vmatmul.mubr.bf16.gmra.mxu0 %v391
  %v568 = vpop.f32.mrf.mxu0
  %v569 = vadd.f32 %v95, %v568
  %v570 = vpop.f32.mrf.mxu0
  %v571 = vadd.f32 %v99, %v570
  %v572 = vpop.f32.mrf.mxu0
  %v573 = vadd.f32 %v95, %v572
  %v574 = vpop.f32.mrf.mxu0
  %v575 = vadd.f32 %v99, %v574
  %576 = vmatprep.mubr.bf16.mxu0 0
  %577 = vmatmul.mubr.bf16.gmra.mxu0 %v394
  %v578 = vpop.f32.mrf.mxu0
  %v579 = vadd.f32 %v95, %v578
  %v580 = vpop.f32.mrf.mxu0
  %v581 = vadd.f32 %v99, %v580
  %v582 = vpop.f32.mrf.mxu0
  %v583 = vadd.f32 %v95, %v582
  %v584 = vpop.f32.mrf.mxu0
  %v585 = vadd.f32 %v99, %v584
  %586 = vmatprep.mubr.bf16.mxu0 0
  %587 = vmatmul.mubr.bf16.gmra.mxu0 %v397
  %v588 = vpop.f32.mrf.mxu0
  %v589 = vadd.f32 %v95, %v588
  %v590 = vpop.f32.mrf.mxu0
  %v591 = vadd.f32 %v99, %v590
  %v592 = vpop.f32.mrf.mxu0
  %v593 = vadd.f32 %v95, %v592
  %v594 = vpop.f32.mrf.mxu0
  %v595 = vadd.f32 %v99, %v594
  %596 = vmatprep.mubr.bf16.mxu0 0
  %597 = vmatmul.mubr.bf16.gmra.mxu0 %v400
  %v598 = vpop.f32.mrf.mxu0
  %v599 = vadd.f32 %v95, %v598
  %v600 = vpop.f32.mrf.mxu0
  %v601 = vadd.f32 %v99, %v600
  %v602 = vpop.f32.mrf.mxu0
  %v603 = vadd.f32 %v95, %v602
  %v604 = vpop.f32.mrf.mxu0
  %v605 = vadd.f32 %v99, %v604
  %606 = vmatprep.mubr.bf16.mxu0 0
  %607 = vmatmul.mubr.bf16.gmra.mxu0 %v403
  %v608 = vpop.f32.mrf.mxu0
  %v609 = vadd.f32 %v95, %v608
  %v610 = vpop.f32.mrf.mxu0
  %v611 = vadd.f32 %v99, %v610
  %v612 = vpop.f32.mrf.mxu0
  %v613 = vadd.f32 %v95, %v612
  %v614 = vpop.f32.mrf.mxu0
  %v615 = vadd.f32 %v99, %v614
  %616 = vmatprep.mubr.bf16.mxu0 0
  %617 = vmatmul.mubr.bf16.gmra.mxu0 %v406
  %v618 = vpop.f32.mrf.mxu0
  %v619 = vadd.f32 %v95, %v618
  %v620 = vpop.f32.mrf.mxu0
  %v621 = vadd.f32 %v99, %v620
  %v622 = vpop.f32.mrf.mxu0
  %v623 = vadd.f32 %v95, %v622
  %v624 = vpop.f32.mrf.mxu0
  %v625 = vadd.f32 %v99, %v624
  %626 = vmatprep.mubr.bf16.mxu0 0
  %627 = vmatmul.mubr.bf16.gmra.mxu0 %v409
  %v628 = vpop.f32.mrf.mxu0
  %v629 = vadd.f32 %v95, %v628
  %v630 = vpop.f32.mrf.mxu0
  %v631 = vadd.f32 %v99, %v630
  %v632 = vpop.f32.mrf.mxu0
  %v633 = vadd.f32 %v95, %v632
  %v634 = vpop.f32.mrf.mxu0
  %v635 = vadd.f32 %v99, %v634
  %636 = vmatprep.mubr.bf16.mxu0 0
  %637 = vmatmul.mubr.bf16.gmra.mxu0 %v412
  %v638 = vpop.f32.mrf.mxu0
  %v639 = vadd.f32 %v95, %v638
  %v640 = vpop.f32.mrf.mxu0
  %v641 = vadd.f32 %v99, %v640
  %v642 = vpop.f32.mrf.mxu0
  %v643 = vadd.f32 %v95, %v642
  %v644 = vpop.f32.mrf.mxu0
  %v645 = vadd.f32 %v99, %v644
  %646 = vmatprep.mubr.bf16.mxu0 0
  %647 = vmatmul.mubr.bf16.gmra.mxu0 %v415
  %v648 = vpop.f32.mrf.mxu0
  %v649 = vadd.f32 %v95, %v648
  %v650 = vpop.f32.mrf.mxu0
  %v651 = vadd.f32 %v99, %v650
  %v652 = vpop.f32.mrf.mxu0
  %v653 = vadd.f32 %v95, %v652
  %v654 = vpop.f32.mrf.mxu0
  %v655 = vadd.f32 %v99, %v654
  %656 = vmatprep.mubr.bf16.mxu0 0
  %657 = vmatmul.mubr.bf16.gmra.mxu0 %v418
  %v658 = vpop.f32.mrf.mxu0
  %v659 = vadd.f32 %v95, %v658
  %v660 = vpop.f32.mrf.mxu0
  %v661 = vadd.f32 %v99, %v660
  %v662 = vpop.f32.mrf.mxu0
  %v663 = vadd.f32 %v95, %v662
  %v664 = vpop.f32.mrf.mxu0
  %v665 = vadd.f32 %v99, %v664
  %666 = vmatprep.mubr.bf16.mxu0 0
  %667 = vmatmul.mubr.bf16.gmra.mxu0 %v421
  %v668 = vpop.f32.mrf.mxu0
  %v669 = vadd.f32 %v95, %v668
  %v670 = vpop.f32.mrf.mxu0
  %v671 = vadd.f32 %v99, %v670
  %v672 = vpop.f32.mrf.mxu0
  %v673 = vadd.f32 %v95, %v672
  %v674 = vpop.f32.mrf.mxu0
  %v675 = vadd.f32 %v99, %v674
  %676 = vmatprep.mubr.bf16.mxu0 0
  %677 = vmatmul.mubr.bf16.gmra.mxu0 %v424
  %v678 = vpop.f32.mrf.mxu0
  %v679 = vadd.f32 %v95, %v678
  %v680 = vpop.f32.mrf.mxu0
  %v681 = vadd.f32 %v99, %v680
  %v682 = vpop.f32.mrf.mxu0
  %v683 = vadd.f32 %v95, %v682
  %v684 = vpop.f32.mrf.mxu0
  %v685 = vadd.f32 %v99, %v684
  %686 = vmatprep.mubr.bf16.mxu0 0
  %687 = vmatmul.mubr.bf16.gmra.mxu0 %v427
  %v688 = vpop.f32.mrf.mxu0
  %v689 = vadd.f32 %v95, %v688
  %v690 = vpop.f32.mrf.mxu0
  %v691 = vadd.f32 %v99, %v690
  %v692 = vpop.f32.mrf.mxu0
  %v693 = vadd.f32 %v95, %v692
  %v694 = vpop.f32.mrf.mxu0
  %v695 = vadd.f32 %v99, %v694
  %696 = vmatprep.mubr.bf16.mxu0 0
  %697 = vmatmul.mubr.bf16.gmra.mxu0 %v430
  %v698 = vpop.f32.mrf.mxu0
  %v699 = vadd.f32 %v95, %v698
  %v700 = vpop.f32.mrf.mxu0
  %v701 = vadd.f32 %v99, %v700
  %v702 = vpop.f32.mrf.mxu0
  %v703 = vadd.f32 %v95, %v702
  %v704 = vpop.f32.mrf.mxu0
  %v705 = vadd.f32 %v99, %v704
  %706 = vmatprep.mubr.bf16.mxu0 0
  %707 = vmatmul.mubr.bf16.gmra.mxu0 %v433
  %v708 = vpop.f32.mrf.mxu0
  %v709 = vadd.f32 %v95, %v708
  %v710 = vpop.f32.mrf.mxu0
  %v711 = vadd.f32 %v99, %v710
  %v712 = vpop.f32.mrf.mxu0
  %v713 = vadd.f32 %v95, %v712
  %v714 = vpop.f32.mrf.mxu0
  %v715 = vadd.f32 %v99, %v714
  %716 = vmatprep.mubr.bf16.mxu0 0
  %717 = vmatmul.mubr.bf16.gmra.mxu0 %v436
  %v718 = vpop.f32.mrf.mxu0
  %v719 = vadd.f32 %v95, %v718
  %v720 = vpop.f32.mrf.mxu0
  %v721 = vadd.f32 %v99, %v720
  %v722 = vpop.f32.mrf.mxu0
  %v723 = vadd.f32 %v95, %v722
  %v724 = vpop.f32.mrf.mxu0
  %v725 = vadd.f32 %v99, %v724
  %726 = vmatprep.mubr.bf16.mxu0 0
  %727 = vmatmul.mubr.bf16.gmra.mxu0 %v439
  %v728 = vpop.f32.mrf.mxu0
  %v729 = vadd.f32 %v95, %v728
  %v730 = vpop.f32.mrf.mxu0
  %v731 = vadd.f32 %v99, %v730
  %v732 = vpop.f32.mrf.mxu0
  %v733 = vpop.f32.mrf.mxu0
  %734 = vdwg.mxu0
  %735 = vmatprep.subr.bf16.mxu0 0
  %736 = vmatpush1.bf16.msra.mxu0 0
  %737 = vmatprep.subr.bf16.mxu0 %v452
  %738 = vmatpush1.bf16.msra.mxu0 %v449
  %739 = vmatprep.subr.bf16.mxu0 %v336
  %740 = vmatpush1.bf16.msra.mxu0 %v335
  %741 = vmatprep.subr.bf16.mxu0 %v332
  %742 = vmatpush1.bf16.msra.mxu0 %v331
  %743 = vmatprep.subr.bf16.mxu0 %v328
  %744 = vmatpush1.bf16.msra.mxu0 %v327
  %745 = vmatprep.subr.bf16.mxu0 %v324
  %746 = vmatpush1.bf16.msra.mxu0 %v323
  %747 = vmatprep.subr.bf16.mxu0 %v320
  %748 = vmatpush1.bf16.msra.mxu0 %v319
  %749 = vmatprep.subr.bf16.mxu0 %v316
  %750 = vmatpush1.bf16.msra.mxu0 %v315
  %751 = vmatprep.subr.bf16.mxu0 0
  %752 = vmatpush2.bf16.msra.mxu0 0
  %753 = vmatprep.subr.bf16.mxu0 0
  %754 = vmatpush2.bf16.msra.mxu0 0
  %755 = vmatprep.subr.bf16.mxu0 0
  %756 = vmatpush2.bf16.msra.mxu0 0
  %757 = vmatprep.subr.bf16.mxu0 0
  %758 = vmatpush2.bf16.msra.mxu0 0
  %759 = vmatprep.subr.bf16.mxu0 0
  %760 = vmatpush2.bf16.msra.mxu0 0
  %761 = vmatprep.subr.bf16.mxu0 0
  %762 = vmatpush2.bf16.msra.mxu0 0
  %763 = vmatprep.subr.bf16.mxu0 0
  %764 = vmatpush2.bf16.msra.mxu0 0
  %765 = vmatprep.subr.bf16.mxu0 0
  %766 = vmatpush2.bf16.msra.mxu0 0
  %767 = vmatprep.mubr.bf16.mxu0 0
  %768 = vmatmul.mubr.bf16.gmra.mxu0 %v367
  %v769 = vpop.f32.mrf.mxu0
  %v770 = vadd.f32 %v103, %v769
  %v771 = vpop.f32.mrf.mxu0
  %v772 = vadd.f32 %v107, %v771
  %v773 = vpop.f32.mrf.mxu0
  %v774 = vadd.f32 %v103, %v773
  %v775 = vpop.f32.mrf.mxu0
  %v776 = vadd.f32 %v107, %v775
  %777 = vmatprep.mubr.bf16.mxu0 0
  %778 = vmatmul.mubr.bf16.gmra.mxu0 %v370
  %v779 = vpop.f32.mrf.mxu0
  %v780 = vadd.f32 %v103, %v779
  %v781 = vpop.f32.mrf.mxu0
  %v782 = vadd.f32 %v107, %v781
  %v783 = vpop.f32.mrf.mxu0
  %v784 = vadd.f32 %v103, %v783
  %v785 = vpop.f32.mrf.mxu0
  %v786 = vadd.f32 %v107, %v785
  %787 = vmatprep.mubr.bf16.mxu0 0
  %788 = vmatmul.mubr.bf16.gmra.mxu0 %v373
  %v789 = vpop.f32.mrf.mxu0
  %v790 = vadd.f32 %v103, %v789
  %v791 = vpop.f32.mrf.mxu0
  %v792 = vadd.f32 %v107, %v791
  %v793 = vpop.f32.mrf.mxu0
  %v794 = vadd.f32 %v103, %v793
  %v795 = vpop.f32.mrf.mxu0
  %v796 = vadd.f32 %v107, %v795
  %797 = vmatprep.mubr.bf16.mxu0 0
  %798 = vmatmul.mubr.bf16.gmra.mxu0 %v376
  %v799 = vpop.f32.mrf.mxu0
  %v800 = vadd.f32 %v103, %v799
  %v801 = vpop.f32.mrf.mxu0
  %v802 = vadd.f32 %v107, %v801
  %v803 = vpop.f32.mrf.mxu0
  %v804 = vadd.f32 %v103, %v803
  %v805 = vpop.f32.mrf.mxu0
  %v806 = vadd.f32 %v107, %v805
  %807 = vmatprep.mubr.bf16.mxu0 0
  %808 = vmatmul.mubr.bf16.gmra.mxu0 %v379
  %v809 = vpop.f32.mrf.mxu0
  %v810 = vadd.f32 %v103, %v809
  %v811 = vpop.f32.mrf.mxu0
  %v812 = vadd.f32 %v107, %v811
  %v813 = vpop.f32.mrf.mxu0
  %v814 = vadd.f32 %v103, %v813
  %v815 = vpop.f32.mrf.mxu0
  %v816 = vadd.f32 %v107, %v815
  %817 = vmatprep.mubr.bf16.mxu0 0
  %818 = vmatmul.mubr.bf16.gmra.mxu0 %v382
  %v819 = vpop.f32.mrf.mxu0
  %v820 = vadd.f32 %v103, %v819
  %v821 = vpop.f32.mrf.mxu0
  %v822 = vadd.f32 %v107, %v821
  %v823 = vpop.f32.mrf.mxu0
  %v824 = vadd.f32 %v103, %v823
  %v825 = vpop.f32.mrf.mxu0
  %v826 = vadd.f32 %v107, %v825
  %827 = vmatprep.mubr.bf16.mxu0 0
  %828 = vmatmul.mubr.bf16.gmra.mxu0 %v385
  %v829 = vpop.f32.mrf.mxu0
  %v830 = vadd.f32 %v103, %v829
  %v831 = vpop.f32.mrf.mxu0
  %v832 = vadd.f32 %v107, %v831
  %v833 = vpop.f32.mrf.mxu0
  %v834 = vadd.f32 %v103, %v833
  %v835 = vpop.f32.mrf.mxu0
  %v836 = vadd.f32 %v107, %v835
  %837 = vmatprep.mubr.bf16.mxu0 0
  %838 = vmatmul.mubr.bf16.gmra.mxu0 %v388
  %v839 = vpop.f32.mrf.mxu0
  %v840 = vadd.f32 %v103, %v839
  %v841 = vpop.f32.mrf.mxu0
  %v842 = vadd.f32 %v107, %v841
  %v843 = vpop.f32.mrf.mxu0
  %v844 = vadd.f32 %v103, %v843
  %v845 = vpop.f32.mrf.mxu0
  %v846 = vadd.f32 %v107, %v845
  %847 = vmatprep.mubr.bf16.mxu0 0
  %848 = vmatmul.mubr.bf16.gmra.mxu0 %v391
  %v849 = vpop.f32.mrf.mxu0
  %v850 = vadd.f32 %v103, %v849
  %v851 = vpop.f32.mrf.mxu0
  %v852 = vadd.f32 %v107, %v851
  %v853 = vpop.f32.mrf.mxu0
  %v854 = vadd.f32 %v103, %v853
  %v855 = vpop.f32.mrf.mxu0
  %v856 = vadd.f32 %v107, %v855
  %857 = vmatprep.mubr.bf16.mxu0 0
  %858 = vmatmul.mubr.bf16.gmra.mxu0 %v394
  %v859 = vpop.f32.mrf.mxu0
  %v860 = vadd.f32 %v103, %v859
  %v861 = vpop.f32.mrf.mxu0
  %v862 = vadd.f32 %v107, %v861
  %v863 = vpop.f32.mrf.mxu0
  %v864 = vadd.f32 %v103, %v863
  %v865 = vpop.f32.mrf.mxu0
  %v866 = vadd.f32 %v107, %v865
  %867 = vmatprep.mubr.bf16.mxu0 0
  %868 = vmatmul.mubr.bf16.gmra.mxu0 %v397
  %v869 = vpop.f32.mrf.mxu0
  %v870 = vadd.f32 %v103, %v869
  %v871 = vpop.f32.mrf.mxu0
  %v872 = vadd.f32 %v107, %v871
  %v873 = vpop.f32.mrf.mxu0
  %v874 = vadd.f32 %v103, %v873
  %v875 = vpop.f32.mrf.mxu0
  %v876 = vadd.f32 %v107, %v875
  %877 = vmatprep.mubr.bf16.mxu0 0
  %878 = vmatmul.mubr.bf16.gmra.mxu0 %v400
  %v879 = vpop.f32.mrf.mxu0
  %v880 = vadd.f32 %v103, %v879
  %v881 = vpop.f32.mrf.mxu0
  %v882 = vadd.f32 %v107, %v881
  %v883 = vpop.f32.mrf.mxu0
  %v884 = vadd.f32 %v103, %v883
  %v885 = vpop.f32.mrf.mxu0
  %v886 = vadd.f32 %v107, %v885
  %887 = vmatprep.mubr.bf16.mxu0 0
  %888 = vmatmul.mubr.bf16.gmra.mxu0 %v403
  %v889 = vpop.f32.mrf.mxu0
  %v890 = vadd.f32 %v103, %v889
  %v891 = vpop.f32.mrf.mxu0
  %v892 = vadd.f32 %v107, %v891
  %v893 = vpop.f32.mrf.mxu0
  %v894 = vadd.f32 %v103, %v893
  %v895 = vpop.f32.mrf.mxu0
  %v896 = vadd.f32 %v107, %v895
  %897 = vmatprep.mubr.bf16.mxu0 0
  %898 = vmatmul.mubr.bf16.gmra.mxu0 %v406
  %v899 = vpop.f32.mrf.mxu0
  %v900 = vadd.f32 %v103, %v899
  %v901 = vpop.f32.mrf.mxu0
  %v902 = vadd.f32 %v107, %v901
  %v903 = vpop.f32.mrf.mxu0
  %v904 = vadd.f32 %v103, %v903
  %v905 = vpop.f32.mrf.mxu0
  %v906 = vadd.f32 %v107, %v905
  %907 = vmatprep.mubr.bf16.mxu0 0
  %908 = vmatmul.mubr.bf16.gmra.mxu0 %v409
  %v909 = vpop.f32.mrf.mxu0
  %v910 = vadd.f32 %v103, %v909
  %v911 = vpop.f32.mrf.mxu0
  %v912 = vadd.f32 %v107, %v911
  %v913 = vpop.f32.mrf.mxu0
  %v914 = vadd.f32 %v103, %v913
  %v915 = vpop.f32.mrf.mxu0
  %v916 = vadd.f32 %v107, %v915
  %917 = vmatprep.mubr.bf16.mxu0 0
  %918 = vmatmul.mubr.bf16.gmra.mxu0 %v412
  %v919 = vpop.f32.mrf.mxu0
  %v920 = vadd.f32 %v103, %v919
  %v921 = vpop.f32.mrf.mxu0
  %v922 = vadd.f32 %v107, %v921
  %v923 = vpop.f32.mrf.mxu0
  %v924 = vadd.f32 %v103, %v923
  %v925 = vpop.f32.mrf.mxu0
  %v926 = vadd.f32 %v107, %v925
  %927 = vmatprep.mubr.bf16.mxu0 0
  %928 = vmatmul.mubr.bf16.gmra.mxu0 %v415
  %v929 = vpop.f32.mrf.mxu0
  %v930 = vadd.f32 %v103, %v929
  %v931 = vpop.f32.mrf.mxu0
  %v932 = vadd.f32 %v107, %v931
  %v933 = vpop.f32.mrf.mxu0
  %v934 = vadd.f32 %v103, %v933
  %v935 = vpop.f32.mrf.mxu0
  %v936 = vadd.f32 %v107, %v935
  %937 = vmatprep.mubr.bf16.mxu0 0
  %938 = vmatmul.mubr.bf16.gmra.mxu0 %v418
  %v939 = vpop.f32.mrf.mxu0
  %v940 = vadd.f32 %v103, %v939
  %v941 = vpop.f32.mrf.mxu0
  %v942 = vadd.f32 %v107, %v941
  %v943 = vpop.f32.mrf.mxu0
  %v944 = vadd.f32 %v103, %v943
  %v945 = vpop.f32.mrf.mxu0
  %v946 = vadd.f32 %v107, %v945
  %947 = vmatprep.mubr.bf16.mxu0 0
  %948 = vmatmul.mubr.bf16.gmra.mxu0 %v421
  %v949 = vpop.f32.mrf.mxu0
  %v950 = vadd.f32 %v103, %v949
  %v951 = vpop.f32.mrf.mxu0
  %v952 = vadd.f32 %v107, %v951
  %v953 = vpop.f32.mrf.mxu0
  %v954 = vadd.f32 %v103, %v953
  %v955 = vpop.f32.mrf.mxu0
  %v956 = vadd.f32 %v107, %v955
  %957 = vmatprep.mubr.bf16.mxu0 0
  %958 = vmatmul.mubr.bf16.gmra.mxu0 %v424
  %v959 = vpop.f32.mrf.mxu0
  %v960 = vadd.f32 %v103, %v959
  %v961 = vpop.f32.mrf.mxu0
  %v962 = vadd.f32 %v107, %v961
  %v963 = vpop.f32.mrf.mxu0
  %v964 = vadd.f32 %v103, %v963
  %v965 = vpop.f32.mrf.mxu0
  %v966 = vadd.f32 %v107, %v965
  %967 = vmatprep.mubr.bf16.mxu0 0
  %968 = vmatmul.mubr.bf16.gmra.mxu0 %v427
  %v969 = vpop.f32.mrf.mxu0
  %v970 = vadd.f32 %v103, %v969
  %v971 = vpop.f32.mrf.mxu0
  %v972 = vadd.f32 %v107, %v971
  %v973 = vpop.f32.mrf.mxu0
  %v974 = vadd.f32 %v103, %v973
  %v975 = vpop.f32.mrf.mxu0
  %v976 = vadd.f32 %v107, %v975
  %977 = vmatprep.mubr.bf16.mxu0 0
  %978 = vmatmul.mubr.bf16.gmra.mxu0 %v430
  %v979 = vpop.f32.mrf.mxu0
  %v980 = vadd.f32 %v103, %v979
  %v981 = vpop.f32.mrf.mxu0
  %v982 = vadd.f32 %v107, %v981
  %v983 = vpop.f32.mrf.mxu0
  %v984 = vadd.f32 %v103, %v983
  %v985 = vpop.f32.mrf.mxu0
  %v986 = vadd.f32 %v107, %v985
  %987 = vmatprep.mubr.bf16.mxu0 0
  %988 = vmatmul.mubr.bf16.gmra.mxu0 %v433
  %v989 = vpop.f32.mrf.mxu0
  %v990 = vadd.f32 %v103, %v989
  %v991 = vpop.f32.mrf.mxu0
  %v992 = vadd.f32 %v107, %v991
  %v993 = vpop.f32.mrf.mxu0
  %v994 = vadd.f32 %v103, %v993
  %v995 = vpop.f32.mrf.mxu0
  %v996 = vadd.f32 %v107, %v995
  %997 = vmatprep.mubr.bf16.mxu0 0
  %998 = vmatmul.mubr.bf16.gmra.mxu0 %v436
  %v999 = vpop.f32.mrf.mxu0
  %v1000 = vadd.f32 %v103, %v999
  %v1001 = vpop.f32.mrf.mxu0
  %v1002 = vadd.f32 %v107, %v1001
  %v1003 = vpop.f32.mrf.mxu0
  %v1004 = vadd.f32 %v103, %v1003
  %v1005 = vpop.f32.mrf.mxu0
  %v1006 = vadd.f32 %v107, %v1005
  %1007 = vmatprep.mubr.bf16.mxu0 0
  %1008 = vmatmul.mubr.bf16.gmra.mxu0 %v439
  %v1009 = vpop.f32.mrf.mxu0
  %v1010 = vadd.f32 %v103, %v1009
  %v1011 = vpop.f32.mrf.mxu0
  %v1012 = vadd.f32 %v107, %v1011
  %v1013 = vpop.f32.mrf.mxu0
  %v1014 = vpop.f32.mrf.mxu0
  %1015 = vdwg.mxu0
  %v1016 = vtanh.pop %v489
  %v1017 = vtanh.pop %v491
  %v1018 = vtanh.pop %v770
  %v1019 = vtanh.pop %v772
  %v1020 = vtanh.pop %v493
  %v1021 = vtanh.pop %v495
  %v1022 = vtanh.pop %v774
  %v1023 = vtanh.pop %v776
  %v1024 = vtanh.pop %v499
  %v1025 = vtanh.pop %v501
  %v1026 = vtanh.pop %v780
  %v1027 = vtanh.pop %v782
  %v1028 = vtanh.pop %v503
  %v1029 = vtanh.pop %v505
  %v1030 = vtanh.pop %v784
  %v1031 = vtanh.pop %v786
  %v1032 = vtanh.pop %v509
  %v1033 = vtanh.pop %v511
  %v1034 = vtanh.pop %v790
  %v1035 = vtanh.pop %v792
  %v1036 = vtanh.pop %v513
  %v1037 = vtanh.pop %v515
  %v1038 = vtanh.pop %v794
  %v1039 = vtanh.pop %v796
  %v1040 = vtanh.pop %v519
  %v1041 = vtanh.pop %v521
  %v1042 = vtanh.pop %v800
  %v1043 = vtanh.pop %v802
  %v1044 = vtanh.pop %v523
  %v1045 = vtanh.pop %v525
  %v1046 = vtanh.pop %v804
  %v1047 = vtanh.pop %v806
  %v1048 = vtanh.pop %v529
  %v1049 = vtanh.pop %v531
  %v1050 = vtanh.pop %v810
  %v1051 = vtanh.pop %v812
  %v1052 = vtanh.pop %v533
  %v1053 = vtanh.pop %v535
  %v1054 = vtanh.pop %v814
  %v1055 = vtanh.pop %v816
  %v1056 = vtanh.pop %v539
  %v1057 = vtanh.pop %v541
  %v1058 = vtanh.pop %v820
  %v1059 = vtanh.pop %v822
  %v1060 = vtanh.pop %v543
  %v1061 = vtanh.pop %v545
  %v1062 = vtanh.pop %v824
  %v1063 = vtanh.pop %v826
  %v1064 = vtanh.pop %v549
  %v1065 = vtanh.pop %v551
  %v1066 = vtanh.pop %v830
  %v1067 = vtanh.pop %v832
  %v1068 = vtanh.pop %v553
  %v1069 = vtanh.pop %v555
  %v1070 = vtanh.pop %v834
  %v1071 = vtanh.pop %v836
  %v1072 = vtanh.pop %v559
  %v1073 = vtanh.pop %v561
  %v1074 = vtanh.pop %v840
  %v1075 = vtanh.pop %v842
  %v1076 = vtanh.pop %v563
  %v1077 = vtanh.pop %v565
  %v1078 = vtanh.pop %v844
  %v1079 = vtanh.pop %v846
  %v1080 = vtanh.pop %v569
  %v1081 = vtanh.pop %v571
  %v1082 = vtanh.pop %v850
  %v1083 = vtanh.pop %v852
  %v1084 = vtanh.pop %v573
  %v1085 = vtanh.pop %v575
  %v1086 = vtanh.pop %v854
  %v1087 = vtanh.pop %v856
  %v1088 = vtanh.pop %v579
  %v1089 = vtanh.pop %v581
  %v1090 = vtanh.pop %v860
  %v1091 = vtanh.pop %v862
  %v1092 = vtanh.pop %v583
  %v1093 = vtanh.pop %v585
  %v1094 = vtanh.pop %v864
  %v1095 = vtanh.pop %v866
  %v1096 = vtanh.pop %v589
  %v1097 = vtanh.pop %v591
  %v1098 = vtanh.pop %v870
  %v1099 = vtanh.pop %v872
  %v1100 = vtanh.pop %v593
  %v1101 = vtanh.pop %v595
  %v1102 = vtanh.pop %v874
  %v1103 = vtanh.pop %v876
  %v1104 = vtanh.pop %v599
  %v1105 = vtanh.pop %v601
  %v1106 = vtanh.pop %v880
  %v1107 = vtanh.pop %v882
  %v1108 = vtanh.pop %v603
  %v1109 = vtanh.pop %v605
  %v1110 = vtanh.pop %v884
  %v1111 = vtanh.pop %v886
  %v1112 = vtanh.pop %v609
  %v1113 = vtanh.pop %v611
  %v1114 = vtanh.pop %v890
  %v1115 = vtanh.pop %v892
  %v1116 = vtanh.pop %v613
  %v1117 = vtanh.pop %v615
  %v1118 = vtanh.pop %v894
  %v1119 = vtanh.pop %v896
  %v1120 = vtanh.pop %v619
  %v1121 = vtanh.pop %v621
  %v1122 = vtanh.pop %v900
  %v1123 = vtanh.pop %v902
  %v1124 = vtanh.pop %v623
  %v1125 = vtanh.pop %v625
  %v1126 = vtanh.pop %v904
  %v1127 = vtanh.pop %v906
  %v1128 = vtanh.pop %v629
  %v1129 = vtanh.pop %v631
  %v1130 = vtanh.pop %v910
  %v1131 = vtanh.pop %v912
  %v1132 = vtanh.pop %v633
  %v1133 = vtanh.pop %v635
  %v1134 = vtanh.pop %v914
  %v1135 = vtanh.pop %v916
  %v1136 = vtanh.pop %v639
  %v1137 = vtanh.pop %v641
  %v1138 = vtanh.pop %v920
  %v1139 = vtanh.pop %v922
  %v1140 = vtanh.pop %v643
  %v1141 = vtanh.pop %v645
  %v1142 = vtanh.pop %v924
  %v1143 = vtanh.pop %v926
  %v1144 = vtanh.pop %v649
  %v1145 = vtanh.pop %v651
  %v1146 = vtanh.pop %v930
  %v1147 = vtanh.pop %v932
  %v1148 = vtanh.pop %v653
  %v1149 = vtanh.pop %v655
  %v1150 = vtanh.pop %v934
  %v1151 = vtanh.pop %v936
  %v1152 = vtanh.pop %v659
  %v1153 = vtanh.pop %v661
  %v1154 = vtanh.pop %v940
  %v1155 = vtanh.pop %v942
  %v1156 = vtanh.pop %v663
  %v1157 = vtanh.pop %v665
  %v1158 = vtanh.pop %v944
  %v1159 = vtanh.pop %v946
  %v1160 = vtanh.pop %v669
  %v1161 = vtanh.pop %v671
  %v1162 = vtanh.pop %v950
  %v1163 = vtanh.pop %v952
  %v1164 = vtanh.pop %v673
  %v1165 = vtanh.pop %v675
  %v1166 = vtanh.pop %v954
  %v1167 = vtanh.pop %v956
  %v1168 = vtanh.pop %v679
  %v1169 = vtanh.pop %v681
  %v1170 = vtanh.pop %v960
  %v1171 = vtanh.pop %v962
  %v1172 = vtanh.pop %v683
  %v1173 = vtanh.pop %v685
  %v1174 = vtanh.pop %v964
  %v1175 = vtanh.pop %v966
  %v1176 = vtanh.pop %v689
  %v1177 = vtanh.pop %v691
  %v1178 = vtanh.pop %v970
  %v1179 = vtanh.pop %v972
  %v1180 = vtanh.pop %v693
  %v1181 = vtanh.pop %v695
  %v1182 = vtanh.pop %v974
  %v1183 = vtanh.pop %v976
  %v1184 = vtanh.pop %v699
  %v1185 = vtanh.pop %v701
  %v1186 = vtanh.pop %v980
  %v1187 = vtanh.pop %v982
  %v1188 = vtanh.pop %v703
  %v1189 = vtanh.pop %v705
  %v1190 = vtanh.pop %v984
  %v1191 = vtanh.pop %v986
  %v1192 = vtanh.pop %v709
  %v1193 = vtanh.pop %v711
  %v1194 = vtanh.pop %v990
  %v1195 = vtanh.pop %v992
  %v1196 = vtanh.pop %v713
  %v1197 = vtanh.pop %v715
  %v1198 = vtanh.pop %v994
  %v1199 = vtanh.pop %v996
  %v1200 = vtanh.pop %v719
  %v1201 = vtanh.pop %v721
  %v1202 = vtanh.pop %v1000
  %v1203 = vtanh.pop %v1002
  %v1204 = vtanh.pop %v723
  %v1205 = vtanh.pop %v725
  %v1206 = vtanh.pop %v1004
  %v1207 = vtanh.pop %v1006
  %v1208 = vtanh.pop %v729
  %v1209 = vtanh.pop %v731
  %v1210 = vtanh.pop %v1010
  %v1211 = vtanh.pop %v1012
  %v1212 = vmax.f32 %v1016, %v1017
  %v1213 = vmax.f32 %v1020, %v1021
  %v1214 = vmax.f32 %v1024, %v1025
  %v1215 = vmax.f32 %v1028, %v1029
  %v1216 = vmax.f32 %v1032, %v1033
  %v1217 = vmax.f32 %v1036, %v1037
  %v1218 = vmax.f32 %v1040, %v1041
  %v1219 = vmax.f32 %v1044, %v1045
  %v1220 = vmax.f32 %v1048, %v1049
  %v1221 = vmax.f32 %v1052, %v1053
  %v1222 = vmax.f32 %v1056, %v1057
  %v1223 = vmax.f32 %v1060, %v1061
  %v1224 = vmax.f32 %v1064, %v1065
  %v1225 = vmax.f32 %v1068, %v1069
  %v1226 = vmax.f32 %v1072, %v1073
  %v1227 = vmax.f32 %v1076, %v1077
  %v1228 = vmax.f32 %v1080, %v1081
  %v1229 = vmax.f32 %v1084, %v1085
  %v1230 = vmax.f32 %v1088, %v1089
  %v1231 = vmax.f32 %v1092, %v1093
  %v1232 = vmax.f32 %v1096, %v1097
  %v1233 = vmax.f32 %v1100, %v1101
  %v1234 = vmax.f32 %v1104, %v1105
  %v1235 = vmax.f32 %v1108, %v1109
  %v1236 = vmax.f32 %v1112, %v1113
  %v1237 = vmax.f32 %v1116, %v1117
  %v1238 = vmax.f32 %v1120, %v1121
  %v1239 = vmax.f32 %v1124, %v1125
  %v1240 = vmax.f32 %v1128, %v1129
  %v1241 = vmax.f32 %v1132, %v1133
  %v1242 = vmax.f32 %v1136, %v1137
  %v1243 = vmax.f32 %v1140, %v1141
  %v1244 = vmax.f32 %v1144, %v1145
  %v1245 = vmax.f32 %v1148, %v1149
  %v1246 = vmax.f32 %v1152, %v1153
  %v1247 = vmax.f32 %v1156, %v1157
  %v1248 = vmax.f32 %v1160, %v1161
  %v1249 = vmax.f32 %v1164, %v1165
  %v1250 = vmax.f32 %v1168, %v1169
  %v1251 = vmax.f32 %v1172, %v1173
  %v1252 = vmax.f32 %v1176, %v1177
  %v1253 = vmax.f32 %v1180, %v1181
  %v1254 = vmax.f32 %v1184, %v1185
  %v1255 = vmax.f32 %v1188, %v1189
  %v1256 = vmax.f32 %v1192, %v1193
  %v1257 = vmax.f32 %v1196, %v1197
  %v1258 = vmax.f32 %v1200, %v1201
  %v1259 = vmax.f32 %v1204, %v1205
  %v1260 = vmax.f32 %v1208, %v1209
  %v1261 = vmax.f32 %v1018, %v1019
  %v1262 = vmax.f32 %v1022, %v1023
  %v1263 = vmax.f32 %v1026, %v1027
  %v1264 = vmax.f32 %v1030, %v1031
  %v1265 = vmax.f32 %v1034, %v1035
  %v1266 = vmax.f32 %v1038, %v1039
  %v1267 = vmax.f32 %v1042, %v1043
  %v1268 = vmax.f32 %v1046, %v1047
  %v1269 = vmax.f32 %v1050, %v1051
  %v1270 = vmax.f32 %v1054, %v1055
  %v1271 = vmax.f32 %v1058, %v1059
  %v1272 = vmax.f32 %v1062, %v1063
  %v1273 = vmax.f32 %v1066, %v1067
  %v1274 = vmax.f32 %v1070, %v1071
  %v1275 = vmax.f32 %v1074, %v1075
  %v1276 = vmax.f32 %v1078, %v1079
  %v1277 = vmax.f32 %v1082, %v1083
  %v1278 = vmax.f32 %v1086, %v1087
  %v1279 = vmax.f32 %v1090, %v1091
  %v1280 = vmax.f32 %v1094, %v1095
  %v1281 = vmax.f32 %v1098, %v1099
  %v1282 = vmax.f32 %v1102, %v1103
  %v1283 = vmax.f32 %v1106, %v1107
  %v1284 = vmax.f32 %v1110, %v1111
  %v1285 = vmax.f32 %v1114, %v1115
  %v1286 = vmax.f32 %v1118, %v1119
  %v1287 = vmax.f32 %v1122, %v1123
  %v1288 = vmax.f32 %v1126, %v1127
  %v1289 = vmax.f32 %v1130, %v1131
  %v1290 = vmax.f32 %v1134, %v1135
  %v1291 = vmax.f32 %v1138, %v1139
  %v1292 = vmax.f32 %v1142, %v1143
  %v1293 = vmax.f32 %v1146, %v1147
  %v1294 = vmax.f32 %v1150, %v1151
  %v1295 = vmax.f32 %v1154, %v1155
  %v1296 = vmax.f32 %v1158, %v1159
  %v1297 = vmax.f32 %v1162, %v1163
  %v1298 = vmax.f32 %v1166, %v1167
  %v1299 = vmax.f32 %v1170, %v1171
  %v1300 = vmax.f32 %v1174, %v1175
  %v1301 = vmax.f32 %v1178, %v1179
  %v1302 = vmax.f32 %v1182, %v1183
  %v1303 = vmax.f32 %v1186, %v1187
  %v1304 = vmax.f32 %v1190, %v1191
  %v1305 = vmax.f32 %v1194, %v1195
  %v1306 = vmax.f32 %v1198, %v1199
  %v1307 = vmax.f32 %v1202, %v1203
  %v1308 = vmax.f32 %v1206, %v1207
  %v1309 = vmax.f32 %v1210, %v1211
  %v1310 = vmax.f32 %v1212, %v1261
  %v1311 = vmax.f32 %v1213, %v1262
  %v1312 = vmax.f32 %v1214, %v1263
  %v1313 = vmax.f32 %v1215, %v1264
  %v1314 = vmax.f32 %v1216, %v1265
  %v1315 = vmax.f32 %v1217, %v1266
  %v1316 = vmax.f32 %v1218, %v1267
  %v1317 = vmax.f32 %v1219, %v1268
  %v1318 = vmax.f32 %v1220, %v1269
  %v1319 = vmax.f32 %v1221, %v1270
  %v1320 = vmax.f32 %v1222, %v1271
  %v1321 = vmax.f32 %v1223, %v1272
  %v1322 = vmax.f32 %v1224, %v1273
  %v1323 = vmax.f32 %v1225, %v1274
  %v1324 = vmax.f32 %v1226, %v1275
  %v1325 = vmax.f32 %v1227, %v1276
  %v1326 = vmax.f32 %v1228, %v1277
  %v1327 = vmax.f32 %v1229, %v1278
  %v1328 = vmax.f32 %v1230, %v1279
  %v1329 = vmax.f32 %v1231, %v1280
  %v1330 = vmax.f32 %v1232, %v1281
  %v1331 = vmax.f32 %v1233, %v1282
  %v1332 = vmax.f32 %v1234, %v1283
  %v1333 = vmax.f32 %v1235, %v1284
  %v1334 = vmax.f32 %v1236, %v1285
  %v1335 = vmax.f32 %v1237, %v1286
  %v1336 = vmax.f32 %v1238, %v1287
  %v1337 = vmax.f32 %v1239, %v1288
  %v1338 = vmax.f32 %v1240, %v1289
  %v1339 = vmax.f32 %v1241, %v1290
  %v1340 = vmax.f32 %v1242, %v1291
  %v1341 = vmax.f32 %v1243, %v1292
  %v1342 = vmax.f32 %v1244, %v1293
  %v1343 = vmax.f32 %v1245, %v1294
  %v1344 = vmax.f32 %v1246, %v1295
  %v1345 = vmax.f32 %v1247, %v1296
  %v1346 = vmax.f32 %v1248, %v1297
  %v1347 = vmax.f32 %v1249, %v1298
  %v1348 = vmax.f32 %v1250, %v1299
  %v1349 = vmax.f32 %v1251, %v1300
  %v1350 = vmax.f32 %v1252, %v1301
  %v1351 = vmax.f32 %v1253, %v1302
  %v1352 = vmax.f32 %v1254, %v1303
  %v1353 = vmax.f32 %v1255, %v1304
  %v1354 = vmax.f32 %v1256, %v1305
  %v1355 = vmax.f32 %v1257, %v1306
  %v1356 = vmax.f32 %v1258, %v1307
  %v1357 = vmax.f32 %v1259, %v1308
  %v1358 = vmax.f32 %v1260, %v1309
  %v1359 = vpack.c.bf16 %v1311, %v1310
  %v1360 = vpack.c.bf16 %v1313, %v1312
  %v1361 = vpack.c.bf16 %v1315, %v1314
  %v1362 = vpack.c.bf16 %v1317, %v1316
  %v1363 = vpack.c.bf16 %v1319, %v1318
  %v1364 = vpack.c.bf16 %v1321, %v1320
  %v1365 = vpack.c.bf16 %v1323, %v1322
  %v1366 = vpack.c.bf16 %v1325, %v1324
  %v1367 = vpack.c.bf16 %v1327, %v1326
  %v1368 = vpack.c.bf16 %v1329, %v1328
  %v1369 = vpack.c.bf16 %v1331, %v1330
  %v1370 = vpack.c.bf16 %v1333, %v1332
  %v1371 = vpack.c.bf16 %v1335, %v1334
  %v1372 = vpack.c.bf16 %v1337, %v1336
  %v1373 = vpack.c.bf16 %v1339, %v1338
  %v1374 = vpack.c.bf16 %v1341, %v1340
  %v1375 = vpack.c.bf16 %v1343, %v1342
  %v1376 = vpack.c.bf16 %v1345, %v1344
  %v1377 = vpack.c.bf16 %v1347, %v1346
  %v1378 = vpack.c.bf16 %v1349, %v1348
  %v1379 = vpack.c.bf16 %v1351, %v1350
  %v1380 = vpack.c.bf16 %v1353, %v1352
  %v1381 = vpack.c.bf16 %v1355, %v1354
  %v1382 = vpack.c.bf16 %v1357, %v1356
  %v1383 = vpack.c.bf16 %v1358, %v1358
  %v1409 = vunpack.c.l.b16 %v1359
  %v1410 = vunpack.c.h.b16 %v1359
  %v1411 = vunpack.c.l.b16 %v1360
  %v1412 = vunpack.c.h.b16 %v1360
  %v1413 = vunpack.c.l.b16 %v1361
  %v1414 = vunpack.c.h.b16 %v1361
  %v1415 = vunpack.c.l.b16 %v1362
  %v1416 = vunpack.c.h.b16 %v1362
  %v1417 = vunpack.c.l.b16 %v1363
  %v1418 = vunpack.c.h.b16 %v1363
  %v1419 = vunpack.c.l.b16 %v1364
  %v1420 = vunpack.c.h.b16 %v1364
  %v1421 = vunpack.c.l.b16 %v1365
  %v1422 = vunpack.c.h.b16 %v1365
  %v1423 = vunpack.c.l.b16 %v1366
  %v1424 = vunpack.c.h.b16 %v1366
  %v1425 = vunpack.c.l.b16 %v1367
  %v1426 = vunpack.c.h.b16 %v1367
  %v1427 = vunpack.c.l.b16 %v1368
  %v1428 = vunpack.c.h.b16 %v1368
  %v1429 = vunpack.c.l.b16 %v1369
  %v1430 = vunpack.c.h.b16 %v1369
  %v1431 = vunpack.c.l.b16 %v1370
  %v1432 = vunpack.c.h.b16 %v1370
  %v1433 = vunpack.c.l.b16 %v1371
  %v1434 = vunpack.c.h.b16 %v1371
  %v1435 = vunpack.c.l.b16 %v1372
  %v1436 = vunpack.c.h.b16 %v1372
  %v1437 = vunpack.c.l.b16 %v1373
  %v1438 = vunpack.c.h.b16 %v1373
  %v1439 = vunpack.c.l.b16 %v1374
  %v1440 = vunpack.c.h.b16 %v1374
  %v1441 = vunpack.c.l.b16 %v1375
  %v1442 = vunpack.c.h.b16 %v1375
  %v1443 = vunpack.c.l.b16 %v1376
  %v1444 = vunpack.c.h.b16 %v1376
  %v1445 = vunpack.c.l.b16 %v1377
  %v1446 = vunpack.c.h.b16 %v1377
  %v1447 = vunpack.c.l.b16 %v1378
  %v1448 = vunpack.c.h.b16 %v1378
  %v1449 = vunpack.c.l.b16 %v1379
  %v1450 = vunpack.c.h.b16 %v1379
  %v1451 = vunpack.c.l.b16 %v1380
  %v1452 = vunpack.c.h.b16 %v1380
  %v1453 = vunpack.c.l.b16 %v1381
  %v1454 = vunpack.c.h.b16 %v1381
  %v1455 = vunpack.c.l.b16 %v1382
  %v1456 = vunpack.c.h.b16 %v1382
  %v1457 = vunpack.c.l.b16 %v1383
  %v1458 = vpack.c.b16 %v1409, %v1409
  %v1459 = vpack.c.b16 %v1410, %v1410
  %v1460 = vpack.c.b16 %v1411, %v1411
  %v1461 = vpack.c.b16 %v1412, %v1412
  %v1462 = vpack.c.b16 %v1413, %v1413
  %v1463 = vpack.c.b16 %v1414, %v1414
  %v1464 = vpack.c.b16 %v1415, %v1415
  %v1465 = vpack.c.b16 %v1416, %v1416
  %v1466 = vpack.c.b16 %v1417, %v1417
  %v1467 = vpack.c.b16 %v1418, %v1418
  %v1468 = vpack.c.b16 %v1419, %v1419
  %v1469 = vpack.c.b16 %v1420, %v1420
  %v1470 = vpack.c.b16 %v1421, %v1421
  %v1471 = vpack.c.b16 %v1422, %v1422
  %v1472 = vpack.c.b16 %v1423, %v1423
  %v1473 = vpack.c.b16 %v1424, %v1424
  %v1474 = vpack.c.b16 %v1425, %v1425
  %v1475 = vpack.c.b16 %v1426, %v1426
  %v1476 = vpack.c.b16 %v1427, %v1427
  %v1477 = vpack.c.b16 %v1428, %v1428
  %v1478 = vpack.c.b16 %v1429, %v1429
  %v1479 = vpack.c.b16 %v1430, %v1430
  %v1480 = vpack.c.b16 %v1431, %v1431
  %v1481 = vpack.c.b16 %v1432, %v1432
  %v1482 = vpack.c.b16 %v1433, %v1433
  %v1483 = vpack.c.b16 %v1434, %v1434
  %v1484 = vpack.c.b16 %v1435, %v1435
  %v1485 = vpack.c.b16 %v1436, %v1436
  %v1486 = vpack.c.b16 %v1437, %v1437
  %v1487 = vpack.c.b16 %v1438, %v1438
  %v1488 = vpack.c.b16 %v1439, %v1439
  %v1489 = vpack.c.b16 %v1440, %v1440
  %v1490 = vpack.c.b16 %v1441, %v1441
  %v1491 = vpack.c.b16 %v1442, %v1442
  %v1492 = vpack.c.b16 %v1443, %v1443
  %v1493 = vpack.c.b16 %v1444, %v1444
  %v1494 = vpack.c.b16 %v1445, %v1445
  %v1495 = vpack.c.b16 %v1446, %v1446
  %v1496 = vpack.c.b16 %v1447, %v1447
  %v1497 = vpack.c.b16 %v1448, %v1448
  %v1498 = vpack.c.b16 %v1449, %v1449
  %v1499 = vpack.c.b16 %v1450, %v1450
  %v1500 = vpack.c.b16 %v1451, %v1451
  %v1501 = vpack.c.b16 %v1452, %v1452
  %v1502 = vpack.c.b16 %v1453, %v1453
  %v1503 = vpack.c.b16 %v1454, %v1454
  %v1504 = vpack.c.b16 %v1455, %v1455
  %v1505 = vpack.c.b16 %v1456, %v1456
  %v1506 = vpack.c.b16 %v1457, %v1457
  %1556 = vst [vmem:[%s3] sm:$0xf] %v1458
  %1557 = vst [vmem:[%s3 + $0x4] sm:$0xf] %v1459
  %1558 = vst [vmem:[%s3 + $0x8] sm:$0xf] %v1460
  %1559 = vst [vmem:[%s3 + $0xc] sm:$0xf] %v1461
  %1560 = vst [vmem:[%s3 + $0x10] sm:$0xf] %v1462
  %1561 = vst [vmem:[%s3 + $0x14] sm:$0xf] %v1463
  %1562 = vst [vmem:[%s3 + $0x18] sm:$0xf] %v1464
  %1563 = vst [vmem:[%s3 + $0x1c] sm:$0xf] %v1465
  %1564 = vst [vmem:[%s3 + $0x20] sm:$0xf] %v1466
  %1565 = vst [vmem:[%s3 + $0x24] sm:$0xf] %v1467
  %1566 = vst [vmem:[%s3 + $0x28] sm:$0xf] %v1468
  %1567 = vst [vmem:[%s3 + $0x2c] sm:$0xf] %v1469
  %1568 = vst [vmem:[%s3 + $0x30] sm:$0xf] %v1470
  %1569 = vst [vmem:[%s3 + $0x34] sm:$0xf] %v1471
  %1570 = vst [vmem:[%s3 + $0x38] sm:$0xf] %v1472
  %1571 = vst [vmem:[%s3 + $0x3c] sm:$0xf] %v1473
  %1572 = vst [vmem:[%s3 + $0x40] sm:$0xf] %v1474
  %1573 = vst [vmem:[%s3 + $0x44] sm:$0xf] %v1475
  %1574 = vst [vmem:[%s3 + $0x48] sm:$0xf] %v1476
  %1575 = vst [vmem:[%s3 + $0x4c] sm:$0xf] %v1477
  %1576 = vst [vmem:[%s3 + $0x50] sm:$0xf] %v1478
  %1577 = vst [vmem:[%s3 + $0x54] sm:$0xf] %v1479
  %1578 = vst [vmem:[%s3 + $0x58] sm:$0xf] %v1480
  %1579 = vst [vmem:[%s3 + $0x5c] sm:$0xf] %v1481
  %1580 = vst [vmem:[%s3 + $0x60] sm:$0xf] %v1482
  %1581 = vst [vmem:[%s3 + $0x64] sm:$0xf] %v1483
  %1582 = vst [vmem:[%s3 + $0x68] sm:$0xf] %v1484
  %1583 = vst [vmem:[%s3 + $0x6c] sm:$0xf] %v1485
  %1584 = vst [vmem:[%s3 + $0x70] sm:$0xf] %v1486
  %1585 = vst [vmem:[%s3 + $0x74] sm:$0xf] %v1487
  %1586 = vst [vmem:[%s3 + $0x78] sm:$0xf] %v1488
  %1587 = vst [vmem:[%s3 + $0x7c] sm:$0xf] %v1489
  %1588 = vst [vmem:[%s3 + $0x80] sm:$0xf] %v1490
  %1589 = vst [vmem:[%s3 + $0x84] sm:$0xf] %v1491
  %1590 = vst [vmem:[%s3 + $0x88] sm:$0xf] %v1492
  %1591 = vst [vmem:[%s3 + $0x8c] sm:$0xf] %v1493
  %1592 = vst [vmem:[%s3 + $0x90] sm:$0xf] %v1494
  %1593 = vst [vmem:[%s3 + $0x94] sm:$0xf] %v1495
  %1594 = vst [vmem:[%s3 + $0x98] sm:$0xf] %v1496
  %1595 = vst [vmem:[%s3 + $0x9c] sm:$0xf] %v1497
  %1596 = vst [vmem:[%s3 + $0xa0] sm:$0xf] %v1498
  %1597 = vst [vmem:[%s3 + $0xa4] sm:$0xf] %v1499
  %1598 = vst [vmem:[%s3 + $0xa8] sm:$0xf] %v1500
  %1599 = vst [vmem:[%s3 + $0xac] sm:$0xf] %v1501
  %1600 = vst [vmem:[%s3 + $0xb0] sm:$0xf] %v1502
  %1601 = vst [vmem:[%s3 + $0xb4] sm:$0xf] %v1503
  %1602 = vst [vmem:[%s3 + $0xb8] sm:$0xf] %v1504
  %1603 = vst [vmem:[%s3 + $0xbc] sm:$0xf] %v1505
  %1604 = vst [vmem:[%s3 + $0xc0] sm:$0xf] %v1506
  // Predicated region
  $region14: #{lenet_ensemble_forward.3} parent=0 // pred_check
    _
  $region15: #{lenet_ensemble_forward.3} parent=0 // pred_check_branch
    %1606 = sbr.rel (0) target = $region17
  $region16: #{lenet_ensemble_forward.3} parent=0 // pred_region
    _
  $region17: #{lenet_ensemble_forward.3} parent=0 // pred_fallthru
    _
  // Predicated region
  $region18: #{lenet_ensemble_forward.3} parent=0 // pred_check
    _
  $region19: #{lenet_ensemble_forward.3} parent=0 // pred_check_branch
    %1608 = sbr.rel (0) target = $region21
  $region20: #{lenet_ensemble_forward.3} parent=0 // pred_region
    _
  $region21: #{lenet_ensemble_forward.3} parent=0 // pred_fallthru
    _

// kernel: lenet_ensemble_forward.4
$region0: #{lenet_ensemble_forward.4}
  #allocation0 [shape = 'u32[]', space=smem, size = 0x4, offset = 0x4, fixed_abs, tag = 'smem constant byte address 0x4 - core index']
  #allocation1 [shape = 'u32[144,128]{1,0:T(1,128)}', space=vmem, size = 0x12000, scoped, tag = 'internal scratch']
  %s0 = inlined_call_operand.vmem [shape: bf16[3,56,600], index: 0, kind: input, shape index: {}]
  %s1 = inlined_call_operand.vmem [shape: bf16[3,600,512], index: 1, kind: input, shape index: {}]
  %s2 = inlined_call_operand.vmem [shape: f32[3,1,512], index: 2, kind: input, shape index: {}]
  %s3 = inlined_call_operand.vmem [shape: bf16[3,56,128], index: 3, kind: output, shape index: {}]
  %s4 = sld [smem:[#allocation0]]
  $region45: #{lenet_ensemble_forward.4} parent=0
    _
  %s6 = ssub.s32 1, %s4
  %s7 = scalar_select 0, %s6, %s4
  loop: start=0, step=1, limit=5
  $region2: #{lenet_ensemble_forward.4} parent=0 // loop_pre_header
    _
  $region3: #{lenet_ensemble_forward.4} parent=0 // loop_header
    %s9 = sphi 0, %s13
    %p10 = scmp.ge.s32.totalorder %s9, 5
    %s16 = sphi 0, %s28
    %s17 = sphi 0, %s24
    %s18 = sphi 0, %s16
    %s19 = sphi 0, %s17
    %s20 = sphi 0, %s18
    %s21 = sphi 0, %s19
    %s33 = sphi 0, %s35
    %s36 = sphi 0, %s33
    %s37 = sphi 0, %s36
    %s53 = sphi 0, %s37
    %s59 = sphi 0, %s61
    %s62 = sphi 0, %s59
    %s63 = sphi 0, %s62
    %s79 = sphi 0, %s63
    %s85 = sphi 0, %s87
    %s88 = sphi 0, %s85
    %s89 = sphi 0, %s88
    %s105 = sphi 0, %s89
    %s113 = sphi 0, %s115
    %s116 = sphi 0, %s113
    %s117 = sphi 0, %s116
    %s133 = sphi 0, %s117
  $region4: #{lenet_ensemble_forward.4} parent=0 // loop_header_branch
    %12 = sbr.rel (%p10) target = $region8
  $region5: #{lenet_ensemble_forward.4} parent=0 // loop_body
    %s14 = ssub.s32 %s9, 1
    %s15 = ssub.s32 %s9, 2
    %s22 = sadd.s32 1, %s17
    %p23 = scmp.ge.s32.totalorder %s22, 1
    %s24 = scalar_select %p23, 0, %s22
    %s25 = sadd.s32 1, %s16
    %s26 = scalar_select %p23, %s25, %s16
    %p27 = scmp.ge.s32.totalorder %s26, 3
    %s28 = scalar_select %p27, 0, %s26
    %s29 = ssub.s32 %s16, %s28
    %s30 = ssub.s32 %s17, %s24
    %s31 = sor.u32 %s29, %s30
    %p32 = scmp.eq.s32.totalorder %s31, 0
    %s34 = sadd.s32 %s33, 1
    %s35 = scalar_select %p32, %s33, %s34
    %p38 = pneg %p32
    %p39 = scmp.eq.s32.totalorder %s9, 2
    %p40 = por %p38, %p39
    %p41 = scmp.ne.s32.totalorder %s33, %s36
    %p42 = scmp.eq.s32.totalorder %s9, 0
    %p43 = por %p41, %p42
    %p44 = scmp.ne.s32.totalorder %s33, %s36
    %p45 = scmp.eq.s32.totalorder %s14, 2
    %p46 = por %p44, %p45
    %p47 = scmp.ne.s32.totalorder %s36, %s37
    %p48 = scmp.eq.s32.totalorder %s14, 0
    %p49 = por %p47, %p48
    %p50 = scmp.ne.s32.totalorder %s36, %s37
    %p51 = scmp.eq.s32.totalorder %s15, 2
    %p52 = por %p50, %p51
    %p54 = scmp.ne.s32.totalorder %s37, %s53
    %p55 = scmp.eq.s32.totalorder %s15, 0
    %p56 = por %p54, %p55
    %s57 = ssub.s32 %s16, %s28
    %p58 = scmp.eq.s32.totalorder %s57, 0
    %s60 = sadd.s32 %s59, 1
    %s61 = scalar_select %p58, %s59, %s60
    %p64 = pneg %p58
    %p65 = scmp.eq.s32.totalorder %s9, 2
    %p66 = por %p64, %p65
    %p67 = scmp.ne.s32.totalorder %s59, %s62
    %p68 = scmp.eq.s32.totalorder %s9, 0
    %p69 = por %p67, %p68
    %p70 = scmp.ne.s32.totalorder %s59, %s62
    %p71 = scmp.eq.s32.totalorder %s14, 2
    %p72 = por %p70, %p71
    %p73 = scmp.ne.s32.totalorder %s62, %s63
    %p74 = scmp.eq.s32.totalorder %s14, 0
    %p75 = por %p73, %p74
    %p76 = scmp.ne.s32.totalorder %s62, %s63
    %p77 = scmp.eq.s32.totalorder %s15, 2
    %p78 = por %p76, %p77
    %p80 = scmp.ne.s32.totalorder %s63, %s79
    %p81 = scmp.eq.s32.totalorder %s15, 0
    %p82 = por %p80, %p81
    %s83 = ssub.s32 %s16, %s28
    %p84 = scmp.eq.s32.totalorder %s83, 0
    %s86 = sadd.s32 %s85, 1
    %s87 = scalar_select %p84, %s85, %s86
    %p90 = pneg %p84
    %p91 = scmp.eq.s32.totalorder %s9, 2
    %p92 = por %p90, %p91
    %p93 = scmp.ne.s32.totalorder %s85, %s88
    %p94 = scmp.eq.s32.totalorder %s9, 0
    %p95 = por %p93, %p94
    %p96 = scmp.ne.s32.totalorder %s85, %s88
    %p97 = scmp.eq.s32.totalorder %s14, 2
    %p98 = por %p96, %p97
    %p99 = scmp.ne.s32.totalorder %s88, %s89
    %p100 = scmp.eq.s32.totalorder %s14, 0
    %p101 = por %p99, %p100
    %p102 = scmp.ne.s32.totalorder %s88, %s89
    %p103 = scmp.eq.s32.totalorder %s15, 2
    %p104 = por %p102, %p103
    %p106 = scmp.ne.s32.totalorder %s89, %s105
    %p107 = scmp.eq.s32.totalorder %s15, 0
    %p108 = por %p106, %p107
    %s109 = ssub.s32 %s16, %s28
    %s110 = ssub.s32 %s17, %s24
    %s111 = sor.u32 %s109, %s110
    %p112 = scmp.eq.s32.totalorder %s111, 0
    %s114 = sadd.s32 %s113, 1
    %s115 = scalar_select %p112, %s113, %s114
    %p118 = pneg %p112
    %p119 = scmp.eq.s32.totalorder %s9, 2
    %p120 = por %p118, %p119
    %p121 = scmp.ne.s32.totalorder %s113, %s116
    %p122 = scmp.eq.s32.totalorder %s9, 0
    %p123 = por %p121, %p122
    %p124 = scmp.ne.s32.totalorder %s113, %s116
    %p125 = scmp.eq.s32.totalorder %s14, 2
    %p126 = por %p124, %p125
    %p127 = scmp.ne.s32.totalorder %s116, %s117
    %p128 = scmp.eq.s32.totalorder %s14, 0
    %p129 = por %p127, %p128
    %p130 = scmp.ne.s32.totalorder %s116, %s117
    %p131 = scmp.eq.s32.totalorder %s15, 2
    %p132 = por %p130, %p131
    %p134 = scmp.ne.s32.totalorder %s117, %s133
    %p135 = scmp.eq.s32.totalorder %s15, 0
    %p136 = por %p134, %p135
    %p137 = scmp.le.s32.totalorder 1, %s9
    %p138 = scmp.lt.s32.totalorder %s9, 4
    %p139 = pnand %p137, %p138
    %p140 = pneg %p139
    // Predicated region
    $region9: #{lenet_ensemble_forward.4} parent=5 // pred_check
      _
    $region10: #{lenet_ensemble_forward.4} parent=5 // pred_check_branch
      %142 = sbr.rel (%p139) target = $region12
    $region11: #{lenet_ensemble_forward.4} parent=5 // pred_region
      %s143 = ssub.s32 %s9, 1
    $region12: #{lenet_ensemble_forward.4} parent=5 // pred_fallthru
      _
    %p144 = scmp.lt.s32.totalorder %s9, 3
    // Predicated region
    $region13: #{lenet_ensemble_forward.4} parent=5 // pred_check
      %p145 = pneg %p144
    $region14: #{lenet_ensemble_forward.4} parent=5 // pred_check_branch
      %147 = sbr.rel (%p145) target = $region16
    $region15: #{lenet_ensemble_forward.4} parent=5 // pred_region
      // Predicated region
      $region17: #{lenet_ensemble_forward.4} parent=15 // pred_check
        %p148 = pneg %p43
      $region18: #{lenet_ensemble_forward.4} parent=15 // pred_check_branch
        %150 = sbr.rel (%p148) target = $region20
      $region19: #{lenet_ensemble_forward.4} parent=15 // pred_region
        %s151 = smul.u32 7, %s17
        %p152 = scmp.lt.s32.totalorder %s16, 2
        %s153 = scalar_select %p152, %s16, 2
        %p154 = scmp.lt.s32.totalorder %s151, 6
        %s155 = scalar_select %p154, %s151, 6
        %s156 = smul.addr %s155, 5
        %s157 = smul.addr %s153, 35
        %s158 = sadd.s32 %s156, %s157
        %s159 = smul.addr %s158, 4
        %s160 = scalar_lea.vmem %s0, %s159
        %s161 = smul.u32 7, %s17
      $region20: #{lenet_ensemble_forward.4} parent=15 // pred_fallthru
        _
      // Predicated region
      $region21: #{lenet_ensemble_forward.4} parent=15 // pred_check
        %p162 = pneg %p69
      $region22: #{lenet_ensemble_forward.4} parent=15 // pred_check_branch
        %164 = sbr.rel (%p162) target = $region24
      $region23: #{lenet_ensemble_forward.4} parent=15 // pred_region
        %p165 = scmp.lt.s32.totalorder %s16, 2
        %s166 = scalar_select %p165, %s16, 2
        %s167 = smul.addr %s166, 300
        %s168 = smul.addr %s167, 4
        %s169 = scalar_lea.vmem %s1, %s168
      $region24: #{lenet_ensemble_forward.4} parent=15 // pred_fallthru
        _
      // Predicated region
      $region25: #{lenet_ensemble_forward.4} parent=15 // pred_check
        %p170 = pneg %p95
      $region26: #{lenet_ensemble_forward.4} parent=15 // pred_check_branch
        %172 = sbr.rel (%p170) target = $region28
      $region27: #{lenet_ensemble_forward.4} parent=15 // pred_region
        %p173 = scmp.lt.s32.totalorder %s16, 2
        %s174 = scalar_select %p173, %s16, 2
        %s175 = smul.addr %s174, 4
        %s176 = scalar_lea.vmem %s2, %s175
      $region28: #{lenet_ensemble_forward.4} parent=15 // pred_fallthru
        _
    $region16: #{lenet_ensemble_forward.4} parent=5 // pred_fallthru
      _
    %p177 = scmp.le.s32.totalorder 1, %s9
    %p178 = scmp.lt.s32.totalorder %s9, 4
    %p179 = pnand %p177, %p178
    %p180 = pneg %p179
    // Predicated region
    $region29: #{lenet_ensemble_forward.4} parent=5 // pred_check
      _
    $region30: #{lenet_ensemble_forward.4} parent=5 // pred_check_branch
      %182 = sbr.rel (%p179) target = $region32
    $region31: #{lenet_ensemble_forward.4} parent=5 // pred_region
      %s183 = ssub.s32 %s9, 1
      %s184 = smul.u32 7, %s19
      %p185 = scmp.lt.s32.totalorder %s18, 2
      %s186 = scalar_select %p185, %s18, 2
      %p187 = scmp.lt.s32.totalorder %s184, 6
      %s188 = scalar_select %p187, %s184, 6
      %s189 = smul.addr %s188, 5
      %s190 = smul.addr %s186, 35
      %s191 = sadd.s32 %s189, %s190
      %s192 = smul.addr %s191, 4
      %s193 = scalar_lea.vmem %s0, %s192
      %p194 = pneg %p49
      %p195 = pneg %p46
      %p196 = scmp.lt.s32.totalorder %s18, 2
      %s197 = scalar_select %p196, %s18, 2
      %s198 = smul.addr %s197, 300
      %s199 = smul.addr %s198, 4
      %s200 = scalar_lea.vmem %s1, %s199
      %p201 = pneg %p75
      %p202 = pneg %p72
      %p203 = scmp.lt.s32.totalorder %s18, 2
      %s204 = scalar_select %p203, %s18, 2
      %s205 = smul.addr %s204, 4
      %s206 = scalar_lea.vmem %s2, %s205
      %p207 = pneg %p101
      %p208 = pneg %p98
      %p209 = pneg %p129
      %p210 = pneg %p126
      %s211 = smul.u32 7, %s19
      %p212 = scmp.lt.s32.totalorder %s18, 2
      %s213 = scalar_select %p212, %s18, 2
      %p214 = scmp.lt.s32.totalorder %s211, 6
      %s215 = scalar_select %p214, %s211, 6
      %s216 = smul.addr %s213, 7
      %s217 = sadd.s32 %s215, %s216
      %s218 = smul.addr %s217, 4
      %s219 = scalar_lea.vmem %s3, %s218
      %s220 = smul.u32 7, %s19
      %p221 = scmp.lt.s32.totalorder %s18, 2
      %s222 = scalar_select %p221, %s18, 2
      %p223 = scmp.lt.s32.totalorder %s220, 6
      %s224 = scalar_select %p223, %s220, 6
      %s225 = smul.addr %s224, 5
      %s226 = smul.addr %s222, 35
      %s227 = sadd.s32 %s225, %s226
      %s228 = smul.addr %s227, 4
      %s229 = scalar_lea.vmem %s0, %s228
      %s230 = smul.u32 7, %s19
      %p231 = scmp.lt.s32.totalorder %s18, 2
      %s232 = scalar_select %p231, %s18, 2
      %s233 = smul.addr %s232, 300
      %s234 = smul.addr %s233, 4
      %s235 = scalar_lea.vmem %s1, %s234
      %p236 = scmp.lt.s32.totalorder %s18, 2
      %s237 = scalar_select %p236, %s18, 2
      %s238 = smul.addr %s237, 4
      %s239 = scalar_lea.vmem %s2, %s238
      %s240 = smul.u32 7, %s19
      %p241 = scmp.lt.s32.totalorder %s18, 2
      %s242 = scalar_select %p241, %s18, 2
      %p243 = scmp.lt.s32.totalorder %s240, 6
      %s244 = scalar_select %p243, %s240, 6
      %s245 = smul.addr %s242, 7
      %s246 = sadd.s32 %s244, %s245
      %s247 = smul.addr %s246, 4
      %s248 = scalar_lea.vmem %s3, %s247
      %s249 = smul.u32 7, %s19
      %v251 = vld [vmem:[%s229] sm:$0xff]
      %v252 = vld [vmem:[%s229 + $0x8] sm:$0xff]
      %v253 = vld [vmem:[%s229 + $0x10] sm:$0xf]
      %v254 = vld [vmem:[%s229 + $0x14] sm:$0xff]
      %v255 = vld [vmem:[%s229 + $0x1c] sm:$0xff]
      %v256 = vld [vmem:[%s229 + $0x24] sm:$0xf]
      %v257 = vld [vmem:[%s229 + $0x28] sm:$0xff]
      %v258 = vld [vmem:[%s229 + $0x30] sm:$0xff]
      %v259 = vld [vmem:[%s229 + $0x38] sm:$0xf]
      %v260 = vld [vmem:[%s229 + $0x3c] sm:$0xff]
      %v261 = vld [vmem:[%s229 + $0x44] sm:$0xff]
      %v262 = vld [vmem:[%s229 + $0x4c] sm:$0xf]
      %v263 = vld [vmem:[%s229 + $0x50] sm:$0xff]
      %v264 = vld [vmem:[%s229 + $0x58] sm:$0xff]
      %v265 = vld [vmem:[%s229 + $0x60] sm:$0xf]
      %v266 = vld [vmem:[%s229 + $0x64] sm:$0xff]
      %v267 = vld [vmem:[%s229 + $0x6c] sm:$0xff]
      %v268 = vld [vmem:[%s229 + $0x74] sm:$0xf]
      %v269 = vld [vmem:[%s229 + $0x78] sm:$0xff]
      %v270 = vld [vmem:[%s229 + $0x80] sm:$0xff]
      %v271 = vld [vmem:[%s229 + $0x88] sm:$0xf]
      %v272 = vld [vmem:[%s235] sm:$0xff]
      %v273 = vld [vmem:[%s235 + $0x8] sm:$0xff]
      %v274 = vld [vmem:[%s235 + $0x10] sm:$0xff]
      %v275 = vld [vmem:[%s235 + $0x18] sm:$0xff]
      %v276 = vld [vmem:[%s235 + $0x20] sm:$0xff]
      %v277 = vld [vmem:[%s235 + $0x28] sm:$0xff]
      %v278 = vld [vmem:[%s235 + $0x30] sm:$0xff]
      %v279 = vld [vmem:[%s235 + $0x38] sm:$0xff]
      %v280 = vld [vmem:[%s235 + $0x40] sm:$0xff]
      %v281 = vld [vmem:[%s235 + $0x48] sm:$0xff]
      %v282 = vld [vmem:[%s235 + $0x50] sm:$0xff]
      %v283 = vld [vmem:[%s235 + $0x58] sm:$0xff]
      %v284 = vld [vmem:[%s235 + $0x60] sm:$0xff]
      %v285 = vld [vmem:[%s235 + $0x68] sm:$0xff]
      %v286 = vld [vmem:[%s235 + $0x70] sm:$0xff]
      %v287 = vld [vmem:[%s235 + $0x78] sm:$0xff]
      %v288 = vld [vmem:[%s235 + $0x80] sm:$0xff]
      %v289 = vld [vmem:[%s235 + $0x88] sm:$0xff]
      %v290 = vld [vmem:[%s235 + $0x90] sm:$0xff]
      %v291 = vld [vmem:[%s235 + $0x98] sm:$0xff]
      %v292 = vld [vmem:[%s235 + $0xa0] sm:$0xff]
      %v293 = vld [vmem:[%s235 + $0xa8] sm:$0xff]
      %v294 = vld [vmem:[%s235 + $0xb0] sm:$0xff]
      %v295 = vld [vmem:[%s235 + $0xb8] sm:$0xff]
      %v296 = vld [vmem:[%s235 + $0xc0] sm:$0xff]
      %v297 = vld [vmem:[%s235 + $0xc8] sm:$0xff]
      %v298 = vld [vmem:[%s235 + $0xd0] sm:$0xff]
      %v299 = vld [vmem:[%s235 + $0xd8] sm:$0xff]
      %v300 = vld [vmem:[%s235 + $0xe0] sm:$0xff]
      %v301 = vld [vmem:[%s235 + $0xe8] sm:$0xff]
      %v302 = vld [vmem:[%s235 + $0xf0] sm:$0xff]
      %v303 = vld [vmem:[%s235 + $0xf8] sm:$0xff]
      %v304 = vld [vmem:[%s235 + $0x100] sm:$0xff]
      %v305 = vld [vmem:[%s235 + $0x108] sm:$0xff]
      %v306 = vld [vmem:[%s235 + $0x110] sm:$0xff]
      %v307 = vld [vmem:[%s235 + $0x118] sm:$0xff]
      %v308 = vld [vmem:[%s235 + $0x120] sm:$0xff]
      %v309 = vld [vmem:[%s235 + $0x128] sm:$0xff]
      %v310 = vld [vmem:[%s235 + $0x130] sm:$0xff]
      %v311 = vld [vmem:[%s235 + $0x138] sm:$0xff]
      %v312 = vld [vmem:[%s235 + $0x140] sm:$0xff]
      %v313 = vld [vmem:[%s235 + $0x148] sm:$0xff]
      %v314 = vld [vmem:[%s235 + $0x150] sm:$0xff]
      %v315 = vld [vmem:[%s235 + $0x158] sm:$0xff]
      %v316 = vld [vmem:[%s235 + $0x160] sm:$0xff]
      %v317 = vld [vmem:[%s235 + $0x168] sm:$0xff]
      %v318 = vld [vmem:[%s235 + $0x170] sm:$0xff]
      %v319 = vld [vmem:[%s235 + $0x178] sm:$0xff]
      %v320 = vld [vmem:[%s235 + $0x180] sm:$0xff]
      %v321 = vld [vmem:[%s235 + $0x188] sm:$0xff]
      %v322 = vld [vmem:[%s235 + $0x190] sm:$0xff]
      %v323 = vld [vmem:[%s235 + $0x198] sm:$0xff]
      %v324 = vld [vmem:[%s235 + $0x1a0] sm:$0xff]
      %v325 = vld [vmem:[%s235 + $0x1a8] sm:$0xff]
      %v326 = vld [vmem:[%s235 + $0x1b0] sm:$0xff]
      %v327 = vld [vmem:[%s235 + $0x1b8] sm:$0xff]
      %v328 = vld [vmem:[%s235 + $0x1c0] sm:$0xff]
      %v329 = vld [vmem:[%s235 + $0x1c8] sm:$0xff]
      %v330 = vld [vmem:[%s235 + $0x1d0] sm:$0xff]
      %v331 = vld [vmem:[%s235 + $0x1d8] sm:$0xff]
      %v332 = vld [vmem:[%s235 + $0x1e0] sm:$0xff]
      %v333 = vld [vmem:[%s235 + $0x1e8] sm:$0xff]
      %v334 = vld [vmem:[%s235 + $0x1f0] sm:$0xff]
      %v335 = vld [vmem:[%s235 + $0x1f8] sm:$0xff]
      %v336 = vld [vmem:[%s235 + $0x200] sm:$0xff]
      %v337 = vld [vmem:[%s235 + $0x208] sm:$0xff]
      %v338 = vld [vmem:[%s235 + $0x210] sm:$0xff]
      %v339 = vld [vmem:[%s235 + $0x218] sm:$0xff]
      %v340 = vld [vmem:[%s235 + $0x220] sm:$0xff]
      %v341 = vld [vmem:[%s235 + $0x228] sm:$0xff]
      %v342 = vld [vmem:[%s235 + $0x230] sm:$0xff]
      %v343 = vld [vmem:[%s235 + $0x238] sm:$0xff]
      %v344 = vld [vmem:[%s235 + $0x240] sm:$0xff]
      %v345 = vld [vmem:[%s235 + $0x248] sm:$0xff]
      %v346 = vld [vmem:[%s235 + $0x250] sm:$0xff]
      %v347 = vld [vmem:[%s235 + $0x258] sm:$0xff]
      %v348 = vld [vmem:[%s235 + $0x260] sm:$0xff]
      %v349 = vld [vmem:[%s235 + $0x268] sm:$0xff]
      %v350 = vld [vmem:[%s235 + $0x270] sm:$0xff]
      %v351 = vld [vmem:[%s235 + $0x278] sm:$0xff]
      %v352 = vld [vmem:[%s235 + $0x280] sm:$0xff]
      %v353 = vld [vmem:[%s235 + $0x288] sm:$0xff]
      %v354 = vld [vmem:[%s235 + $0x290] sm:$0xff]
      %v355 = vld [vmem:[%s235 + $0x298] sm:$0xff]
      %v356 = vld [vmem:[%s235 + $0x2a0] sm:$0xff]
      %v357 = vld [vmem:[%s235 + $0x2a8] sm:$0xff]
      %v358 = vld [vmem:[%s235 + $0x2b0] sm:$0xff]
      %v359 = vld [vmem:[%s235 + $0x2b8] sm:$0xff]
      %v360 = vld [vmem:[%s235 + $0x2c0] sm:$0xff]
      %v361 = vld [vmem:[%s235 + $0x2c8] sm:$0xff]
      %v362 = vld [vmem:[%s235 + $0x2d0] sm:$0xff]
      %v363 = vld [vmem:[%s235 + $0x2d8] sm:$0xff]
      %v364 = vld [vmem:[%s235 + $0x2e0] sm:$0xff]
      %v365 = vld [vmem:[%s235 + $0x2e8] sm:$0xff]
      %v366 = vld [vmem:[%s235 + $0x2f0] sm:$0xff]
      %v367 = vld [vmem:[%s235 + $0x2f8] sm:$0xff]
      %v368 = vld [vmem:[%s235 + $0x300] sm:$0xff]
      %v369 = vld [vmem:[%s235 + $0x308] sm:$0xff]
      %v370 = vld [vmem:[%s235 + $0x310] sm:$0xff]
      %v371 = vld [vmem:[%s235 + $0x318] sm:$0xff]
      %v372 = vld [vmem:[%s235 + $0x320] sm:$0xff]
      %v373 = vld [vmem:[%s235 + $0x328] sm:$0xff]
      %v374 = vld [vmem:[%s235 + $0x330] sm:$0xff]
      %v375 = vld [vmem:[%s235 + $0x338] sm:$0xff]
      %v376 = vld [vmem:[%s235 + $0x340] sm:$0xff]
      %v377 = vld [vmem:[%s235 + $0x348] sm:$0xff]
      %v378 = vld [vmem:[%s235 + $0x350] sm:$0xff]
      %v379 = vld [vmem:[%s235 + $0x358] sm:$0xff]
      %v380 = vld [vmem:[%s235 + $0x360] sm:$0xff]
      %v381 = vld [vmem:[%s235 + $0x368] sm:$0xff]
      %v382 = vld [vmem:[%s235 + $0x370] sm:$0xff]
      %v383 = vld [vmem:[%s235 + $0x378] sm:$0xff]
      %v384 = vld [vmem:[%s235 + $0x380] sm:$0xff]
      %v385 = vld [vmem:[%s235 + $0x388] sm:$0xff]
      %v386 = vld [vmem:[%s235 + $0x390] sm:$0xff]
      %v387 = vld [vmem:[%s235 + $0x398] sm:$0xff]
      %v388 = vld [vmem:[%s235 + $0x3a0] sm:$0xff]
      %v389 = vld [vmem:[%s235 + $0x3a8] sm:$0xff]
      %v390 = vld [vmem:[%s235 + $0x3b0] sm:$0xff]
      %v391 = vld [vmem:[%s235 + $0x3b8] sm:$0xff]
      %v392 = vld [vmem:[%s235 + $0x3c0] sm:$0xff]
      %v393 = vld [vmem:[%s235 + $0x3c8] sm:$0xff]
      %v394 = vld [vmem:[%s235 + $0x3d0] sm:$0xff]
      %v395 = vld [vmem:[%s235 + $0x3d8] sm:$0xff]
      %v396 = vld [vmem:[%s235 + $0x3e0] sm:$0xff]
      %v397 = vld [vmem:[%s235 + $0x3e8] sm:$0xff]
      %v398 = vld [vmem:[%s235 + $0x3f0] sm:$0xff]
      %v399 = vld [vmem:[%s235 + $0x3f8] sm:$0xff]
      %v400 = vld [vmem:[%s235 + $0x400] sm:$0xff]
      %v401 = vld [vmem:[%s235 + $0x408] sm:$0xff]
      %v402 = vld [vmem:[%s235 + $0x410] sm:$0xff]
      %v403 = vld [vmem:[%s235 + $0x418] sm:$0xff]
      %v404 = vld [vmem:[%s235 + $0x420] sm:$0xff]
      %v405 = vld [vmem:[%s235 + $0x428] sm:$0xff]
      %v406 = vld [vmem:[%s235 + $0x430] sm:$0xff]
      %v407 = vld [vmem:[%s235 + $0x438] sm:$0xff]
      %v408 = vld [vmem:[%s235 + $0x440] sm:$0xff]
      %v409 = vld [vmem:[%s235 + $0x448] sm:$0xff]
      %v410 = vld [vmem:[%s235 + $0x450] sm:$0xff]
      %v411 = vld [vmem:[%s235 + $0x458] sm:$0xff]
      %v412 = vld [vmem:[%s235 + $0x460] sm:$0xff]
      %v413 = vld [vmem:[%s235 + $0x468] sm:$0xff]
      %v414 = vld [vmem:[%s235 + $0x470] sm:$0xff]
      %v415 = vld [vmem:[%s235 + $0x478] sm:$0xff]
      %v416 = vld [vmem:[%s235 + $0x480] sm:$0xff]
      %v417 = vld [vmem:[%s235 + $0x488] sm:$0xff]
      %v418 = vld [vmem:[%s235 + $0x490] sm:$0xff]
      %v419 = vld [vmem:[%s235 + $0x498] sm:$0xff]
      %v420 = vld [vmem:[%s235 + $0x4a0] sm:$0xff]
      %v421 = vld [vmem:[%s235 + $0x4a8] sm:$0xff]
      %v422 = vld [vmem:[%s239] sm:$0xf]
      %v424 = vlaneseq
      %v425 = vshrl.u32 %v424, 7
      %v426 = vsub.s32 0, %v425
      %v427 = vrot.slane %v422, %v426
      %v428 = vlaneseq
      %v429 = vshrl.u32 %v428, 7
      %v430 = vsub.s32 1, %v429
      %v431 = vrot.slane %v422, %v430
      %v432 = vlaneseq
      %v433 = vshrl.u32 %v432, 7
      %v434 = vsub.s32 2, %v433
      %v435 = vrot.slane %v422, %v434
      %v436 = vlaneseq
      %v437 = vshrl.u32 %v436, 7
      %v438 = vsub.s32 3, %v437
      %v439 = vrot.slane %v422, %v438
      %v465 = vunpack.c.l.b16 %v251
      %v466 = vunpack.c.h.b16 %v251
      %v467 = vunpack.c.l.b16 %v252
      %v468 = vunpack.c.h.b16 %v252
      %v469 = vunpack.c.l.b16 %v253
      %v470 = vunpack.c.l.b16 %v254
      %v471 = vunpack.c.h.b16 %v254
      %v472 = vunpack.c.l.b16 %v255
      %v473 = vunpack.c.h.b16 %v255
      %v474 = vunpack.c.l.b16 %v256
      %v475 = vunpack.c.l.b16 %v257
      %v476 = vunpack.c.h.b16 %v257
      %v477 = vunpack.c.l.b16 %v258
      %v478 = vunpack.c.h.b16 %v258
      %v479 = vunpack.c.l.b16 %v259
      %v480 = vunpack.c.l.b16 %v260
      %v481 = vunpack.c.h.b16 %v260
      %v482 = vunpack.c.l.b16 %v261
      %v483 = vunpack.c.h.b16 %v261
      %v484 = vunpack.c.l.b16 %v262
      %v485 = vunpack.c.l.b16 %v263
      %v486 = vunpack.c.h.b16 %v263
      %v487 = vunpack.c.l.b16 %v264
      %v488 = vunpack.c.h.b16 %v264
      %v489 = vunpack.c.l.b16 %v265
      %v490 = vunpack.c.l.b16 %v266
      %v491 = vunpack.c.h.b16 %v266
      %v492 = vunpack.c.l.b16 %v267
      %v493 = vunpack.c.h.b16 %v267
      %v494 = vunpack.c.l.b16 %v268
      %v495 = vunpack.c.l.b16 %v269
      %v496 = vunpack.c.h.b16 %v269
      %v497 = vunpack.c.l.b16 %v270
      %v498 = vunpack.c.h.b16 %v270
      %v499 = vunpack.c.l.b16 %v271
      %v500 = vpack.c.b16 %v470, %v465
      %v501 = vpack.c.b16 %v471, %v466
      %v502 = vpack.c.b16 %v472, %v467
      %v503 = vpack.c.b16 %v473, %v468
      %v504 = vpack.c.b16 %v474, %v469
      %v505 = vpack.c.b16 %v480, %v475
      %v506 = vpack.c.b16 %v481, %v476
      %v507 = vpack.c.b16 %v482, %v477
      %v508 = vpack.c.b16 %v483, %v478
      %v509 = vpack.c.b16 %v484, %v479
      %v510 = vpack.c.b16 %v490, %v485
      %v511 = vpack.c.b16 %v491, %v486
      %v512 = vpack.c.b16 %v492, %v487
      %v513 = vpack.c.b16 %v493, %v488
      %v514 = vpack.c.b16 %v494, %v489
      %v515 = vpack.c.b16 %v495, %v495
      %v516 = vpack.c.b16 %v496, %v496
      %v517 = vpack.c.b16 %v497, %v497
      %v518 = vpack.c.b16 %v498, %v498
      %v519 = vpack.c.b16 %v499, %v499
      %v686 = vunpack.c.l.b16 %v272
      %v687 = vunpack.c.h.b16 %v272
      %v688 = vunpack.c.l.b16 %v273
      %v689 = vunpack.c.h.b16 %v273
      %v690 = vunpack.c.l.b16 %v274
      %v691 = vunpack.c.h.b16 %v274
      %v692 = vunpack.c.l.b16 %v275
      %v693 = vunpack.c.h.b16 %v275
      %v694 = vunpack.c.l.b16 %v276
      %v695 = vunpack.c.h.b16 %v276
      %v696 = vunpack.c.l.b16 %v277
      %v697 = vunpack.c.h.b16 %v277
      %v698 = vunpack.c.l.b16 %v278
      %v699 = vunpack.c.h.b16 %v278
      %v700 = vunpack.c.l.b16 %v279
      %v701 = vunpack.c.h.b16 %v279
      %v702 = vunpack.c.l.b16 %v280
      %v703 = vunpack.c.h.b16 %v280
      %v704 = vunpack.c.l.b16 %v281
      %v705 = vunpack.c.h.b16 %v281
      %v706 = vunpack.c.l.b16 %v282
      %v707 = vunpack.c.h.b16 %v282
      %v708 = vunpack.c.l.b16 %v283
      %v709 = vunpack.c.h.b16 %v283
      %v710 = vunpack.c.l.b16 %v284
      %v711 = vunpack.c.h.b16 %v284
      %v712 = vunpack.c.l.b16 %v285
      %v713 = vunpack.c.h.b16 %v285
      %v714 = vunpack.c.l.b16 %v286
      %v715 = vunpack.c.h.b16 %v286
      %v716 = vunpack.c.l.b16 %v287
      %v717 = vunpack.c.h.b16 %v287
      %v718 = vunpack.c.l.b16 %v288
      %v719 = vunpack.c.h.b16 %v288
      %v720 = vunpack.c.l.b16 %v289
      %v721 = vunpack.c.h.b16 %v289
      %v722 = vunpack.c.l.b16 %v290
      %v723 = vunpack.c.h.b16 %v290
      %v724 = vunpack.c.l.b16 %v291
      %v725 = vunpack.c.h.b16 %v291
      %v726 = vunpack.c.l.b16 %v292
      %v727 = vunpack.c.h.b16 %v292
      %v728 = vunpack.c.l.b16 %v293
      %v729 = vunpack.c.h.b16 %v293
      %v730 = vunpack.c.l.b16 %v294
      %v731 = vunpack.c.h.b16 %v294
      %v732 = vunpack.c.l.b16 %v295
      %v733 = vunpack.c.h.b16 %v295
      %v734 = vunpack.c.l.b16 %v296
      %v735 = vunpack.c.h.b16 %v296
      %v736 = vunpack.c.l.b16 %v297
      %v737 = vunpack.c.h.b16 %v297
      %v738 = vunpack.c.l.b16 %v298
      %v739 = vunpack.c.h.b16 %v298
      %v740 = vunpack.c.l.b16 %v299
      %v741 = vunpack.c.h.b16 %v299
      %v742 = vunpack.c.l.b16 %v300
      %v743 = vunpack.c.h.b16 %v300
      %v744 = vunpack.c.l.b16 %v301
      %v745 = vunpack.c.h.b16 %v301
      %v746 = vunpack.c.l.b16 %v302
      %v747 = vunpack.c.h.b16 %v302
      %v748 = vunpack.c.l.b16 %v303
      %v749 = vunpack.c.h.b16 %v303
      %v750 = vunpack.c.l.b16 %v304
      %v751 = vunpack.c.h.b16 %v304
      %v752 = vunpack.c.l.b16 %v305
      %v753 = vunpack.c.h.b16 %v305
      %v754 = vunpack.c.l.b16 %v306
      %v755 = vunpack.c.h.b16 %v306
      %v756 = vunpack.c.l.b16 %v307
      %v757 = vunpack.c.h.b16 %v307
      %v758 = vunpack.c.l.b16 %v308
      %v759 = vunpack.c.h.b16 %v308
      %v760 = vunpack.c.l.b16 %v309
      %v761 = vunpack.c.h.b16 %v309
      %v762 = vunpack.c.l.b16 %v310
      %v763 = vunpack.c.h.b16 %v310
      %v764 = vunpack.c.l.b16 %v311
      %v765 = vunpack.c.h.b16 %v311
      %v766 = vunpack.c.l.b16 %v312
      %v767 = vunpack.c.h.b16 %v312
      %v768 = vunpack.c.l.b16 %v313
      %v769 = vunpack.c.h.b16 %v313
      %v770 = vunpack.c.l.b16 %v314
      %v771 = vunpack.c.h.b16 %v314
      %v772 = vunpack.c.l.b16 %v315
      %v773 = vunpack.c.h.b16 %v315
      %v774 = vunpack.c.l.b16 %v316
      %v775 = vunpack.c.h.b16 %v316
      %v776 = vunpack.c.l.b16 %v317
      %v777 = vunpack.c.h.b16 %v317
      %v778 = vunpack.c.l.b16 %v318
      %v779 = vunpack.c.h.b16 %v318
      %v780 = vunpack.c.l.b16 %v319
      %v781 = vunpack.c.h.b16 %v319
      %v782 = vunpack.c.l.b16 %v320
      %v783 = vunpack.c.h.b16 %v320
      %v784 = vunpack.c.l.b16 %v321
      %v785 = vunpack.c.h.b16 %v321
      %v786 = vunpack.c.l.b16 %v322
      %v787 = vunpack.c.h.b16 %v322
      %v788 = vunpack.c.l.b16 %v323
      %v789 = vunpack.c.h.b16 %v323
      %v790 = vunpack.c.l.b16 %v324
      %v791 = vunpack.c.h.b16 %v324
      %v792 = vunpack.c.l.b16 %v325
      %v793 = vunpack.c.h.b16 %v325
      %v794 = vunpack.c.l.b16 %v326
      %v795 = vunpack.c.h.b16 %v326
      %v796 = vunpack.c.l.b16 %v327
      %v797 = vunpack.c.h.b16 %v327
      %v798 = vunpack.c.l.b16 %v328
      %v799 = vunpack.c.h.b16 %v328
      %v800 = vunpack.c.l.b16 %v329
      %v801 = vunpack.c.h.b16 %v329
      %v802 = vunpack.c.l.b16 %v330
      %v803 = vunpack.c.h.b16 %v330
      %v804 = vunpack.c.l.b16 %v331
      %v805 = vunpack.c.h.b16 %v331
      %v806 = vunpack.c.l.b16 %v332
      %v807 = vunpack.c.h.b16 %v332
      %v808 = vunpack.c.l.b16 %v333
      %v809 = vunpack.c.h.b16 %v333
      %v810 = vunpack.c.l.b16 %v334
      %v811 = vunpack.c.h.b16 %v334
      %v812 = vunpack.c.l.b16 %v335
      %v813 = vunpack.c.h.b16 %v335
      %v814 = vunpack.c.l.b16 %v336
      %v815 = vunpack.c.h.b16 %v336
      %v816 = vunpack.c.l.b16 %v337
      %v817 = vunpack.c.h.b16 %v337
      %v818 = vunpack.c.l.b16 %v338
      %v819 = vunpack.c.h.b16 %v338
      %v820 = vunpack.c.l.b16 %v339
      %v821 = vunpack.c.h.b16 %v339
      %v822 = vunpack.c.l.b16 %v340
      %v823 = vunpack.c.h.b16 %v340
      %v824 = vunpack.c.l.b16 %v341
      %v825 = vunpack.c.h.b16 %v341
      %v826 = vunpack.c.l.b16 %v342
      %v827 = vunpack.c.h.b16 %v342
      %v828 = vunpack.c.l.b16 %v343
      %v829 = vunpack.c.h.b16 %v343
      %v830 = vunpack.c.l.b16 %v344
      %v831 = vunpack.c.h.b16 %v344
      %v832 = vunpack.c.l.b16 %v345
      %v833 = vunpack.c.h.b16 %v345
      %v834 = vunpack.c.l.b16 %v346
      %v835 = vunpack.c.h.b16 %v346
      %v836 = vunpack.c.l.b16 %v347
      %v837 = vunpack.c.h.b16 %v347
      %v838 = vunpack.c.l.b16 %v348
      %v839 = vunpack.c.h.b16 %v348
      %v840 = vunpack.c.l.b16 %v349
      %v841 = vunpack.c.h.b16 %v349
      %v842 = vunpack.c.l.b16 %v350
      %v843 = vunpack.c.h.b16 %v350
      %v844 = vunpack.c.l.b16 %v351
      %v845 = vunpack.c.h.b16 %v351
      %v846 = vunpack.c.l.b16 %v352
      %v847 = vunpack.c.h.b16 %v352
      %v848 = vunpack.c.l.b16 %v353
      %v849 = vunpack.c.h.b16 %v353
      %v850 = vunpack.c.l.b16 %v354
      %v851 = vunpack.c.h.b16 %v354
      %v852 = vunpack.c.l.b16 %v355
      %v853 = vunpack.c.h.b16 %v355
      %v854 = vunpack.c.l.b16 %v356
      %v855 = vunpack.c.h.b16 %v356
      %v856 = vunpack.c.l.b16 %v357
      %v857 = vunpack.c.h.b16 %v357
      %v858 = vunpack.c.l.b16 %v358
      %v859 = vunpack.c.h.b16 %v358
      %v860 = vunpack.c.l.b16 %v359
      %v861 = vunpack.c.h.b16 %v359
      %v862 = vunpack.c.l.b16 %v360
      %v863 = vunpack.c.h.b16 %v360
      %v864 = vunpack.c.l.b16 %v361
      %v865 = vunpack.c.h.b16 %v361
      %v866 = vunpack.c.l.b16 %v362
      %v867 = vunpack.c.h.b16 %v362
      %v868 = vunpack.c.l.b16 %v363
      %v869 = vunpack.c.h.b16 %v363
      %v870 = vunpack.c.l.b16 %v364
      %v871 = vunpack.c.h.b16 %v364
      %v872 = vunpack.c.l.b16 %v365
      %v873 = vunpack.c.h.b16 %v365
      %v874 = vunpack.c.l.b16 %v366
      %v875 = vunpack.c.h.b16 %v366
      %v876 = vunpack.c.l.b16 %v367
      %v877 = vunpack.c.h.b16 %v367
      %v878 = vunpack.c.l.b16 %v368
      %v879 = vunpack.c.h.b16 %v368
      %v880 = vunpack.c.l.b16 %v369
      %v881 = vunpack.c.h.b16 %v369
      %v882 = vunpack.c.l.b16 %v370
      %v883 = vunpack.c.h.b16 %v370
      %v884 = vunpack.c.l.b16 %v371
      %v885 = vunpack.c.h.b16 %v371
      %v886 = vunpack.c.l.b16 %v372
      %v887 = vunpack.c.h.b16 %v372
      %v888 = vunpack.c.l.b16 %v373
      %v889 = vunpack.c.h.b16 %v373
      %v890 = vunpack.c.l.b16 %v374
      %v891 = vunpack.c.h.b16 %v374
      %v892 = vunpack.c.l.b16 %v375
      %v893 = vunpack.c.h.b16 %v375
      %v894 = vunpack.c.l.b16 %v376
      %v895 = vunpack.c.h.b16 %v376
      %v896 = vunpack.c.l.b16 %v377
      %v897 = vunpack.c.h.b16 %v377
      %v898 = vunpack.c.l.b16 %v378
      %v899 = vunpack.c.h.b16 %v378
      %v900 = vunpack.c.l.b16 %v379
      %v901 = vunpack.c.h.b16 %v379
      %v902 = vunpack.c.l.b16 %v380
      %v903 = vunpack.c.h.b16 %v380
      %v904 = vunpack.c.l.b16 %v381
      %v905 = vunpack.c.h.b16 %v381
      %v906 = vunpack.c.l.b16 %v382
      %v907 = vunpack.c.h.b16 %v382
      %v908 = vunpack.c.l.b16 %v383
      %v909 = vunpack.c.h.b16 %v383
      %v910 = vunpack.c.l.b16 %v384
      %v911 = vunpack.c.h.b16 %v384
      %v912 = vunpack.c.l.b16 %v385
      %v913 = vunpack.c.h.b16 %v385
      %v914 = vunpack.c.l.b16 %v386
      %v915 = vunpack.c.h.b16 %v386
      %v916 = vunpack.c.l.b16 %v387
      %v917 = vunpack.c.h.b16 %v387
      %v918 = vunpack.c.l.b16 %v388
      %v919 = vunpack.c.h.b16 %v388
      %v920 = vunpack.c.l.b16 %v389
      %v921 = vunpack.c.h.b16 %v389
      %v922 = vunpack.c.l.b16 %v390
      %v923 = vunpack.c.h.b16 %v390
      %v924 = vunpack.c.l.b16 %v391
      %v925 = vunpack.c.h.b16 %v391
      %v926 = vunpack.c.l.b16 %v392
      %v927 = vunpack.c.h.b16 %v392
      %v928 = vunpack.c.l.b16 %v393
      %v929 = vunpack.c.h.b16 %v393
      %v930 = vunpack.c.l.b16 %v394
      %v931 = vunpack.c.h.b16 %v394
      %v932 = vunpack.c.l.b16 %v395
      %v933 = vunpack.c.h.b16 %v395
      %v934 = vunpack.c.l.b16 %v396
      %v935 = vunpack.c.h.b16 %v396
      %v936 = vunpack.c.l.b16 %v397
      %v937 = vunpack.c.h.b16 %v397
      %v938 = vunpack.c.l.b16 %v398
      %v939 = vunpack.c.h.b16 %v398
      %v940 = vunpack.c.l.b16 %v399
      %v941 = vunpack.c.h.b16 %v399
      %v942 = vunpack.c.l.b16 %v400
      %v943 = vunpack.c.h.b16 %v400
      %v944 = vunpack.c.l.b16 %v401
      %v945 = vunpack.c.h.b16 %v401
      %v946 = vunpack.c.l.b16 %v402
      %v947 = vunpack.c.h.b16 %v402
      %v948 = vunpack.c.l.b16 %v403
      %v949 = vunpack.c.h.b16 %v403
      %v950 = vunpack.c.l.b16 %v404
      %v951 = vunpack.c.h.b16 %v404
      %v952 = vunpack.c.l.b16 %v405
      %v953 = vunpack.c.h.b16 %v405
      %v954 = vunpack.c.l.b16 %v406
      %v955 = vunpack.c.h.b16 %v406
      %v956 = vunpack.c.l.b16 %v407
      %v957 = vunpack.c.h.b16 %v407
      %v958 = vunpack.c.l.b16 %v408
      %v959 = vunpack.c.h.b16 %v408
      %v960 = vunpack.c.l.b16 %v409
      %v961 = vunpack.c.h.b16 %v409
      %v962 = vunpack.c.l.b16 %v410
      %v963 = vunpack.c.h.b16 %v410
      %v964 = vunpack.c.l.b16 %v411
      %v965 = vunpack.c.h.b16 %v411
      %v966 = vunpack.c.l.b16 %v412
      %v967 = vunpack.c.h.b16 %v412
      %v968 = vunpack.c.l.b16 %v413
      %v969 = vunpack.c.h.b16 %v413
      %v970 = vunpack.c.l.b16 %v414
      %v971 = vunpack.c.h.b16 %v414
      %v972 = vunpack.c.l.b16 %v415
      %v973 = vunpack.c.h.b16 %v415
      %v974 = vunpack.c.l.b16 %v416
      %v975 = vunpack.c.h.b16 %v416
      %v976 = vunpack.c.l.b16 %v417
      %v977 = vunpack.c.h.b16 %v417
      %v978 = vunpack.c.l.b16 %v418
      %v979 = vunpack.c.h.b16 %v418
      %v980 = vunpack.c.l.b16 %v419
      %v981 = vunpack.c.h.b16 %v419
      %v982 = vunpack.c.l.b16 %v420
      %v983 = vunpack.c.h.b16 %v420
      %v984 = vunpack.c.l.b16 %v421
      %v985 = vunpack.c.h.b16 %v421
      %v986 = vpack.c.b16 %v690, %v686
      %v987 = vpack.c.b16 %v691, %v687
      %v988 = vpack.c.b16 %v692, %v688
      %v989 = vpack.c.b16 %v693, %v689
      %v990 = vpack.c.b16 %v698, %v694
      %v991 = vpack.c.b16 %v699, %v695
      %v992 = vpack.c.b16 %v700, %v696
      %v993 = vpack.c.b16 %v701, %v697
      %v994 = vpack.c.b16 %v706, %v702
      %v995 = vpack.c.b16 %v707, %v703
      %v996 = vpack.c.b16 %v708, %v704
      %v997 = vpack.c.b16 %v709, %v705
      %v998 = vpack.c.b16 %v714, %v710
      %v999 = vpack.c.b16 %v715, %v711
      %v1000 = vpack.c.b16 %v716, %v712
      %v1001 = vpack.c.b16 %v717, %v713
      %v1002 = vpack.c.b16 %v722, %v718
      %v1003 = vpack.c.b16 %v723, %v719
      %v1004 = vpack.c.b16 %v724, %v720
      %v1005 = vpack.c.b16 %v725, %v721
      %v1006 = vpack.c.b16 %v730, %v726
      %v1007 = vpack.c.b16 %v731, %v727
      %v1008 = vpack.c.b16 %v732, %v728
      %v1009 = vpack.c.b16 %v733, %v729
      %v1010 = vpack.c.b16 %v738, %v734
      %v1011 = vpack.c.b16 %v739, %v735
      %v1012 = vpack.c.b16 %v740, %v736
      %v1013 = vpack.c.b16 %v741, %v737
      %v1014 = vpack.c.b16 %v746, %v742
      %v1015 = vpack.c.b16 %v747, %v743
      %v1016 = vpack.c.b16 %v748, %v744
      %v1017 = vpack.c.b16 %v749, %v745
      %v1018 = vpack.c.b16 %v754, %v750
      %v1019 = vpack.c.b16 %v755, %v751
      %v1020 = vpack.c.b16 %v756, %v752
      %v1021 = vpack.c.b16 %v757, %v753
      %v1022 = vpack.c.b16 %v762, %v758
      %v1023 = vpack.c.b16 %v763, %v759
      %v1024 = vpack.c.b16 %v764, %v760
      %v1025 = vpack.c.b16 %v765, %v761
      %v1026 = vpack.c.b16 %v770, %v766
      %v1027 = vpack.c.b16 %v771, %v767
      %v1028 = vpack.c.b16 %v772, %v768
      %v1029 = vpack.c.b16 %v773, %v769
      %v1030 = vpack.c.b16 %v778, %v774
      %v1031 = vpack.c.b16 %v779, %v775
      %v1032 = vpack.c.b16 %v780, %v776
      %v1033 = vpack.c.b16 %v781, %v777
      %v1034 = vpack.c.b16 %v786, %v782
      %v1035 = vpack.c.b16 %v787, %v783
      %v1036 = vpack.c.b16 %v788, %v784
      %v1037 = vpack.c.b16 %v789, %v785
      %v1038 = vpack.c.b16 %v794, %v790
      %v1039 = vpack.c.b16 %v795, %v791
      %v1040 = vpack.c.b16 %v796, %v792
      %v1041 = vpack.c.b16 %v797, %v793
      %v1042 = vpack.c.b16 %v802, %v798
      %v1043 = vpack.c.b16 %v803, %v799
      %v1044 = vpack.c.b16 %v804, %v800
      %v1045 = vpack.c.b16 %v805, %v801
      %v1046 = vpack.c.b16 %v810, %v806
      %v1047 = vpack.c.b16 %v811, %v807
      %v1048 = vpack.c.b16 %v812, %v808
      %v1049 = vpack.c.b16 %v813, %v809
      %v1050 = vpack.c.b16 %v818, %v814
      %v1051 = vpack.c.b16 %v819, %v815
      %v1052 = vpack.c.b16 %v820, %v816
      %v1053 = vpack.c.b16 %v821, %v817
      %v1054 = vpack.c.b16 %v826, %v822
      %v1055 = vpack.c.b16 %v827, %v823
      %v1056 = vpack.c.b16 %v828, %v824
      %v1057 = vpack.c.b16 %v829, %v825
      %v1058 = vpack.c.b16 %v834, %v830
      %v1059 = vpack.c.b16 %v835, %v831
      %v1060 = vpack.c.b16 %v836, %v832
      %v1061 = vpack.c.b16 %v837, %v833
      %v1062 = vpack.c.b16 %v842, %v838
      %v1063 = vpack.c.b16 %v843, %v839
      %v1064 = vpack.c.b16 %v844, %v840
      %v1065 = vpack.c.b16 %v845, %v841
      %v1066 = vpack.c.b16 %v850, %v846
      %v1067 = vpack.c.b16 %v851, %v847
      %v1068 = vpack.c.b16 %v852, %v848
      %v1069 = vpack.c.b16 %v853, %v849
      %v1070 = vpack.c.b16 %v858, %v854
      %v1071 = vpack.c.b16 %v859, %v855
      %v1072 = vpack.c.b16 %v860, %v856
      %v1073 = vpack.c.b16 %v861, %v857
      %v1074 = vpack.c.b16 %v866, %v862
      %v1075 = vpack.c.b16 %v867, %v863
      %v1076 = vpack.c.b16 %v868, %v864
      %v1077 = vpack.c.b16 %v869, %v865
      %v1078 = vpack.c.b16 %v874, %v870
      %v1079 = vpack.c.b16 %v875, %v871
      %v1080 = vpack.c.b16 %v876, %v872
      %v1081 = vpack.c.b16 %v877, %v873
      %v1082 = vpack.c.b16 %v882, %v878
      %v1083 = vpack.c.b16 %v883, %v879
      %v1084 = vpack.c.b16 %v884, %v880
      %v1085 = vpack.c.b16 %v885, %v881
      %v1086 = vpack.c.b16 %v890, %v886
      %v1087 = vpack.c.b16 %v891, %v887
      %v1088 = vpack.c.b16 %v892, %v888
      %v1089 = vpack.c.b16 %v893, %v889
      %v1090 = vpack.c.b16 %v898, %v894
      %v1091 = vpack.c.b16 %v899, %v895
      %v1092 = vpack.c.b16 %v900, %v896
      %v1093 = vpack.c.b16 %v901, %v897
      %v1094 = vpack.c.b16 %v906, %v902
      %v1095 = vpack.c.b16 %v907, %v903
      %v1096 = vpack.c.b16 %v908, %v904
      %v1097 = vpack.c.b16 %v909, %v905
      %v1098 = vpack.c.b16 %v914, %v910
      %v1099 = vpack.c.b16 %v915, %v911
      %v1100 = vpack.c.b16 %v916, %v912
      %v1101 = vpack.c.b16 %v917, %v913
      %v1102 = vpack.c.b16 %v922, %v918
      %v1103 = vpack.c.b16 %v923, %v919
      %v1104 = vpack.c.b16 %v924, %v920
      %v1105 = vpack.c.b16 %v925, %v921
      %v1106 = vpack.c.b16 %v930, %v926
      %v1107 = vpack.c.b16 %v931, %v927
      %v1108 = vpack.c.b16 %v932, %v928
      %v1109 = vpack.c.b16 %v933, %v929
      %v1110 = vpack.c.b16 %v938, %v934
      %v1111 = vpack.c.b16 %v939, %v935
      %v1112 = vpack.c.b16 %v940, %v936
      %v1113 = vpack.c.b16 %v941, %v937
      %v1114 = vpack.c.b16 %v946, %v942
      %v1115 = vpack.c.b16 %v947, %v943
      %v1116 = vpack.c.b16 %v948, %v944
      %v1117 = vpack.c.b16 %v949, %v945
      %v1118 = vpack.c.b16 %v954, %v950
      %v1119 = vpack.c.b16 %v955, %v951
      %v1120 = vpack.c.b16 %v956, %v952
      %v1121 = vpack.c.b16 %v957, %v953
      %v1122 = vpack.c.b16 %v962, %v958
      %v1123 = vpack.c.b16 %v963, %v959
      %v1124 = vpack.c.b16 %v964, %v960
      %v1125 = vpack.c.b16 %v965, %v961
      %v1126 = vpack.c.b16 %v970, %v966
      %v1127 = vpack.c.b16 %v971, %v967
      %v1128 = vpack.c.b16 %v972, %v968
      %v1129 = vpack.c.b16 %v973, %v969
      %v1130 = vpack.c.b16 %v978, %v974
      %v1131 = vpack.c.b16 %v979, %v975
      %v1132 = vpack.c.b16 %v980, %v976
      %v1133 = vpack.c.b16 %v981, %v977
      %v1134 = vpack.c.b16 %v982, %v982
      %v1135 = vpack.c.b16 %v983, %v983
      %v1136 = vpack.c.b16 %v984, %v984
      %v1137 = vpack.c.b16 %v985, %v985
      %vm1286 = vcmask 719872
      %v1288 = vsel %vm1286, %v504, 0
      %v1291 = vsel %vm1286, %v509, 0
      %v1294 = vsel %vm1286, %v514, 0
      %v1297 = vsel %vm1286, %v519, 0
      %vm1299 = vcmask 1043456
      %v1301 = vsel %vm1299, %v1134, 0
      %v1304 = vsel %vm1299, %v1135, 0
      %v1307 = vsel %vm1299, %v1136, 0
      %v1310 = vsel %vm1299, %v1137, 0
      %1312 = vmatprep.subr.bf16.mxu0 %v1015
      %1313 = vmatpush1.bf16.msra.mxu0 %v1014
      %1314 = vmatprep.subr.bf16.mxu0 %v1011
      %1315 = vmatpush1.bf16.msra.mxu0 %v1010
      %1316 = vmatprep.subr.bf16.mxu0 %v1007
      %1317 = vmatpush1.bf16.msra.mxu0 %v1006
      %1318 = vmatprep.subr.bf16.mxu0 %v1003
      %1319 = vmatpush1.bf16.msra.mxu0 %v1002
      %1320 = vmatprep.subr.bf16.mxu0 %v999
      %1321 = vmatpush1.bf16.msra.mxu0 %v998
      %1322 = vmatprep.subr.bf16.mxu0 %v995
      %1323 = vmatpush1.bf16.msra.mxu0 %v994
      %1324 = vmatprep.subr.bf16.mxu0 %v991
      %1325 = vmatpush1.bf16.msra.mxu0 %v990
      %1326 = vmatprep.subr.bf16.mxu0 %v987
      %1327 = vmatpush1.bf16.msra.mxu0 %v986
      %1328 = vmatprep.subr.bf16.mxu0 %v1047
      %1329 = vmatpush2.bf16.msra.mxu0 %v1046
      %1330 = vmatprep.subr.bf16.mxu0 %v1043
      %1331 = vmatpush2.bf16.msra.mxu0 %v1042
      %1332 = vmatprep.subr.bf16.mxu0 %v1039
      %1333 = vmatpush2.bf16.msra.mxu0 %v1038
      %1334 = vmatprep.subr.bf16.mxu0 %v1035
      %1335 = vmatpush2.bf16.msra.mxu0 %v1034
      %1336 = vmatprep.subr.bf16.mxu0 %v1031
      %1337 = vmatpush2.bf16.msra.mxu0 %v1030
      %1338 = vmatprep.subr.bf16.mxu0 %v1027
      %1339 = vmatpush2.bf16.msra.mxu0 %v1026
      %1340 = vmatprep.subr.bf16.mxu0 %v1023
      %1341 = vmatpush2.bf16.msra.mxu0 %v1022
      %1342 = vmatprep.subr.bf16.mxu0 %v1019
      %1343 = vmatpush2.bf16.msra.mxu0 %v1018
      %1344 = vmatprep.mubr.bf16.mxu0 %v501
      %1345 = vmatmul.mubr.bf16.gmra.mxu0 %v500
      %v1346 = vpop.f32.mrf.mxu0
      %v1347 = vadd.f32 %v427, %v1346
      %v1348 = vpop.f32.mrf.mxu0
      %v1349 = vadd.f32 %v431, %v1348
      %v1350 = vpop.f32.mrf.mxu0
      %v1351 = vadd.f32 %v427, %v1350
      %v1352 = vpop.f32.mrf.mxu0
      %v1353 = vadd.f32 %v431, %v1352
      %1354 = vmatprep.mubr.bf16.mxu0 %v506
      %1355 = vmatmul.mubr.bf16.gmra.mxu0 %v505
      %v1356 = vpop.f32.mrf.mxu0
      %v1357 = vadd.f32 %v427, %v1356
      %v1358 = vpop.f32.mrf.mxu0
      %v1359 = vadd.f32 %v431, %v1358
      %v1360 = vpop.f32.mrf.mxu0
      %v1361 = vadd.f32 %v427, %v1360
      %v1362 = vpop.f32.mrf.mxu0
      %v1363 = vadd.f32 %v431, %v1362
      %1364 = vmatprep.mubr.bf16.mxu0 %v511
      %1365 = vmatmul.mubr.bf16.gmra.mxu0 %v510
      %v1366 = vpop.f32.mrf.mxu0
      %v1367 = vadd.f32 %v427, %v1366
      %v1368 = vpop.f32.mrf.mxu0
      %v1369 = vadd.f32 %v431, %v1368
      %v1370 = vpop.f32.mrf.mxu0
      %v1371 = vadd.f32 %v427, %v1370
      %v1372 = vpop.f32.mrf.mxu0
      %v1373 = vadd.f32 %v431, %v1372
      %1374 = vmatprep.mubr.bf16.mxu0 %v516
      %1375 = vmatmul.mubr.bf16.gmra.mxu0 %v515
      %v1376 = vpop.f32.mrf.mxu0
      %v1377 = vadd.f32 %v427, %v1376
      %v1378 = vpop.f32.mrf.mxu0
      %v1379 = vadd.f32 %v431, %v1378
      %v1380 = vpop.f32.mrf.mxu0
      %v1381 = vpop.f32.mrf.mxu0
      %1382 = vdwg.mxu0
      %1383 = vmatprep.subr.bf16.mxu0 %v1079
      %1384 = vmatpush1.bf16.msra.mxu0 %v1078
      %1385 = vmatprep.subr.bf16.mxu0 %v1075
      %1386 = vmatpush1.bf16.msra.mxu0 %v1074
      %1387 = vmatprep.subr.bf16.mxu0 %v1071
      %1388 = vmatpush1.bf16.msra.mxu0 %v1070
      %1389 = vmatprep.subr.bf16.mxu0 %v1067
      %1390 = vmatpush1.bf16.msra.mxu0 %v1066
      %1391 = vmatprep.subr.bf16.mxu0 %v1063
      %1392 = vmatpush1.bf16.msra.mxu0 %v1062
      %1393 = vmatprep.subr.bf16.mxu0 %v1059
      %1394 = vmatpush1.bf16.msra.mxu0 %v1058
      %1395 = vmatprep.subr.bf16.mxu0 %v1055
      %1396 = vmatpush1.bf16.msra.mxu0 %v1054
      %1397 = vmatprep.subr.bf16.mxu0 %v1051
      %1398 = vmatpush1.bf16.msra.mxu0 %v1050
      %1399 = vmatprep.subr.bf16.mxu0 %v1111
      %1400 = vmatpush2.bf16.msra.mxu0 %v1110
      %1401 = vmatprep.subr.bf16.mxu0 %v1107
      %1402 = vmatpush2.bf16.msra.mxu0 %v1106
      %1403 = vmatprep.subr.bf16.mxu0 %v1103
      %1404 = vmatpush2.bf16.msra.mxu0 %v1102
      %1405 = vmatprep.subr.bf16.mxu0 %v1099
      %1406 = vmatpush2.bf16.msra.mxu0 %v1098
      %1407 = vmatprep.subr.bf16.mxu0 %v1095
      %1408 = vmatpush2.bf16.msra.mxu0 %v1094
      %1409 = vmatprep.subr.bf16.mxu0 %v1091
      %1410 = vmatpush2.bf16.msra.mxu0 %v1090
      %1411 = vmatprep.subr.bf16.mxu0 %v1087
      %1412 = vmatpush2.bf16.msra.mxu0 %v1086
      %1413 = vmatprep.subr.bf16.mxu0 %v1083
      %1414 = vmatpush2.bf16.msra.mxu0 %v1082
      %1415 = vmatprep.mubr.bf16.mxu0 %v503
      %1416 = vmatmul.mubr.bf16.gmra.mxu0 %v502
      %v1417 = vpop.f32.mrf.mxu0
      %v1418 = vadd.f32 %v1347, %v1417
      %v1419 = vpop.f32.mrf.mxu0
      %v1420 = vadd.f32 %v1349, %v1419
      %v1421 = vpop.f32.mrf.mxu0
      %v1422 = vadd.f32 %v1351, %v1421
      %v1423 = vpop.f32.mrf.mxu0
      %v1424 = vadd.f32 %v1353, %v1423
      %1425 = vmatprep.mubr.bf16.mxu0 %v508
      %1426 = vmatmul.mubr.bf16.gmra.mxu0 %v507
      %v1427 = vpop.f32.mrf.mxu0
      %v1428 = vadd.f32 %v1357, %v1427
      %v1429 = vpop.f32.mrf.mxu0
      %v1430 = vadd.f32 %v1359, %v1429
      %v1431 = vpop.f32.mrf.mxu0
      %v1432 = vadd.f32 %v1361, %v1431
      %v1433 = vpop.f32.mrf.mxu0
      %v1434 = vadd.f32 %v1363, %v1433
      %1435 = vmatprep.mubr.bf16.mxu0 %v513
      %1436 = vmatmul.mubr.bf16.gmra.mxu0 %v512
      %v1437 = vpop.f32.mrf.mxu0
      %v1438 = vadd.f32 %v1367, %v1437
      %v1439 = vpop.f32.mrf.mxu0
      %v1440 = vadd.f32 %v1369, %v1439
      %v1441 = vpop.f32.mrf.mxu0
      %v1442 = vadd.f32 %v1371, %v1441
      %v1443 = vpop.f32.mrf.mxu0
      %v1444 = vadd.f32 %v1373, %v1443
      %1445 = vmatprep.mubr.bf16.mxu0 %v518
      %1446 = vmatmul.mubr.bf16.gmra.mxu0 %v517
      %v1447 = vpop.f32.mrf.mxu0
      %v1448 = vadd.f32 %v1377, %v1447
      %v1449 = vpop.f32.mrf.mxu0
      %v1450 = vadd.f32 %v1379, %v1449
      %v1451 = vpop.f32.mrf.mxu0
      %v1452 = vpop.f32.mrf.mxu0
      %1453 = vdwg.mxu0
      %1454 = vmatprep.subr.bf16.mxu0 0
      %1455 = vmatpush1.bf16.msra.mxu0 0
      %1456 = vmatprep.subr.bf16.mxu0 0
      %1457 = vmatpush1.bf16.msra.mxu0 0
      %1458 = vmatprep.subr.bf16.mxu0 %v1304
      %1459 = vmatpush1.bf16.msra.mxu0 %v1301
      %1460 = vmatprep.subr.bf16.mxu0 %v1131
      %1461 = vmatpush1.bf16.msra.mxu0 %v1130
      %1462 = vmatprep.subr.bf16.mxu0 %v1127
      %1463 = vmatpush1.bf16.msra.mxu0 %v1126
      %1464 = vmatprep.subr.bf16.mxu0 %v1123
      %1465 = vmatpush1.bf16.msra.mxu0 %v1122
      %1466 = vmatprep.subr.bf16.mxu0 %v1119
      %1467 = vmatpush1.bf16.msra.mxu0 %v1118
      %1468 = vmatprep.subr.bf16.mxu0 %v1115
      %1469 = vmatpush1.bf16.msra.mxu0 %v1114
      %1470 = vmatprep.subr.bf16.mxu0 0
      %1471 = vmatpush2.bf16.msra.mxu0 0
      %1472 = vmatprep.subr.bf16.mxu0 0
      %1473 = vmatpush2.bf16.msra.mxu0 0
      %1474 = vmatprep.subr.bf16.mxu0 0
      %1475 = vmatpush2.bf16.msra.mxu0 0
      %1476 = vmatprep.subr.bf16.mxu0 0
      %1477 = vmatpush2.bf16.msra.mxu0 0
      %1478 = vmatprep.subr.bf16.mxu0 0
      %1479 = vmatpush2.bf16.msra.mxu0 0
      %1480 = vmatprep.subr.bf16.mxu0 0
      %1481 = vmatpush2.bf16.msra.mxu0 0
      %1482 = vmatprep.subr.bf16.mxu0 0
      %1483 = vmatpush2.bf16.msra.mxu0 0
      %1484 = vmatprep.subr.bf16.mxu0 0
      %1485 = vmatpush2.bf16.msra.mxu0 0
      %1486 = vmatprep.mubr.bf16.mxu0 0
      %1487 = vmatmul.mubr.bf16.gmra.mxu0 %v1288
      %v1488 = vpop.f32.mrf.mxu0
      %v1489 = vadd.f32 %v1418, %v1488
      %v1490 = vpop.f32.mrf.mxu0
      %v1491 = vadd.f32 %v1420, %v1490
      %v1492 = vpop.f32.mrf.mxu0
      %v1493 = vadd.f32 %v1422, %v1492
      %v1494 = vpop.f32.mrf.mxu0
      %v1495 = vadd.f32 %v1424, %v1494
      %1496 = vmatprep.mubr.bf16.mxu0 0
      %1497 = vmatmul.mubr.bf16.gmra.mxu0 %v1291
      %v1498 = vpop.f32.mrf.mxu0
      %v1499 = vadd.f32 %v1428, %v1498
      %v1500 = vpop.f32.mrf.mxu0
      %v1501 = vadd.f32 %v1430, %v1500
      %v1502 = vpop.f32.mrf.mxu0
      %v1503 = vadd.f32 %v1432, %v1502
      %v1504 = vpop.f32.mrf.mxu0
      %v1505 = vadd.f32 %v1434, %v1504
      %1506 = vmatprep.mubr.bf16.mxu0 0
      %1507 = vmatmul.mubr.bf16.gmra.mxu0 %v1294
      %v1508 = vpop.f32.mrf.mxu0
      %v1509 = vadd.f32 %v1438, %v1508
      %v1510 = vpop.f32.mrf.mxu0
      %v1511 = vadd.f32 %v1440, %v1510
      %v1512 = vpop.f32.mrf.mxu0
      %v1513 = vadd.f32 %v1442, %v1512
      %v1514 = vpop.f32.mrf.mxu0
      %v1515 = vadd.f32 %v1444, %v1514
      %1516 = vmatprep.mubr.bf16.mxu0 0
      %1517 = vmatmul.mubr.bf16.gmra.mxu0 %v1297
      %v1518 = vpop.f32.mrf.mxu0
      %v1519 = vadd.f32 %v1448, %v1518
      %v1520 = vpop.f32.mrf.mxu0
      %v1521 = vadd.f32 %v1450, %v1520
      %v1522 = vpop.f32.mrf.mxu0
      %v1523 = vpop.f32.mrf.mxu0
      %1524 = vdwg.mxu0
      %1525 = vmatprep.subr.bf16.mxu0 %v1017
      %1526 = vmatpush1.bf16.msra.mxu0 %v1016
      %1527 = vmatprep.subr.bf16.mxu0 %v1013
      %1528 = vmatpush1.bf16.msra.mxu0 %v1012
      %1529 = vmatprep.subr.bf16.mxu0 %v1009
      %1530 = vmatpush1.bf16.msra.mxu0 %v1008
      %1531 = vmatprep.subr.bf16.mxu0 %v1005
      %1532 = vmatpush1.bf16.msra.mxu0 %v1004
      %1533 = vmatprep.subr.bf16.mxu0 %v1001
      %1534 = vmatpush1.bf16.msra.mxu0 %v1000
      %1535 = vmatprep.subr.bf16.mxu0 %v997
      %1536 = vmatpush1.bf16.msra.mxu0 %v996
      %1537 = vmatprep.subr.bf16.mxu0 %v993
      %1538 = vmatpush1.bf16.msra.mxu0 %v992
      %1539 = vmatprep.subr.bf16.mxu0 %v989
      %1540 = vmatpush1.bf16.msra.mxu0 %v988
      %1541 = vmatprep.subr.bf16.mxu0 %v1049
      %1542 = vmatpush2.bf16.msra.mxu0 %v1048
      %1543 = vmatprep.subr.bf16.mxu0 %v1045
      %1544 = vmatpush2.bf16.msra.mxu0 %v1044
      %1545 = vmatprep.subr.bf16.mxu0 %v1041
      %1546 = vmatpush2.bf16.msra.mxu0 %v1040
      %1547 = vmatprep.subr.bf16.mxu0 %v1037
      %1548 = vmatpush2.bf16.msra.mxu0 %v1036
      %1549 = vmatprep.subr.bf16.mxu0 %v1033
      %1550 = vmatpush2.bf16.msra.mxu0 %v1032
      %1551 = vmatprep.subr.bf16.mxu0 %v1029
      %1552 = vmatpush2.bf16.msra.mxu0 %v1028
      %1553 = vmatprep.subr.bf16.mxu0 %v1025
      %1554 = vmatpush2.bf16.msra.mxu0 %v1024
      %1555 = vmatprep.subr.bf16.mxu0 %v1021
      %1556 = vmatpush2.bf16.msra.mxu0 %v1020
      %1557 = vmatprep.mubr.bf16.mxu0 %v501
      %1558 = vmatmul.mubr.bf16.gmra.mxu0 %v500
      %v1559 = vpop.f32.mrf.mxu0
      %v1560 = vadd.f32 %v435, %v1559
      %v1561 = vpop.f32.mrf.mxu0
      %v1562 = vadd.f32 %v439, %v1561
      %v1563 = vpop.f32.mrf.mxu0
      %v1564 = vadd.f32 %v435, %v1563
      %v1565 = vpop.f32.mrf.mxu0
      %v1566 = vadd.f32 %v439, %v1565
      %1567 = vmatprep.mubr.bf16.mxu0 %v506
      %1568 = vmatmul.mubr.bf16.gmra.mxu0 %v505
      %v1569 = vpop.f32.mrf.mxu0
      %v1570 = vadd.f32 %v435, %v1569
      %v1571 = vpop.f32.mrf.mxu0
      %v1572 = vadd.f32 %v439, %v1571
      %v1573 = vpop.f32.mrf.mxu0
      %v1574 = vadd.f32 %v435, %v1573
      %v1575 = vpop.f32.mrf.mxu0
      %v1576 = vadd.f32 %v439, %v1575
      %1577 = vmatprep.mubr.bf16.mxu0 %v511
      %1578 = vmatmul.mubr.bf16.gmra.mxu0 %v510
      %v1579 = vpop.f32.mrf.mxu0
      %v1580 = vadd.f32 %v435, %v1579
      %v1581 = vpop.f32.mrf.mxu0
      %v1582 = vadd.f32 %v439, %v1581
      %v1583 = vpop.f32.mrf.mxu0
      %v1584 = vadd.f32 %v435, %v1583
      %v1585 = vpop.f32.mrf.mxu0
      %v1586 = vadd.f32 %v439, %v1585
      %1587 = vmatprep.mubr.bf16.mxu0 %v516
      %1588 = vmatmul.mubr.bf16.gmra.mxu0 %v515
      %v1589 = vpop.f32.mrf.mxu0
      %v1590 = vadd.f32 %v435, %v1589
      %v1591 = vpop.f32.mrf.mxu0
      %v1592 = vadd.f32 %v439, %v1591
      %v1593 = vpop.f32.mrf.mxu0
      %v1594 = vpop.f32.mrf.mxu0
      %1595 = vdwg.mxu0
      %1596 = vmatprep.subr.bf16.mxu0 %v1081
      %1597 = vmatpush1.bf16.msra.mxu0 %v1080
      %1598 = vmatprep.subr.bf16.mxu0 %v1077
      %1599 = vmatpush1.bf16.msra.mxu0 %v1076
      %1600 = vmatprep.subr.bf16.mxu0 %v1073
      %1601 = vmatpush1.bf16.msra.mxu0 %v1072
      %1602 = vmatprep.subr.bf16.mxu0 %v1069
      %1603 = vmatpush1.bf16.msra.mxu0 %v1068
      %1604 = vmatprep.subr.bf16.mxu0 %v1065
      %1605 = vmatpush1.bf16.msra.mxu0 %v1064
      %1606 = vmatprep.subr.bf16.mxu0 %v1061
      %1607 = vmatpush1.bf16.msra.mxu0 %v1060
      %1608 = vmatprep.subr.bf16.mxu0 %v1057
      %1609 = vmatpush1.bf16.msra.mxu0 %v1056
      %1610 = vmatprep.subr.bf16.mxu0 %v1053
      %1611 = vmatpush1.bf16.msra.mxu0 %v1052
      %1612 = vmatprep.subr.bf16.mxu0 %v1113
      %1613 = vmatpush2.bf16.msra.mxu0 %v1112
      %1614 = vmatprep.subr.bf16.mxu0 %v1109
      %1615 = vmatpush2.bf16.msra.mxu0 %v1108
      %1616 = vmatprep.subr.bf16.mxu0 %v1105
      %1617 = vmatpush2.bf16.msra.mxu0 %v1104
      %1618 = vmatprep.subr.bf16.mxu0 %v1101
      %1619 = vmatpush2.bf16.msra.mxu0 %v1100
      %1620 = vmatprep.subr.bf16.mxu0 %v1097
      %1621 = vmatpush2.bf16.msra.mxu0 %v1096
      %1622 = vmatprep.subr.bf16.mxu0 %v1093
      %1623 = vmatpush2.bf16.msra.mxu0 %v1092
      %1624 = vmatprep.subr.bf16.mxu0 %v1089
      %1625 = vmatpush2.bf16.msra.mxu0 %v1088
      %1626 = vmatprep.subr.bf16.mxu0 %v1085
      %1627 = vmatpush2.bf16.msra.mxu0 %v1084
      %1628 = vmatprep.mubr.bf16.mxu0 %v503
      %1629 = vmatmul.mubr.bf16.gmra.mxu0 %v502
      %v1630 = vpop.f32.mrf.mxu0
      %v1631 = vadd.f32 %v1560, %v1630
      %v1632 = vpop.f32.mrf.mxu0
      %v1633 = vadd.f32 %v1562, %v1632
      %v1634 = vpop.f32.mrf.mxu0
      %v1635 = vadd.f32 %v1564, %v1634
      %v1636 = vpop.f32.mrf.mxu0
      %v1637 = vadd.f32 %v1566, %v1636
      %1638 = vmatprep.mubr.bf16.mxu0 %v508
      %1639 = vmatmul.mubr.bf16.gmra.mxu0 %v507
      %v1640 = vpop.f32.mrf.mxu0
      %v1641 = vadd.f32 %v1570, %v1640
      %v1642 = vpop.f32.mrf.mxu0
      %v1643 = vadd.f32 %v1572, %v1642
      %v1644 = vpop.f32.mrf.mxu0
      %v1645 = vadd.f32 %v1574, %v1644
      %v1646 = vpop.f32.mrf.mxu0
      %v1647 = vadd.f32 %v1576, %v1646
      %1648 = vmatprep.mubr.bf16.mxu0 %v513
      %1649 = vmatmul.mubr.bf16.gmra.mxu0 %v512
      %v1650 = vpop.f32.mrf.mxu0
      %v1651 = vadd.f32 %v1580, %v1650
      %v1652 = vpop.f32.mrf.mxu0
      %v1653 = vadd.f32 %v1582, %v1652
      %v1654 = vpop.f32.mrf.mxu0
      %v1655 = vadd.f32 %v1584, %v1654
      %v1656 = vpop.f32.mrf.mxu0
      %v1657 = vadd.f32 %v1586, %v1656
      %1658 = vmatprep.mubr.bf16.mxu0 %v518
      %1659 = vmatmul.mubr.bf16.gmra.mxu0 %v517
      %v1660 = vpop.f32.mrf.mxu0
      %v1661 = vadd.f32 %v1590, %v1660
      %v1662 = vpop.f32.mrf.mxu0
      %v1663 = vadd.f32 %v1592, %v1662
      %v1664 = vpop.f32.mrf.mxu0
      %v1665 = vpop.f32.mrf.mxu0
      %1666 = vdwg.mxu0
      %1667 = vmatprep.subr.bf16.mxu0 0
      %1668 = vmatpush1.bf16.msra.mxu0 0
      %1669 = vmatprep.subr.bf16.mxu0 0
      %1670 = vmatpush1.bf16.msra.mxu0 0
      %1671 = vmatprep.subr.bf16.mxu0 %v1310
      %1672 = vmatpush1.bf16.msra.mxu0 %v1307
      %1673 = vmatprep.subr.bf16.mxu0 %v1133
      %1674 = vmatpush1.bf16.msra.mxu0 %v1132
      %1675 = vmatprep.subr.bf16.mxu0 %v1129
      %1676 = vmatpush1.bf16.msra.mxu0 %v1128
      %1677 = vmatprep.subr.bf16.mxu0 %v1125
      %1678 = vmatpush1.bf16.msra.mxu0 %v1124
      %1679 = vmatprep.subr.bf16.mxu0 %v1121
      %1680 = vmatpush1.bf16.msra.mxu0 %v1120
      %1681 = vmatprep.subr.bf16.mxu0 %v1117
      %1682 = vmatpush1.bf16.msra.mxu0 %v1116
      %1683 = vmatprep.subr.bf16.mxu0 0
      %1684 = vmatpush2.bf16.msra.mxu0 0
      %1685 = vmatprep.subr.bf16.mxu0 0
      %1686 = vmatpush2.bf16.msra.mxu0 0
      %1687 = vmatprep.subr.bf16.mxu0 0
      %1688 = vmatpush2.bf16.msra.mxu0 0
      %1689 = vmatprep.subr.bf16.mxu0 0
      %1690 = vmatpush2.bf16.msra.mxu0 0
      %1691 = vmatprep.subr.bf16.mxu0 0
      %1692 = vmatpush2.bf16.msra.mxu0 0
      %1693 = vmatprep.subr.bf16.mxu0 0
      %1694 = vmatpush2.bf16.msra.mxu0 0
      %1695 = vmatprep.subr.bf16.mxu0 0
      %1696 = vmatpush2.bf16.msra.mxu0 0
      %1697 = vmatprep.subr.bf16.mxu0 0
      %1698 = vmatpush2.bf16.msra.mxu0 0
      %1699 = vmatprep.mubr.bf16.mxu0 0
      %1700 = vmatmul.mubr.bf16.gmra.mxu0 %v1288
      %v1701 = vpop.f32.mrf.mxu0
      %v1702 = vadd.f32 %v1631, %v1701
      %v1703 = vpop.f32.mrf.mxu0
      %v1704 = vadd.f32 %v1633, %v1703
      %v1705 = vpop.f32.mrf.mxu0
      %v1706 = vadd.f32 %v1635, %v1705
      %v1707 = vpop.f32.mrf.mxu0
      %v1708 = vadd.f32 %v1637, %v1707
      %1709 = vmatprep.mubr.bf16.mxu0 0
      %1710 = vmatmul.mubr.bf16.gmra.mxu0 %v1291
      %v1711 = vpop.f32.mrf.mxu0
      %v1712 = vadd.f32 %v1641, %v1711
      %v1713 = vpop.f32.mrf.mxu0
      %v1714 = vadd.f32 %v1643, %v1713
      %v1715 = vpop.f32.mrf.mxu0
      %v1716 = vadd.f32 %v1645, %v1715
      %v1717 = vpop.f32.mrf.mxu0
      %v1718 = vadd.f32 %v1647, %v1717
      %1719 = vmatprep.mubr.bf16.mxu0 0
      %1720 = vmatmul.mubr.bf16.gmra.mxu0 %v1294
      %v1721 = vpop.f32.mrf.mxu0
      %v1722 = vadd.f32 %v1651, %v1721
      %v1723 = vpop.f32.mrf.mxu0
      %v1724 = vadd.f32 %v1653, %v1723
      %v1725 = vpop.f32.mrf.mxu0
      %v1726 = vadd.f32 %v1655, %v1725
      %v1727 = vpop.f32.mrf.mxu0
      %v1728 = vadd.f32 %v1657, %v1727
      %1729 = vmatprep.mubr.bf16.mxu0 0
      %1730 = vmatmul.mubr.bf16.gmra.mxu0 %v1297
      %v1731 = vpop.f32.mrf.mxu0
      %v1732 = vadd.f32 %v1661, %v1731
      %v1733 = vpop.f32.mrf.mxu0
      %v1734 = vadd.f32 %v1663, %v1733
      %v1735 = vpop.f32.mrf.mxu0
      %v1736 = vpop.f32.mrf.mxu0
      %1737 = vdwg.mxu0
      %v1738 = vtanh.pop %v1489
      %v1739 = vtanh.pop %v1491
      %v1740 = vtanh.pop %v1702
      %v1741 = vtanh.pop %v1704
      %v1742 = vtanh.pop %v1493
      %v1743 = vtanh.pop %v1495
      %v1744 = vtanh.pop %v1706
      %v1745 = vtanh.pop %v1708
      %v1746 = vtanh.pop %v1499
      %v1747 = vtanh.pop %v1501
      %v1748 = vtanh.pop %v1712
      %v1749 = vtanh.pop %v1714
      %v1750 = vtanh.pop %v1503
      %v1751 = vtanh.pop %v1505
      %v1752 = vtanh.pop %v1716
      %v1753 = vtanh.pop %v1718
      %v1754 = vtanh.pop %v1509
      %v1755 = vtanh.pop %v1511
      %v1756 = vtanh.pop %v1722
      %v1757 = vtanh.pop %v1724
      %v1758 = vtanh.pop %v1513
      %v1759 = vtanh.pop %v1515
      %v1760 = vtanh.pop %v1726
      %v1761 = vtanh.pop %v1728
      %v1762 = vtanh.pop %v1519
      %v1763 = vtanh.pop %v1521
      %v1764 = vtanh.pop %v1732
      %v1765 = vtanh.pop %v1734
      %v1766 = vmax.f32 %v1738, %v1739
      %v1767 = vmax.f32 %v1742, %v1743
      %v1768 = vmax.f32 %v1746, %v1747
      %v1769 = vmax.f32 %v1750, %v1751
      %v1770 = vmax.f32 %v1754, %v1755
      %v1771 = vmax.f32 %v1758, %v1759
      %v1772 = vmax.f32 %v1762, %v1763
      %v1773 = vmax.f32 %v1740, %v1741
      %v1774 = vmax.f32 %v1744, %v1745
      %v1775 = vmax.f32 %v1748, %v1749
      %v1776 = vmax.f32 %v1752, %v1753
      %v1777 = vmax.f32 %v1756, %v1757
      %v1778 = vmax.f32 %v1760, %v1761
      %v1779 = vmax.f32 %v1764, %v1765
      %v1780 = vmax.f32 %v1766, %v1773
      %v1781 = vmax.f32 %v1767, %v1774
      %v1782 = vmax.f32 %v1768, %v1775
      %v1783 = vmax.f32 %v1769, %v1776
      %v1784 = vmax.f32 %v1770, %v1777
      %v1785 = vmax.f32 %v1771, %v1778
      %v1786 = vmax.f32 %v1772, %v1779
      %v1787 = vpack.c.bf16 %v1781, %v1780
      %v1788 = vpack.c.bf16 %v1783, %v1782
      %v1789 = vpack.c.bf16 %v1785, %v1784
      %v1790 = vpack.c.bf16 %v1786, %v1786
      %v1795 = vunpack.c.l.b16 %v1787
      %v1796 = vunpack.c.h.b16 %v1787
      %v1797 = vunpack.c.l.b16 %v1788
      %v1798 = vunpack.c.h.b16 %v1788
      %v1799 = vunpack.c.l.b16 %v1789
      %v1800 = vunpack.c.h.b16 %v1789
      %v1801 = vunpack.c.l.b16 %v1790
      %v1802 = vpack.c.b16 %v1795, %v1795
      %v1803 = vpack.c.b16 %v1796, %v1796
      %v1804 = vpack.c.b16 %v1797, %v1797
      %v1805 = vpack.c.b16 %v1798, %v1798
      %v1806 = vpack.c.b16 %v1799, %v1799
      %v1807 = vpack.c.b16 %v1800, %v1800
      %v1808 = vpack.c.b16 %v1801, %v1801
      %1816 = vst [vmem:[%s248] sm:$0xf] %v1802
      %1817 = vst [vmem:[%s248 + $0x4] sm:$0xf] %v1803
      %1818 = vst [vmem:[%s248 + $0x8] sm:$0xf] %v1804
      %1819 = vst [vmem:[%s248 + $0xc] sm:$0xf] %v1805
      %1820 = vst [vmem:[%s248 + $0x10] sm:$0xf] %v1806
      %1821 = vst [vmem:[%s248 + $0x14] sm:$0xf] %v1807
      %1822 = vst [vmem:[%s248 + $0x18] sm:$0xf] %v1808
      %s1823 = smul.u32 7, %s19
      %p1824 = scmp.lt.s32.totalorder %s18, 2
      %s1825 = scalar_select %p1824, %s18, 2
      %p1826 = scmp.lt.s32.totalorder %s1823, 6
      %s1827 = scalar_select %p1826, %s1823, 6
      %s1828 = smul.addr %s1825, 7
      %s1829 = sadd.s32 %s1827, %s1828
      %s1830 = smul.addr %s1829, 4
      %s1831 = scalar_lea.vmem %s3, %s1830
      // Predicated region
      $region33: #{lenet_ensemble_forward.4} parent=31 // pred_check
        %p1832 = pneg %p126
      $region34: #{lenet_ensemble_forward.4} parent=31 // pred_check_branch
        %1834 = sbr.rel (%p1832) target = $region36
      $region35: #{lenet_ensemble_forward.4} parent=31 // pred_region
        %s1835 = smul.u32 7, %s19
      $region36: #{lenet_ensemble_forward.4} parent=31 // pred_fallthru
        _
    $region32: #{lenet_ensemble_forward.4} parent=5 // pred_fallthru
      _
    %p1836 = scmp.le.s32.totalorder 2, %s9
    // Predicated region
    $region37: #{lenet_ensemble_forward.4} parent=5 // pred_check
      %p1837 = pneg %p1836
    $region38: #{lenet_ensemble_forward.4} parent=5 // pred_check_branch
      %1839 = sbr.rel (%p1837) target = $region40
    $region39: #{lenet_ensemble_forward.4} parent=5 // pred_region
      %s1840 = ssub.s32 %s9, 2
      // Predicated region
      $region41: #{lenet_ensemble_forward.4} parent=39 // pred_check
        %p1841 = pneg %p132
      $region42: #{lenet_ensemble_forward.4} parent=39 // pred_check_branch
        %1843 = sbr.rel (%p1841) target = $region44
      $region43: #{lenet_ensemble_forward.4} parent=39 // pred_region
        %s1844 = smul.u32 7, %s21
        %p1845 = scmp.lt.s32.totalorder %s20, 2
        %s1846 = scalar_select %p1845, %s20, 2
        %p1847 = scmp.lt.s32.totalorder %s1844, 6
        %s1848 = scalar_select %p1847, %s1844, 6
        %s1849 = smul.addr %s1846, 7
        %s1850 = sadd.s32 %s1848, %s1849
        %s1851 = smul.addr %s1850, 4
        %s1852 = scalar_lea.vmem %s3, %s1851
      $region44: #{lenet_ensemble_forward.4} parent=39 // pred_fallthru
        _
    $region40: #{lenet_ensemble_forward.4} parent=5 // pred_fallthru
      _
  $region6: #{lenet_ensemble_forward.4} parent=0 // loop_footer
    %s13 = sadd.s32 1, %s9
  $region7: #{lenet_ensemble_forward.4} parent=0 // loop_footer_branch
    %8 = sbr.rel target = $region3
  $region8: #{lenet_ensemble_forward.4} parent=0 // loop_exit
    _

// kernel: lenet_ensemble_forward.5
$region0: #{lenet_ensemble_forward.5}
  #allocation0 [shape = 'u32[]', space=smem, size = 0x4, offset = 0x4, fixed_abs, tag = 'smem constant byte address 0x4 - core index']
  #allocation1 [shape = 'u32[144,128]{1,0:T(1,128)}', space=vmem, size = 0x12000, scoped, tag = 'internal scratch']
  %s0 = inlined_call_operand.vmem [shape: bf16[3,8,400], index: 0, kind: input, shape index: {}]
  %s1 = inlined_call_operand.vmem [shape: bf16[3,400,128], index: 1, kind: input, shape index: {}]
  %s2 = inlined_call_operand.vmem [shape: f32[3,1,128], index: 2, kind: input, shape index: {}]
  %s3 = inlined_call_operand.vmem [shape: bf16[3,128,128], index: 3, kind: input, shape index: {}]
  %s4 = inlined_call_operand.vmem [shape: f32[3,1,128], index: 4, kind: input, shape index: {}]
  %s5 = inlined_call_operand.vmem [shape: bf16[3,128,128], index: 5, kind: input, shape index: {}]
  %s6 = inlined_call_operand.vmem [shape: f32[3,1,128], index: 6, kind: input, shape index: {}]
  %s7 = inlined_call_operand.vmem [shape: f32[3,8,128], index: 7, kind: output, shape index: {}]
  %s8 = sld [smem:[#allocation0]]
  $region61: #{lenet_ensemble_forward.5} parent=0
    _
  %s10 = ssub.s32 1, %s8
  %s11 = scalar_select 0, %s10, %s8
  loop: start=0, step=1, limit=5
  $region2: #{lenet_ensemble_forward.5} parent=0 // loop_pre_header
    _
  $region3: #{lenet_ensemble_forward.5} parent=0 // loop_header
    %s13 = sphi 0, %s17
    %p14 = scmp.ge.s32.totalorder %s13, 5
    %s20 = sphi 0, %s32
    %s21 = sphi 0, %s28
    %s22 = sphi 0, %s20
    %s23 = sphi 0, %s21
    %s24 = sphi 0, %s22
    %s25 = sphi 0, %s23
    %s37 = sphi 0, %s39
    %s40 = sphi 0, %s37
    %s41 = sphi 0, %s40
    %s57 = sphi 0, %s41
    %s63 = sphi 0, %s65
    %s66 = sphi 0, %s63
    %s67 = sphi 0, %s66
    %s83 = sphi 0, %s67
    %s89 = sphi 0, %s91
    %s92 = sphi 0, %s89
    %s93 = sphi 0, %s92
    %s109 = sphi 0, %s93
    %s115 = sphi 0, %s117
    %s118 = sphi 0, %s115
    %s119 = sphi 0, %s118
    %s135 = sphi 0, %s119
    %s141 = sphi 0, %s143
    %s144 = sphi 0, %s141
    %s145 = sphi 0, %s144
    %s161 = sphi 0, %s145
    %s167 = sphi 0, %s169
    %s170 = sphi 0, %s167
    %s171 = sphi 0, %s170
    %s187 = sphi 0, %s171
    %s193 = sphi 0, %s195
    %s196 = sphi 0, %s193
    %s197 = sphi 0, %s196
    %s213 = sphi 0, %s197
    %s221 = sphi 0, %s223
    %s224 = sphi 0, %s221
    %s225 = sphi 0, %s224
    %s241 = sphi 0, %s225
  $region4: #{lenet_ensemble_forward.5} parent=0 // loop_header_branch
    %16 = sbr.rel (%p14) target = $region8
  $region5: #{lenet_ensemble_forward.5} parent=0 // loop_body
    %s18 = ssub.s32 %s13, 1
    %s19 = ssub.s32 %s13, 2
    %s26 = sadd.s32 1, %s21
    %p27 = scmp.ge.s32.totalorder %s26, 1
    %s28 = scalar_select %p27, 0, %s26
    %s29 = sadd.s32 1, %s20
    %s30 = scalar_select %p27, %s29, %s20
    %p31 = scmp.ge.s32.totalorder %s30, 3
    %s32 = scalar_select %p31, 0, %s30
    %s33 = ssub.s32 %s20, %s32
    %s34 = ssub.s32 %s21, %s28
    %s35 = sor.u32 %s33, %s34
    %p36 = scmp.eq.s32.totalorder %s35, 0
    %s38 = sadd.s32 %s37, 1
    %s39 = scalar_select %p36, %s37, %s38
    %p42 = pneg %p36
    %p43 = scmp.eq.s32.totalorder %s13, 2
    %p44 = por %p42, %p43
    %p45 = scmp.ne.s32.totalorder %s37, %s40
    %p46 = scmp.eq.s32.totalorder %s13, 0
    %p47 = por %p45, %p46
    %p48 = scmp.ne.s32.totalorder %s37, %s40
    %p49 = scmp.eq.s32.totalorder %s18, 2
    %p50 = por %p48, %p49
    %p51 = scmp.ne.s32.totalorder %s40, %s41
    %p52 = scmp.eq.s32.totalorder %s18, 0
    %p53 = por %p51, %p52
    %p54 = scmp.ne.s32.totalorder %s40, %s41
    %p55 = scmp.eq.s32.totalorder %s19, 2
    %p56 = por %p54, %p55
    %p58 = scmp.ne.s32.totalorder %s41, %s57
    %p59 = scmp.eq.s32.totalorder %s19, 0
    %p60 = por %p58, %p59
    %s61 = ssub.s32 %s20, %s32
    %p62 = scmp.eq.s32.totalorder %s61, 0
    %s64 = sadd.s32 %s63, 1
    %s65 = scalar_select %p62, %s63, %s64
    %p68 = pneg %p62
    %p69 = scmp.eq.s32.totalorder %s13, 2
    %p70 = por %p68, %p69
    %p71 = scmp.ne.s32.totalorder %s63, %s66
    %p72 = scmp.eq.s32.totalorder %s13, 0
    %p73 = por %p71, %p72
    %p74 = scmp.ne.s32.totalorder %s63, %s66
    %p75 = scmp.eq.s32.totalorder %s18, 2
    %p76 = por %p74, %p75
    %p77 = scmp.ne.s32.totalorder %s66, %s67
    %p78 = scmp.eq.s32.totalorder %s18, 0
    %p79 = por %p77, %p78
    %p80 = scmp.ne.s32.totalorder %s66, %s67
    %p81 = scmp.eq.s32.totalorder %s19, 2
    %p82 = por %p80, %p81
    %p84 = scmp.ne.s32.totalorder %s67, %s83
    %p85 = scmp.eq.s32.totalorder %s19, 0
    %p86 = por %p84, %p85
    %s87 = ssub.s32 %s20, %s32
    %p88 = scmp.eq.s32.totalorder %s87, 0
    %s90 = sadd.s32 %s89, 1
    %s91 = scalar_select %p88, %s89, %s90
    %p94 = pneg %p88
    %p95 = scmp.eq.s32.totalorder %s13, 2
    %p96 = por %p94, %p95
    %p97 = scmp.ne.s32.totalorder %s89, %s92
    %p98 = scmp.eq.s32.totalorder %s13, 0
    %p99 = por %p97, %p98
    %p100 = scmp.ne.s32.totalorder %s89, %s92
    %p101 = scmp.eq.s32.totalorder %s18, 2
    %p102 = por %p100, %p101
    %p103 = scmp.ne.s32.totalorder %s92, %s93
    %p104 = scmp.eq.s32.totalorder %s18, 0
    %p105 = por %p103, %p104
    %p106 = scmp.ne.s32.totalorder %s92, %s93
    %p107 = scmp.eq.s32.totalorder %s19, 2
    %p108 = por %p106, %p107
    %p110 = scmp.ne.s32.totalorder %s93, %s109
    %p111 = scmp.eq.s32.totalorder %s19, 0
    %p112 = por %p110, %p111
    %s113 = ssub.s32 %s20, %s32
    %p114 = scmp.eq.s32.totalorder %s113, 0
    %s116 = sadd.s32 %s115, 1
    %s117 = scalar_select %p114, %s115, %s116
    %p120 = pneg %p114
    %p121 = scmp.eq.s32.totalorder %s13, 2
    %p122 = por %p120, %p121
    %p123 = scmp.ne.s32.totalorder %s115, %s118
    %p124 = scmp.eq.s32.totalorder %s13, 0
    %p125 = por %p123, %p124
    %p126 = scmp.ne.s32.totalorder %s115, %s118
    %p127 = scmp.eq.s32.totalorder %s18, 2
    %p128 = por %p126, %p127
    %p129 = scmp.ne.s32.totalorder %s118, %s119
    %p130 = scmp.eq.s32.totalorder %s18, 0
    %p131 = por %p129, %p130
    %p132 = scmp.ne.s32.totalorder %s118, %s119
    %p133 = scmp.eq.s32.totalorder %s19, 2
    %p134 = por %p132, %p133
    %p136 = scmp.ne.s32.totalorder %s119, %s135
    %p137 = scmp.eq.s32.totalorder %s19, 0
    %p138 = por %p136, %p137
    %s139 = ssub.s32 %s20, %s32
    %p140 = scmp.eq.s32.totalorder %s139, 0
    %s142 = sadd.s32 %s141, 1
    %s143 = scalar_select %p140, %s141, %s142
    %p146 = pneg %p140
    %p147 = scmp.eq.s32.totalorder %s13, 2
    %p148 = por %p146, %p147
    %p149 = scmp.ne.s32.totalorder %s141, %s144
    %p150 = scmp.eq.s32.totalorder %s13, 0
    %p151 = por %p149, %p150
    %p152 = scmp.ne.s32.totalorder %s141, %s144
    %p153 = scmp.eq.s32.totalorder %s18, 2
    %p154 = por %p152, %p153
    %p155 = scmp.ne.s32.totalorder %s144, %s145
    %p156 = scmp.eq.s32.totalorder %s18, 0
    %p157 = por %p155, %p156
    %p158 = scmp.ne.s32.totalorder %s144, %s145
    %p159 = scmp.eq.s32.totalorder %s19, 2
    %p160 = por %p158, %p159
    %p162 = scmp.ne.s32.totalorder %s145, %s161
    %p163 = scmp.eq.s32.totalorder %s19, 0
    %p164 = por %p162, %p163
    %s165 = ssub.s32 %s20, %s32
    %p166 = scmp.eq.s32.totalorder %s165, 0
    %s168 = sadd.s32 %s167, 1
    %s169 = scalar_select %p166, %s167, %s168
    %p172 = pneg %p166
    %p173 = scmp.eq.s32.totalorder %s13, 2
    %p174 = por %p172, %p173
    %p175 = scmp.ne.s32.totalorder %s167, %s170
    %p176 = scmp.eq.s32.totalorder %s13, 0
    %p177 = por %p175, %p176
    %p178 = scmp.ne.s32.totalorder %s167, %s170
    %p179 = scmp.eq.s32.totalorder %s18, 2
    %p180 = por %p178, %p179
    %p181 = scmp.ne.s32.totalorder %s170, %s171
    %p182 = scmp.eq.s32.totalorder %s18, 0
    %p183 = por %p181, %p182
    %p184 = scmp.ne.s32.totalorder %s170, %s171
    %p185 = scmp.eq.s32.totalorder %s19, 2
    %p186 = por %p184, %p185
    %p188 = scmp.ne.s32.totalorder %s171, %s187
    %p189 = scmp.eq.s32.totalorder %s19, 0
    %p190 = por %p188, %p189
    %s191 = ssub.s32 %s20, %s32
    %p192 = scmp.eq.s32.totalorder %s191, 0
    %s194 = sadd.s32 %s193, 1
    %s195 = scalar_select %p192, %s193, %s194
    %p198 = pneg %p192
    %p199 = scmp.eq.s32.totalorder %s13, 2
    %p200 = por %p198, %p199
    %p201 = scmp.ne.s32.totalorder %s193, %s196
    %p202 = scmp.eq.s32.totalorder %s13, 0
    %p203 = por %p201, %p202
    %p204 = scmp.ne.s32.totalorder %s193, %s196
    %p205 = scmp.eq.s32.totalorder %s18, 2
    %p206 = por %p204, %p205
    %p207 = scmp.ne.s32.totalorder %s196, %s197
    %p208 = scmp.eq.s32.totalorder %s18, 0
    %p209 = por %p207, %p208
    %p210 = scmp.ne.s32.totalorder %s196, %s197
    %p211 = scmp.eq.s32.totalorder %s19, 2
    %p212 = por %p210, %p211
    %p214 = scmp.ne.s32.totalorder %s197, %s213
    %p215 = scmp.eq.s32.totalorder %s19, 0
    %p216 = por %p214, %p215
    %s217 = ssub.s32 %s20, %s32
    %s218 = ssub.s32 %s21, %s28
    %s219 = sor.u32 %s217, %s218
    %p220 = scmp.eq.s32.totalorder %s219, 0
    %s222 = sadd.s32 %s221, 1
    %s223 = scalar_select %p220, %s221, %s222
    %p226 = pneg %p220
    %p227 = scmp.eq.s32.totalorder %s13, 2
    %p228 = por %p226, %p227
    %p229 = scmp.ne.s32.totalorder %s221, %s224
    %p230 = scmp.eq.s32.totalorder %s13, 0
    %p231 = por %p229, %p230
    %p232 = scmp.ne.s32.totalorder %s221, %s224
    %p233 = scmp.eq.s32.totalorder %s18, 2
    %p234 = por %p232, %p233
    %p235 = scmp.ne.s32.totalorder %s224, %s225
    %p236 = scmp.eq.s32.totalorder %s18, 0
    %p237 = por %p235, %p236
    %p238 = scmp.ne.s32.totalorder %s224, %s225
    %p239 = scmp.eq.s32.totalorder %s19, 2
    %p240 = por %p238, %p239
    %p242 = scmp.ne.s32.totalorder %s225, %s241
    %p243 = scmp.eq.s32.totalorder %s19, 0
    %p244 = por %p242, %p243
    %p245 = scmp.le.s32.totalorder 1, %s13
    %p246 = scmp.lt.s32.totalorder %s13, 4
    %p247 = pnand %p245, %p246
    %p248 = pneg %p247
    // Predicated region
    $region9: #{lenet_ensemble_forward.5} parent=5 // pred_check
      _
    $region10: #{lenet_ensemble_forward.5} parent=5 // pred_check_branch
      %250 = sbr.rel (%p247) target = $region12
    $region11: #{lenet_ensemble_forward.5} parent=5 // pred_region
      %s251 = ssub.s32 %s13, 1
    $region12: #{lenet_ensemble_forward.5} parent=5 // pred_fallthru
      _
    %p252 = scmp.lt.s32.totalorder %s13, 3
    // Predicated region
    $region13: #{lenet_ensemble_forward.5} parent=5 // pred_check
      %p253 = pneg %p252
    $region14: #{lenet_ensemble_forward.5} parent=5 // pred_check_branch
      %255 = sbr.rel (%p253) target = $region16
    $region15: #{lenet_ensemble_forward.5} parent=5 // pred_region
      // Predicated region
      $region17: #{lenet_ensemble_forward.5} parent=15 // pred_check
        %p256 = pneg %p47
      $region18: #{lenet_ensemble_forward.5} parent=15 // pred_check_branch
        %258 = sbr.rel (%p256) target = $region20
      $region19: #{lenet_ensemble_forward.5} parent=15 // pred_region
        %p259 = scmp.lt.s32.totalorder %s20, 2
        %s260 = scalar_select %p259, %s20, 2
        %p261 = scmp.lt.s32.totalorder %s21, 0
        %s262 = scalar_select %p261, %s21, 0
        %s263 = smul.addr %s262, 4
        %s264 = smul.addr %s260, 4
        %s265 = sadd.s32 %s263, %s264
        %s266 = smul.addr %s265, 4
        %s267 = scalar_lea.vmem %s0, %s266
      $region20: #{lenet_ensemble_forward.5} parent=15 // pred_fallthru
        _
      // Predicated region
      $region21: #{lenet_ensemble_forward.5} parent=15 // pred_check
        %p268 = pneg %p73
      $region22: #{lenet_ensemble_forward.5} parent=15 // pred_check_branch
        %270 = sbr.rel (%p268) target = $region24
      $region23: #{lenet_ensemble_forward.5} parent=15 // pred_region
        %p271 = scmp.lt.s32.totalorder %s20, 2
        %s272 = scalar_select %p271, %s20, 2
        %s273 = smul.addr %s272, 50
        %s274 = smul.addr %s273, 4
        %s275 = scalar_lea.vmem %s1, %s274
      $region24: #{lenet_ensemble_forward.5} parent=15 // pred_fallthru
        _
      // Predicated region
      $region25: #{lenet_ensemble_forward.5} parent=15 // pred_check
        %p276 = pneg %p99
      $region26: #{lenet_ensemble_forward.5} parent=15 // pred_check_branch
        %278 = sbr.rel (%p276) target = $region28
      $region27: #{lenet_ensemble_forward.5} parent=15 // pred_region
        %p279 = scmp.lt.s32.totalorder %s20, 2
        %s280 = scalar_select %p279, %s20, 2
        %s281 = scalar_lea.vmem %s2, %s280
      $region28: #{lenet_ensemble_forward.5} parent=15 // pred_fallthru
        _
      // Predicated region
      $region29: #{lenet_ensemble_forward.5} parent=15 // pred_check
        %p282 = pneg %p125
      $region30: #{lenet_ensemble_forward.5} parent=15 // pred_check_branch
        %284 = sbr.rel (%p282) target = $region32
      $region31: #{lenet_ensemble_forward.5} parent=15 // pred_region
        %p285 = scmp.lt.s32.totalorder %s20, 2
        %s286 = scalar_select %p285, %s20, 2
        %s287 = smul.addr %s286, 16
        %s288 = smul.addr %s287, 4
        %s289 = scalar_lea.vmem %s3, %s288
      $region32: #{lenet_ensemble_forward.5} parent=15 // pred_fallthru
        _
      // Predicated region
      $region33: #{lenet_ensemble_forward.5} parent=15 // pred_check
        %p290 = pneg %p151
      $region34: #{lenet_ensemble_forward.5} parent=15 // pred_check_branch
        %292 = sbr.rel (%p290) target = $region36
      $region35: #{lenet_ensemble_forward.5} parent=15 // pred_region
        %p293 = scmp.lt.s32.totalorder %s20, 2
        %s294 = scalar_select %p293, %s20, 2
        %s295 = scalar_lea.vmem %s4, %s294
      $region36: #{lenet_ensemble_forward.5} parent=15 // pred_fallthru
        _
      // Predicated region
      $region37: #{lenet_ensemble_forward.5} parent=15 // pred_check
        %p296 = pneg %p177
      $region38: #{lenet_ensemble_forward.5} parent=15 // pred_check_branch
        %298 = sbr.rel (%p296) target = $region40
      $region39: #{lenet_ensemble_forward.5} parent=15 // pred_region
        %p299 = scmp.lt.s32.totalorder %s20, 2
        %s300 = scalar_select %p299, %s20, 2
        %s301 = smul.addr %s300, 16
        %s302 = smul.addr %s301, 4
        %s303 = scalar_lea.vmem %s5, %s302
      $region40: #{lenet_ensemble_forward.5} parent=15 // pred_fallthru
        _
      // Predicated region
      $region41: #{lenet_ensemble_forward.5} parent=15 // pred_check
        %p304 = pneg %p203
      $region42: #{lenet_ensemble_forward.5} parent=15 // pred_check_branch
        %306 = sbr.rel (%p304) target = $region44
      $region43: #{lenet_ensemble_forward.5} parent=15 // pred_region
        %p307 = scmp.lt.s32.totalorder %s20, 2
        %s308 = scalar_select %p307, %s20, 2
        %s309 = scalar_lea.vmem %s6, %s308
      $region44: #{lenet_ensemble_forward.5} parent=15 // pred_fallthru
        _
    $region16: #{lenet_ensemble_forward.5} parent=5 // pred_fallthru
      _
    %p310 = scmp.le.s32.totalorder 1, %s13
    %p311 = scmp.lt.s32.totalorder %s13, 4
    %p312 = pnand %p310, %p311
    %p313 = pneg %p312
    // Predicated region
    $region45: #{lenet_ensemble_forward.5} parent=5 // pred_check
      _
    $region46: #{lenet_ensemble_forward.5} parent=5 // pred_check_branch
      %315 = sbr.rel (%p312) target = $region48
    $region47: #{lenet_ensemble_forward.5} parent=5 // pred_region
      %s316 = ssub.s32 %s13, 1
      %p317 = scmp.lt.s32.totalorder %s22, 2
      %s318 = scalar_select %p317, %s22, 2
      %p319 = scmp.lt.s32.totalorder %s23, 0
      %s320 = scalar_select %p319, %s23, 0
      %s321 = smul.addr %s320, 4
      %s322 = smul.addr %s318, 4
      %s323 = sadd.s32 %s321, %s322
      %s324 = smul.addr %s323, 4
      %s325 = scalar_lea.vmem %s0, %s324
      %p326 = pneg %p53
      %p327 = pneg %p50
      %p328 = scmp.lt.s32.totalorder %s22, 2
      %s329 = scalar_select %p328, %s22, 2
      %s330 = smul.addr %s329, 50
      %s331 = smul.addr %s330, 4
      %s332 = scalar_lea.vmem %s1, %s331
      %p333 = pneg %p79
      %p334 = pneg %p76
      %p335 = scmp.lt.s32.totalorder %s22, 2
      %s336 = scalar_select %p335, %s22, 2
      %s337 = scalar_lea.vmem %s2, %s336
      %p338 = pneg %p105
      %p339 = pneg %p102
      %p340 = scmp.lt.s32.totalorder %s22, 2
      %s341 = scalar_select %p340, %s22, 2
      %s342 = smul.addr %s341, 16
      %s343 = smul.addr %s342, 4
      %s344 = scalar_lea.vmem %s3, %s343
      %p345 = pneg %p131
      %p346 = pneg %p128
      %p347 = scmp.lt.s32.totalorder %s22, 2
      %s348 = scalar_select %p347, %s22, 2
      %s349 = scalar_lea.vmem %s4, %s348
      %p350 = pneg %p157
      %p351 = pneg %p154
      %p352 = scmp.lt.s32.totalorder %s22, 2
      %s353 = scalar_select %p352, %s22, 2
      %s354 = smul.addr %s353, 16
      %s355 = smul.addr %s354, 4
      %s356 = scalar_lea.vmem %s5, %s355
      %p357 = pneg %p183
      %p358 = pneg %p180
      %p359 = scmp.lt.s32.totalorder %s22, 2
      %s360 = scalar_select %p359, %s22, 2
      %s361 = scalar_lea.vmem %s6, %s360
      %p362 = pneg %p209
      %p363 = pneg %p206
      %p364 = pneg %p237
      %p365 = pneg %p234
      %p366 = scmp.lt.s32.totalorder %s22, 2
      %s367 = scalar_select %p366, %s22, 2
      %p368 = scmp.lt.s32.totalorder %s23, 0
      %s369 = scalar_select %p368, %s23, 0
      %s370 = sadd.s32 %s369, %s367
      %s371 = smul.addr %s370, 8
      %s372 = scalar_lea.vmem %s7, %s371
      %p373 = scmp.lt.s32.totalorder %s22, 2
      %s374 = scalar_select %p373, %s22, 2
      %p375 = scmp.lt.s32.totalorder %s23, 0
      %s376 = scalar_select %p375, %s23, 0
      %s377 = smul.addr %s376, 4
      %s378 = smul.addr %s374, 4
      %s379 = sadd.s32 %s377, %s378
      %s380 = smul.addr %s379, 4
      %s381 = scalar_lea.vmem %s0, %s380
      %p382 = scmp.lt.s32.totalorder %s22, 2
      %s383 = scalar_select %p382, %s22, 2
      %s384 = smul.addr %s383, 50
      %s385 = smul.addr %s384, 4
      %s386 = scalar_lea.vmem %s1, %s385
      %p387 = scmp.lt.s32.totalorder %s22, 2
      %s388 = scalar_select %p387, %s22, 2
      %s389 = scalar_lea.vmem %s2, %s388
      %p390 = scmp.lt.s32.totalorder %s22, 2
      %s391 = scalar_select %p390, %s22, 2
      %s392 = smul.addr %s391, 16
      %s393 = smul.addr %s392, 4
      %s394 = scalar_lea.vmem %s3, %s393
      %p395 = scmp.lt.s32.totalorder %s22, 2
      %s396 = scalar_select %p395, %s22, 2
      %s397 = scalar_lea.vmem %s4, %s396
      %p398 = scmp.lt.s32.totalorder %s22, 2
      %s399 = scalar_select %p398, %s22, 2
      %s400 = smul.addr %s399, 16
      %s401 = smul.addr %s400, 4
      %s402 = scalar_lea.vmem %s5, %s401
      %p403 = scmp.lt.s32.totalorder %s22, 2
      %s404 = scalar_select %p403, %s22, 2
      %s405 = scalar_lea.vmem %s6, %s404
      %p406 = scmp.lt.s32.totalorder %s22, 2
      %s407 = scalar_select %p406, %s22, 2
      %p408 = scmp.lt.s32.totalorder %s23, 0
      %s409 = scalar_select %p408, %s23, 0
      %s410 = sadd.s32 %s409, %s407
      %s411 = smul.addr %s410, 8
      %s412 = scalar_lea.vmem %s7, %s411
      %v414 = vld [vmem:[%s381] sm:$0xff]
      %v415 = vld [vmem:[%s381 + $0x8] sm:$0xff]
      %v416 = vld [vmem:[%s386] sm:$0xf]
      %v417 = vld [vmem:[%s386 + $0x4] sm:$0xf]
      %v418 = vld [vmem:[%s386 + $0x8] sm:$0xf]
      %v419 = vld [vmem:[%s386 + $0xc] sm:$0xf]
      %v420 = vld [vmem:[%s386 + $0x10] sm:$0xf]
      %v421 = vld [vmem:[%s386 + $0x14] sm:$0xf]
      %v422 = vld [vmem:[%s386 + $0x18] sm:$0xf]
      %v423 = vld [vmem:[%s386 + $0x1c] sm:$0xf]
      %v424 = vld [vmem:[%s386 + $0x20] sm:$0xf]
      %v425 = vld [vmem:[%s386 + $0x24] sm:$0xf]
      %v426 = vld [vmem:[%s386 + $0x28] sm:$0xf]
      %v427 = vld [vmem:[%s386 + $0x2c] sm:$0xf]
      %v428 = vld [vmem:[%s386 + $0x30] sm:$0xf]
      %v429 = vld [vmem:[%s386 + $0x34] sm:$0xf]
      %v430 = vld [vmem:[%s386 + $0x38] sm:$0xf]
      %v431 = vld [vmem:[%s386 + $0x3c] sm:$0xf]
      %v432 = vld [vmem:[%s386 + $0x40] sm:$0xf]
      %v433 = vld [vmem:[%s386 + $0x44] sm:$0xf]
      %v434 = vld [vmem:[%s386 + $0x48] sm:$0xf]
      %v435 = vld [vmem:[%s386 + $0x4c] sm:$0xf]
      %v436 = vld [vmem:[%s386 + $0x50] sm:$0xf]
      %v437 = vld [vmem:[%s386 + $0x54] sm:$0xf]
      %v438 = vld [vmem:[%s386 + $0x58] sm:$0xf]
      %v439 = vld [vmem:[%s386 + $0x5c] sm:$0xf]
      %v440 = vld [vmem:[%s386 + $0x60] sm:$0xf]
      %v441 = vld [vmem:[%s386 + $0x64] sm:$0xf]
      %v442 = vld [vmem:[%s386 + $0x68] sm:$0xf]
      %v443 = vld [vmem:[%s386 + $0x6c] sm:$0xf]
      %v444 = vld [vmem:[%s386 + $0x70] sm:$0xf]
      %v445 = vld [vmem:[%s386 + $0x74] sm:$0xf]
      %v446 = vld [vmem:[%s386 + $0x78] sm:$0xf]
      %v447 = vld [vmem:[%s386 + $0x7c] sm:$0xf]
      %v448 = vld [vmem:[%s386 + $0x80] sm:$0xf]
      %v449 = vld [vmem:[%s386 + $0x84] sm:$0xf]
      %v450 = vld [vmem:[%s386 + $0x88] sm:$0xf]
      %v451 = vld [vmem:[%s386 + $0x8c] sm:$0xf]
      %v452 = vld [vmem:[%s386 + $0x90] sm:$0xf]
      %v453 = vld [vmem:[%s386 + $0x94] sm:$0xf]
      %v454 = vld [vmem:[%s386 + $0x98] sm:$0xf]
      %v455 = vld [vmem:[%s386 + $0x9c] sm:$0xf]
      %v456 = vld [vmem:[%s386 + $0xa0] sm:$0xf]
      %v457 = vld [vmem:[%s386 + $0xa4] sm:$0xf]
      %v458 = vld [vmem:[%s386 + $0xa8] sm:$0xf]
      %v459 = vld [vmem:[%s386 + $0xac] sm:$0xf]
      %v460 = vld [vmem:[%s386 + $0xb0] sm:$0xf]
      %v461 = vld [vmem:[%s386 + $0xb4] sm:$0xf]
      %v462 = vld [vmem:[%s386 + $0xb8] sm:$0xf]
      %v463 = vld [vmem:[%s386 + $0xbc] sm:$0xf]
      %v464 = vld [vmem:[%s386 + $0xc0] sm:$0xf]
      %v465 = vld [vmem:[%s386 + $0xc4] sm:$0xf]
      %v466 = vld [vmem:[%s389] sm:$0x1]
      %v468 = vlaneseq
      %v469 = vshrl.u32 %v468, 7
      %v470 = vsub.s32 0, %v469
      %v471 = vrot.slane %v466, %v470
      %v475 = vunpack.c.l.b16 %v414
      %v476 = vunpack.c.h.b16 %v414
      %v477 = vunpack.c.l.b16 %v415
      %v478 = vunpack.c.h.b16 %v415
      %v479 = vpack.c.b16 %v475, %v475
      %v480 = vpack.c.b16 %v476, %v476
      %v481 = vpack.c.b16 %v477, %v477
      %v482 = vpack.c.b16 %v478, %v478
      %v536 = vunpack.c.l.b16 %v416
      %v537 = vunpack.c.l.b16 %v417
      %v538 = vunpack.c.l.b16 %v418
      %v539 = vunpack.c.l.b16 %v419
      %v540 = vunpack.c.l.b16 %v420
      %v541 = vunpack.c.l.b16 %v421
      %v542 = vunpack.c.l.b16 %v422
      %v543 = vunpack.c.l.b16 %v423
      %v544 = vunpack.c.l.b16 %v424
      %v545 = vunpack.c.l.b16 %v425
      %v546 = vunpack.c.l.b16 %v426
      %v547 = vunpack.c.l.b16 %v427
      %v548 = vunpack.c.l.b16 %v428
      %v549 = vunpack.c.l.b16 %v429
      %v550 = vunpack.c.l.b16 %v430
      %v551 = vunpack.c.l.b16 %v431
      %v552 = vunpack.c.l.b16 %v432
      %v553 = vunpack.c.l.b16 %v433
      %v554 = vunpack.c.l.b16 %v434
      %v555 = vunpack.c.l.b16 %v435
      %v556 = vunpack.c.l.b16 %v436
      %v557 = vunpack.c.l.b16 %v437
      %v558 = vunpack.c.l.b16 %v438
      %v559 = vunpack.c.l.b16 %v439
      %v560 = vunpack.c.l.b16 %v440
      %v561 = vunpack.c.l.b16 %v441
      %v562 = vunpack.c.l.b16 %v442
      %v563 = vunpack.c.l.b16 %v443
      %v564 = vunpack.c.l.b16 %v444
      %v565 = vunpack.c.l.b16 %v445
      %v566 = vunpack.c.l.b16 %v446
      %v567 = vunpack.c.l.b16 %v447
      %v568 = vunpack.c.l.b16 %v448
      %v569 = vunpack.c.l.b16 %v449
      %v570 = vunpack.c.l.b16 %v450
      %v571 = vunpack.c.l.b16 %v451
      %v572 = vunpack.c.l.b16 %v452
      %v573 = vunpack.c.l.b16 %v453
      %v574 = vunpack.c.l.b16 %v454
      %v575 = vunpack.c.l.b16 %v455
      %v576 = vunpack.c.l.b16 %v456
      %v577 = vunpack.c.l.b16 %v457
      %v578 = vunpack.c.l.b16 %v458
      %v579 = vunpack.c.l.b16 %v459
      %v580 = vunpack.c.l.b16 %v460
      %v581 = vunpack.c.l.b16 %v461
      %v582 = vunpack.c.l.b16 %v462
      %v583 = vunpack.c.l.b16 %v463
      %v584 = vunpack.c.l.b16 %v464
      %v585 = vunpack.c.l.b16 %v465
      %v586 = vpack.c.b16 %v537, %v536
      %v587 = vpack.c.b16 %v539, %v538
      %v588 = vpack.c.b16 %v541, %v540
      %v589 = vpack.c.b16 %v543, %v542
      %v590 = vpack.c.b16 %v545, %v544
      %v591 = vpack.c.b16 %v547, %v546
      %v592 = vpack.c.b16 %v549, %v548
      %v593 = vpack.c.b16 %v551, %v550
      %v594 = vpack.c.b16 %v553, %v552
      %v595 = vpack.c.b16 %v555, %v554
      %v596 = vpack.c.b16 %v557, %v556
      %v597 = vpack.c.b16 %v559, %v558
      %v598 = vpack.c.b16 %v561, %v560
      %v599 = vpack.c.b16 %v563, %v562
      %v600 = vpack.c.b16 %v565, %v564
      %v601 = vpack.c.b16 %v567, %v566
      %v602 = vpack.c.b16 %v569, %v568
      %v603 = vpack.c.b16 %v571, %v570
      %v604 = vpack.c.b16 %v573, %v572
      %v605 = vpack.c.b16 %v575, %v574
      %v606 = vpack.c.b16 %v577, %v576
      %v607 = vpack.c.b16 %v579, %v578
      %v608 = vpack.c.b16 %v581, %v580
      %v609 = vpack.c.b16 %v583, %v582
      %v610 = vpack.c.b16 %v585, %v584
      %vm636 = vcmask 130048
      %v638 = vsel %vm636, %v482, 0
      %640 = vmatprep.subr.bf16.mxu0 0
      %641 = vmatpush1.bf16.msra.mxu0 %v593
      %642 = vmatprep.subr.bf16.mxu0 0
      %643 = vmatpush1.bf16.msra.mxu0 %v592
      %644 = vmatprep.subr.bf16.mxu0 0
      %645 = vmatpush1.bf16.msra.mxu0 %v591
      %646 = vmatprep.subr.bf16.mxu0 0
      %647 = vmatpush1.bf16.msra.mxu0 %v590
      %648 = vmatprep.subr.bf16.mxu0 0
      %649 = vmatpush1.bf16.msra.mxu0 %v589
      %650 = vmatprep.subr.bf16.mxu0 0
      %651 = vmatpush1.bf16.msra.mxu0 %v588
      %652 = vmatprep.subr.bf16.mxu0 0
      %653 = vmatpush1.bf16.msra.mxu0 %v587
      %654 = vmatprep.subr.bf16.mxu0 0
      %655 = vmatpush1.bf16.msra.mxu0 %v586
      %656 = vmatprep.subr.bf16.mxu0 0
      %657 = vmatpush2.bf16.msra.mxu0 %v601
      %658 = vmatprep.subr.bf16.mxu0 0
      %659 = vmatpush2.bf16.msra.mxu0 %v600
      %660 = vmatprep.subr.bf16.mxu0 0
      %661 = vmatpush2.bf16.msra.mxu0 %v599
      %662 = vmatprep.subr.bf16.mxu0 0
      %663 = vmatpush2.bf16.msra.mxu0 %v598
      %664 = vmatprep.subr.bf16.mxu0 0
      %665 = vmatpush2.bf16.msra.mxu0 %v597
      %666 = vmatprep.subr.bf16.mxu0 0
      %667 = vmatpush2.bf16.msra.mxu0 %v596
      %668 = vmatprep.subr.bf16.mxu0 0
      %669 = vmatpush2.bf16.msra.mxu0 %v595
      %670 = vmatprep.subr.bf16.mxu0 0
      %671 = vmatpush2.bf16.msra.mxu0 %v594
      %672 = vmatprep.mubr.bf16.mxu0 %v480
      %673 = vmatmul.mubr.bf16.gmra.mxu0 %v479
      %v674 = vpop.f32.mrf.mxu0
      %v675 = vadd.f32 %v471, %v674
      %v676 = vpop.f32.mrf.mxu0
      %v677 = vpop.f32.mrf.mxu0
      %v678 = vpop.f32.mrf.mxu0
      %679 = vdwg.mxu0
      %680 = vmatprep.subr.bf16.mxu0 0
      %681 = vmatpush1.bf16.msra.mxu0 %v609
      %682 = vmatprep.subr.bf16.mxu0 0
      %683 = vmatpush1.bf16.msra.mxu0 %v608
      %684 = vmatprep.subr.bf16.mxu0 0
      %685 = vmatpush1.bf16.msra.mxu0 %v607
      %686 = vmatprep.subr.bf16.mxu0 0
      %687 = vmatpush1.bf16.msra.mxu0 %v606
      %688 = vmatprep.subr.bf16.mxu0 0
      %689 = vmatpush1.bf16.msra.mxu0 %v605
      %690 = vmatprep.subr.bf16.mxu0 0
      %691 = vmatpush1.bf16.msra.mxu0 %v604
      %692 = vmatprep.subr.bf16.mxu0 0
      %693 = vmatpush1.bf16.msra.mxu0 %v603
      %694 = vmatprep.subr.bf16.mxu0 0
      %695 = vmatpush1.bf16.msra.mxu0 %v602
      %696 = vmatprep.subr.bf16.mxu0 0
      %697 = vmatpush2.bf16.msra.mxu0 0
      %698 = vmatprep.subr.bf16.mxu0 0
      %699 = vmatpush2.bf16.msra.mxu0 0
      %700 = vmatprep.subr.bf16.mxu0 0
      %701 = vmatpush2.bf16.msra.mxu0 0
      %702 = vmatprep.subr.bf16.mxu0 0
      %703 = vmatpush2.bf16.msra.mxu0 0
      %704 = vmatprep.subr.bf16.mxu0 0
      %705 = vmatpush2.bf16.msra.mxu0 0
      %706 = vmatprep.subr.bf16.mxu0 0
      %707 = vmatpush2.bf16.msra.mxu0 0
      %708 = vmatprep.subr.bf16.mxu0 0
      %709 = vmatpush2.bf16.msra.mxu0 0
      %710 = vmatprep.subr.bf16.mxu0 0
      %711 = vmatpush2.bf16.msra.mxu0 %v610
      %712 = vmatprep.mubr.bf16.mxu0 %v638
      %713 = vmatmul.mubr.bf16.gmra.mxu0 %v481
      %v714 = vpop.f32.mrf.mxu0
      %v715 = vadd.f32 %v675, %v714
      %v716 = vpop.f32.mrf.mxu0
      %v717 = vpop.f32.mrf.mxu0
      %v718 = vpop.f32.mrf.mxu0
      %719 = vdwg.mxu0
      %v720 = vtanh.pop %v715
      %v721 = vpack.c.bf16 %v720, %v720
      %v722 = vld [vmem:[%s394] sm:$0xf]
      %v723 = vld [vmem:[%s394 + $0x4] sm:$0xf]
      %v724 = vld [vmem:[%s394 + $0x8] sm:$0xf]
      %v725 = vld [vmem:[%s394 + $0xc] sm:$0xf]
      %v726 = vld [vmem:[%s394 + $0x10] sm:$0xf]
      %v727 = vld [vmem:[%s394 + $0x14] sm:$0xf]
      %v728 = vld [vmem:[%s394 + $0x18] sm:$0xf]
      %v729 = vld [vmem:[%s394 + $0x1c] sm:$0xf]
      %v730 = vld [vmem:[%s394 + $0x20] sm:$0xf]
      %v731 = vld [vmem:[%s394 + $0x24] sm:$0xf]
      %v732 = vld [vmem:[%s394 + $0x28] sm:$0xf]
      %v733 = vld [vmem:[%s394 + $0x2c] sm:$0xf]
      %v734 = vld [vmem:[%s394 + $0x30] sm:$0xf]
      %v735 = vld [vmem:[%s394 + $0x34] sm:$0xf]
      %v736 = vld [vmem:[%s394 + $0x38] sm:$0xf]
      %v737 = vld [vmem:[%s394 + $0x3c] sm:$0xf]
      %v738 = vld [vmem:[%s397] sm:$0x1]
      %v740 = vlaneseq
      %v741 = vshrl.u32 %v740, 7
      %v742 = vsub.s32 0, %v741
      %v743 = vrot.slane %v738, %v742
      %v761 = vunpack.c.l.b16 %v722
      %v762 = vunpack.c.l.b16 %v723
      %v763 = vunpack.c.l.b16 %v724
      %v764 = vunpack.c.l.b16 %v725
      %v765 = vunpack.c.l.b16 %v726
      %v766 = vunpack.c.l.b16 %v727
      %v767 = vunpack.c.l.b16 %v728
      %v768 = vunpack.c.l.b16 %v729
      %v769 = vunpack.c.l.b16 %v730
      %v770 = vunpack.c.l.b16 %v731
      %v771 = vunpack.c.l.b16 %v732
      %v772 = vunpack.c.l.b16 %v733
      %v773 = vunpack.c.l.b16 %v734
      %v774 = vunpack.c.l.b16 %v735
      %v775 = vunpack.c.l.b16 %v736
      %v776 = vunpack.c.l.b16 %v737
      %v777 = vpack.c.b16 %v762, %v761
      %v778 = vpack.c.b16 %v764, %v763
      %v779 = vpack.c.b16 %v766, %v765
      %v780 = vpack.c.b16 %v768, %v767
      %v781 = vpack.c.b16 %v770, %v769
      %v782 = vpack.c.b16 %v772, %v771
      %v783 = vpack.c.b16 %v774, %v773
      %v784 = vpack.c.b16 %v776, %v775
      %793 = vmatprep.subr.bf16.mxu0 0
      %794 = vmatpush1.bf16.msra.mxu0 %v784
      %795 = vmatprep.subr.bf16.mxu0 0
      %796 = vmatpush1.bf16.msra.mxu0 %v783
      %797 = vmatprep.subr.bf16.mxu0 0
      %798 = vmatpush1.bf16.msra.mxu0 %v782
      %799 = vmatprep.subr.bf16.mxu0 0
      %800 = vmatpush1.bf16.msra.mxu0 %v781
      %801 = vmatprep.subr.bf16.mxu0 0
      %802 = vmatpush1.bf16.msra.mxu0 %v780
      %803 = vmatprep.subr.bf16.mxu0 0
      %804 = vmatpush1.bf16.msra.mxu0 %v779
      %805 = vmatprep.subr.bf16.mxu0 0
      %806 = vmatpush1.bf16.msra.mxu0 %v778
      %807 = vmatprep.subr.bf16.mxu0 0
      %808 = vmatpush1.bf16.msra.mxu0 %v777
      %809 = vmatprep.subr.bf16.mxu0 0
      %810 = vmatpush2.bf16.msra.mxu0 0
      %811 = vmatprep.subr.bf16.mxu0 0
      %812 = vmatpush2.bf16.msra.mxu0 0
      %813 = vmatprep.subr.bf16.mxu0 0
      %814 = vmatpush2.bf16.msra.mxu0 0
      %815 = vmatprep.subr.bf16.mxu0 0
      %816 = vmatpush2.bf16.msra.mxu0 0
      %817 = vmatprep.subr.bf16.mxu0 0
      %818 = vmatpush2.bf16.msra.mxu0 0
      %819 = vmatprep.subr.bf16.mxu0 0
      %820 = vmatpush2.bf16.msra.mxu0 0
      %821 = vmatprep.subr.bf16.mxu0 0
      %822 = vmatpush2.bf16.msra.mxu0 0
      %823 = vmatprep.subr.bf16.mxu0 0
      %824 = vmatpush2.bf16.msra.mxu0 0
      %825 = vmatprep.mubr.bf16.mxu0 0
      %826 = vmatmul.mubr.bf16.gmra.mxu0 %v721
      %v827 = vpop.f32.mrf.mxu0
      %v828 = vadd.f32 %v743, %v827
      %v829 = vpop.f32.mrf.mxu0
      %v830 = vpop.f32.mrf.mxu0
      %v831 = vpop.f32.mrf.mxu0
      %832 = vdwg.mxu0
      %v833 = vtanh.pop %v828
      %v834 = vpack.c.bf16 %v833, %v833
      %v835 = vld [vmem:[%s402] sm:$0xf]
      %v836 = vld [vmem:[%s402 + $0x4] sm:$0xf]
      %v837 = vld [vmem:[%s402 + $0x8] sm:$0xf]
      %v838 = vld [vmem:[%s402 + $0xc] sm:$0xf]
      %v839 = vld [vmem:[%s402 + $0x10] sm:$0xf]
      %v840 = vld [vmem:[%s402 + $0x14] sm:$0xf]
      %v841 = vld [vmem:[%s402 + $0x18] sm:$0xf]
      %v842 = vld [vmem:[%s402 + $0x1c] sm:$0xf]
      %v843 = vld [vmem:[%s402 + $0x20] sm:$0xf]
      %v844 = vld [vmem:[%s402 + $0x24] sm:$0xf]
      %v845 = vld [vmem:[%s402 + $0x28] sm:$0xf]
      %v846 = vld [vmem:[%s402 + $0x2c] sm:$0xf]
      %v847 = vld [vmem:[%s402 + $0x30] sm:$0xf]
      %v848 = vld [vmem:[%s402 + $0x34] sm:$0xf]
      %v849 = vld [vmem:[%s402 + $0x38] sm:$0xf]
      %v850 = vld [vmem:[%s402 + $0x3c] sm:$0xf]
      %v851 = vld [vmem:[%s405] sm:$0x1]
      %v853 = vlaneseq
      %v854 = vshrl.u32 %v853, 7
      %v855 = vsub.s32 0, %v854
      %v856 = vrot.slane %v851, %v855
      %v874 = vunpack.c.l.b16 %v835
      %v875 = vunpack.c.l.b16 %v836
      %v876 = vunpack.c.l.b16 %v837
      %v877 = vunpack.c.l.b16 %v838
      %v878 = vunpack.c.l.b16 %v839
      %v879 = vunpack.c.l.b16 %v840
      %v880 = vunpack.c.l.b16 %v841
      %v881 = vunpack.c.l.b16 %v842
      %v882 = vunpack.c.l.b16 %v843
      %v883 = vunpack.c.l.b16 %v844
      %v884 = vunpack.c.l.b16 %v845
      %v885 = vunpack.c.l.b16 %v846
      %v886 = vunpack.c.l.b16 %v847
      %v887 = vunpack.c.l.b16 %v848
      %v888 = vunpack.c.l.b16 %v849
      %v889 = vunpack.c.l.b16 %v850
      %v890 = vpack.c.b16 %v875, %v874
      %v891 = vpack.c.b16 %v877, %v876
      %v892 = vpack.c.b16 %v879, %v878
      %v893 = vpack.c.b16 %v881, %v880
      %v894 = vpack.c.b16 %v883, %v882
      %v895 = vpack.c.b16 %v885, %v884
      %v896 = vpack.c.b16 %v887, %v886
      %v897 = vpack.c.b16 %v889, %v888
      %906 = vmatprep.subr.bf16.mxu0 0
      %907 = vmatpush1.bf16.msra.mxu0 %v897
      %908 = vmatprep.subr.bf16.mxu0 0
      %909 = vmatpush1.bf16.msra.mxu0 %v896
      %910 = vmatprep.subr.bf16.mxu0 0
      %911 = vmatpush1.bf16.msra.mxu0 %v895
      %912 = vmatprep.subr.bf16.mxu0 0
      %913 = vmatpush1.bf16.msra.mxu0 %v894
      %914 = vmatprep.subr.bf16.mxu0 0
      %915 = vmatpush1.bf16.msra.mxu0 %v893
      %916 = vmatprep.subr.bf16.mxu0 0
      %917 = vmatpush1.bf16.msra.mxu0 %v892
      %918 = vmatprep.subr.bf16.mxu0 0
      %919 = vmatpush1.bf16.msra.mxu0 %v891
      %920 = vmatprep.subr.bf16.mxu0 0
      %921 = vmatpush1.bf16.msra.mxu0 %v890
      %922 = vmatprep.subr.bf16.mxu0 0
      %923 = vmatpush2.bf16.msra.mxu0 0
      %924 = vmatprep.subr.bf16.mxu0 0
      %925 = vmatpush2.bf16.msra.mxu0 0
      %926 = vmatprep.subr.bf16.mxu0 0
      %927 = vmatpush2.bf16.msra.mxu0 0
      %928 = vmatprep.subr.bf16.mxu0 0
      %929 = vmatpush2.bf16.msra.mxu0 0
      %930 = vmatprep.subr.bf16.mxu0 0
      %931 = vmatpush2.bf16.msra.mxu0 0
      %932 = vmatprep.subr.bf16.mxu0 0
      %933 = vmatpush2.bf16.msra.mxu0 0
      %934 = vmatprep.subr.bf16.mxu0 0
      %935 = vmatpush2.bf16.msra.mxu0 0
      %936 = vmatprep.subr.bf16.mxu0 0
      %937 = vmatpush2.bf16.msra.mxu0 0
      %938 = vmatprep.mubr.bf16.mxu0 0
      %939 = vmatmul.mubr.bf16.gmra.mxu0 %v834
      %v940 = vpop.f32.mrf.mxu0
      %v941 = vadd.f32 %v856, %v940
      %v942 = vpop.f32.mrf.mxu0
      %v943 = vpop.f32.mrf.mxu0
      %v944 = vpop.f32.mrf.mxu0
      %945 = vdwg.mxu0
      %946 = vst [vmem:[%s412] sm:$0xff] %v941
      %p947 = scmp.lt.s32.totalorder %s22, 2
      %s948 = scalar_select %p947, %s22, 2
      %p949 = scmp.lt.s32.totalorder %s23, 0
      %s950 = scalar_select %p949, %s23, 0
      %s951 = sadd.s32 %s950, %s948
      %s952 = smul.addr %s951, 8
      %s953 = scalar_lea.vmem %s7, %s952
      // Predicated region
      $region49: #{lenet_ensemble_forward.5} parent=47 // pred_check
        %p954 = pneg %p234
      $region50: #{lenet_ensemble_forward.5} parent=47 // pred_check_branch
        %956 = sbr.rel (%p954) target = $region52
      $region51: #{lenet_ensemble_forward.5} parent=47 // pred_region
        _
      $region52: #{lenet_ensemble_forward.5} parent=47 // pred_fallthru
        _
    $region48: #{lenet_ensemble_forward.5} parent=5 // pred_fallthru
      _
    %p957 = scmp.le.s32.totalorder 2, %s13
    // Predicated region
    $region53: #{lenet_ensemble_forward.5} parent=5 // pred_check
      %p958 = pneg %p957
    $region54: #{lenet_ensemble_forward.5} parent=5 // pred_check_branch
      %960 = sbr.rel (%p958) target = $region56
    $region55: #{lenet_ensemble_forward.5} parent=5 // pred_region
      %s961 = ssub.s32 %s13, 2
      // Predicated region
      $region57: #{lenet_ensemble_forward.5} parent=55 // pred_check
        %p962 = pneg %p240
      $region58: #{lenet_ensemble_forward.5} parent=55 // pred_check_branch
        %964 = sbr.rel (%p962) target = $region60
      $region59: #{lenet_ensemble_forward.5} parent=55 // pred_region
        %p965 = scmp.lt.s32.totalorder %s24, 2
        %s966 = scalar_select %p965, %s24, 2
        %p967 = scmp.lt.s32.totalorder %s25, 0
        %s968 = scalar_select %p967, %s25, 0
        %s969 = sadd.s32 %s968, %s966
        %s970 = smul.addr %s969, 8
        %s971 = scalar_lea.vmem %s7, %s970
      $region60: #{lenet_ensemble_forward.5} parent=55 // pred_fallthru
        _
    $region56: #{lenet_ensemble_forward.5} parent=5 // pred_fallthru
      _
  $region6: #{lenet_ensemble_forward.5} parent=0 // loop_footer
    %s17 = sadd.s32 1, %s13
  $region7: #{lenet_ensemble_forward.5} parent=0 // loop_footer_branch
    %12 = sbr.rel target = $region3
  $region8: #{lenet_ensemble_forward.5} parent=0 // loop_exit
    _

</llo_original>
